<compile_context>
chip_gen: v7x
topology: tpu7x:2x2x1
jax: 0.10.0
libtpu: 0.0.40
codegen_flags: <defaults>
</compile_context>

<pallas_src>
import functools

import jax
import jax.numpy as jnp
from jax.experimental import pallas as pl
from jax.experimental.pallas import tpu as pltpu


# ----------------------------------------------------------------------------
# Single-invocation kernel: wavefront LSTM recurrence (all timesteps, all
# layers) plus the batched decoder projection.
# ----------------------------------------------------------------------------
def lstm_forward_kernel(x_ref, w_ih_ref, w_hh_ref, b_ref, w_dec_ref, b_dec_ref,
                        out_ref, hid_ref, *, num_layers, hidden, seq_len, batch):
    # x_ref     : (T*B, H)        compute dtype, time-major flat
    # w_ih_ref  : (L, H, 4H)      compute dtype
    # w_hh_ref  : (L, H, 4H)      compute dtype
    # b_ref     : (L, 1, 4H)      f32 (b_ih + b_hh)
    # w_dec_ref : (H, Vp)         compute dtype (lane-padded)
    # b_dec_ref : (1, Vp)         f32 (lane-padded)
    # out_ref   : (T*B, Vp)       f32 logits, time-major flat, lane-dense
    # hid_ref   : (T*B, H)        scratch: top-layer hidden states, compute dtype
    H = hidden
    L = num_layers
    B = batch
    T = seq_len
    cdt = x_ref.dtype

    # Hoist bias broadcasts out of the unrolled loop (JAX does not CSE them).
    b_full = [jnp.broadcast_to(b_ref[l], (B, 4 * H)) for l in range(L)]

    # (h, c) state kept as values (vregs) across the unrolled wavefront loop.
    h = [jnp.zeros((B, H), jnp.float32) for _ in range(L)]
    c = [jnp.zeros((B, H), jnp.float32) for _ in range(L)]
    # x_feed[l] = output of layer l-1 at the timestep layer l processes next.
    x_feed = [None] * L

    # Wavefront schedule: at step s, layer l works on timestep t = s - l.
    # All (t, l) pairs inside one wavefront are mutually independent, so their
    # matmuls / nonlinearities / cell updates overlap in the unit pipelines.
    for s in range(T + L - 1):
        updates = []
        for l in range(L):
            t = s - l
            if not (0 <= t < T):
                continue
            if l == 0:
                x_in = x_ref[pl.ds(t * B, B), :]          # (B, H) compute dtype
            else:
                x_in = x_feed[l]                          # set at wavefront s-1
            # Split gate matmuls (no lane concat on the serial chain); both
            # operands are ready, so the two MXU pushes pipeline back-to-back.
            gates = (jnp.dot(x_in, w_ih_ref[l],
                             preferred_element_type=jnp.float32)
                     + jnp.dot(h[l].astype(cdt), w_hh_ref[l],
                               preferred_element_type=jnp.float32)
                     + b_full[l])                         # (B, 4H) f32
            # Full-vreg nonlinearities: 2 EUP pushes over the whole gates vreg.
            # PyTorch LSTM gate order: i, f, g, o ; sigmoid(x)=0.5*tanh(x/2)+0.5.
            tnh = jnp.tanh(gates)
            sig = 0.5 * jnp.tanh(0.5 * gates) + 0.5
            i_g = sig[:, 0 * H:1 * H]
            f_g = sig[:, 1 * H:2 * H]
            g_g = tnh[:, 2 * H:3 * H]
            o_g = sig[:, 3 * H:4 * H]
            c_new = f_g * c[l] + i_g * g_g
            h_new = o_g * jnp.tanh(c_new)
            updates.append((l, t, h_new, c_new))
        # Commit after every active layer has read its previous-wavefront inputs.
        for (l, t, h_new, c_new) in updates:
            h[l] = h_new
            c[l] = c_new
            if l + 1 < L:
                x_feed[l + 1] = h_new.astype(cdt)
            else:
                # Stash top-layer hidden state for the batched decoder
                # (static offset, off the recurrence's critical path).
                hid_ref[pl.ds(t * B, B), :] = h_new.astype(cdt)

    # Decoder hoisted off the serial path: one (T*B, H) @ (H, Vp) matmul,
    # lane-dense (Vp multiple of 128) single output store.
    hid = hid_ref[...]                                    # (T*B, H)
    logits = jnp.dot(hid, w_dec_ref[...],
                     preferred_element_type=jnp.float32) + b_dec_ref[...]
    out_ref[...] = logits.astype(out_ref.dtype)


def gfn_lstm_forward(tokens, params, *, compute_dtype=jnp.float32):
    """tokens: int32 [B, T]  ->  logits float32 [B, T, vocab] (batch_first)."""
    # Embedding gather directly in time-major order (transpose the tiny int
    # index matrix, not float activations), then flatten to a single dense tile.
    emb = jnp.take(params["embedding"], tokens.T, axis=0)     # (T, B, H)
    T, B, H = emb.shape
    x = emb.reshape(T * B, H).astype(compute_dtype)           # (T*B, H)

    L = params["w_ih"].shape[0]
    V = params["w_dec"].shape[1]
    Vp = ((V + 127) // 128) * 128                             # lane-dense output

    w_ih = params["w_ih"].astype(compute_dtype)               # (L, H, 4H)
    w_hh = params["w_hh"].astype(compute_dtype)               # (L, H, 4H)
    b = params["b"].astype(jnp.float32)                       # (L, 1, 4H)
    w_dec = jnp.pad(params["w_dec"], ((0, 0), (0, Vp - V))).astype(compute_dtype)
    b_dec = jnp.pad(params["b_dec"], ((0, 0), (0, Vp - V))).astype(jnp.float32)

    kernel = functools.partial(lstm_forward_kernel,
                               num_layers=L, hidden=H, seq_len=T, batch=B)

    out_flat = pl.pallas_call(
        kernel,
        out_shape=jax.ShapeDtypeStruct((T * B, Vp), jnp.float32),
        scratch_shapes=[pltpu.VMEM((T * B, H), compute_dtype)],
    )(x, w_ih, w_hh, b, w_dec, b_dec)

    # Tiny wrapper-side reshape/slice/transpose back to batch_first [B, T, V].
    logits = out_flat.reshape(T, B, Vp)[:, :, :V]
    return jnp.transpose(logits, (1, 0, 2))


# ----------------------------------------------------------------------------
# Deterministic parameter construction (mirrors nn.Embedding / nn.LSTM /
# nn.Linear; PyTorch-style U(-1/sqrt(H), 1/sqrt(H)) init).  LSTM weights are
# stored transposed: w_ih[l], w_hh[l] with shape (H, 4H); biases pre-summed.
# ----------------------------------------------------------------------------
def init_params(key, num_layers, hidden_dim, num_token):
    vocab = num_token - 1
    k = 1.0 / jnp.sqrt(hidden_dim)
    keys = jax.random.split(key, 4 + 4 * num_layers)

    embedding = jax.random.normal(keys[0], (num_token, hidden_dim), jnp.float32)

    w_ih, w_hh, b = [], [], []
    for l in range(num_layers):
        kw = keys[4 + 4 * l: 4 + 4 * (l + 1)]
        w_ih.append(jax.random.uniform(kw[0], (hidden_dim, 4 * hidden_dim),
                                       jnp.float32, -k, k))
        w_hh.append(jax.random.uniform(kw[1], (hidden_dim, 4 * hidden_dim),
                                       jnp.float32, -k, k))
        b_ih = jax.random.uniform(kw[2], (4 * hidden_dim,), jnp.float32, -k, k)
        b_hh = jax.random.uniform(kw[3], (4 * hidden_dim,), jnp.float32, -k, k)
        b.append((b_ih + b_hh)[None, :])                      # (1, 4H)

    w_dec = jax.random.uniform(keys[1], (hidden_dim, vocab), jnp.float32, -k, k)
    b_dec = jax.random.uniform(keys[2], (1, vocab), jnp.float32, -k, k)

    return {
        "embedding": embedding,          # (num_token, H)
        "w_ih": jnp.stack(w_ih),         # (L, H, 4H)
        "w_hh": jnp.stack(w_hh),         # (L, H, 4H)
        "b": jnp.stack(b),               # (L, 1, 4H)
        "w_dec": w_dec,                  # (H, V)
        "b_dec": b_dec,                  # (1, V)
    }


# Pure-JAX reference (same math, plain time-major scan) to check the kernel.
def reference_forward(tokens, params):
    emb = jnp.take(params["embedding"], tokens, axis=0)       # (B, T, H)
    B, T, H = emb.shape
    L = params["w_ih"].shape[0]

    def step(carry, x_t):
        h, c = carry                                          # (L, B, H) each
        new_h, new_c = [], []
        x = x_t
        for l in range(L):
            gates = x @ params["w_ih"][l] + h[l] @ params["w_hh"][l] + params["b"][l]
            i_g = jax.nn.sigmoid(gates[:, 0 * H:1 * H])
            f_g = jax.nn.sigmoid(gates[:, 1 * H:2 * H])
            g_g = jnp.tanh(gates[:, 2 * H:3 * H])
            o_g = jax.nn.sigmoid(gates[:, 3 * H:4 * H])
            c_l = f_g * c[l] + i_g * g_g
            h_l = o_g * jnp.tanh(c_l)
            new_h.append(h_l)
            new_c.append(c_l)
            x = h_l
        logits = x @ params["w_dec"] + params["b_dec"]
        return (jnp.stack(new_h), jnp.stack(new_c)), logits

    h0 = jnp.zeros((L, B, H), jnp.float32)
    c0 = jnp.zeros((L, B, H), jnp.float32)
    _, out = jax.lax.scan(step, (h0, c0), jnp.transpose(emb, (1, 0, 2)))
    return jnp.transpose(out, (1, 0, 2))                      # (B, T, V)


if __name__ == "__main__":
    # Module hyperparameters (small, consistent with the forward pass):
    #   args.vocab_size = 4 -> num_token = 5, decoder out dim = 4
    #   args.lstm_hidden_dim = 32, args.lstm_num_layers = 2, max_len = 8
    VOCAB = 4
    NUM_TOKEN = VOCAB + 1
    HIDDEN = 32
    LAYERS = 2
    BATCH = 2
    SEQ = 8

    key = jax.random.PRNGKey(0)
    pkey, tkey = jax.random.split(key)
    params = init_params(pkey, LAYERS, HIDDEN, NUM_TOKEN)

    # batched_sequence_data: integer tokens in [0, num_token)
    tokens = jax.random.randint(tkey, (BATCH, SEQ), 0, NUM_TOKEN, dtype=jnp.int32)

    ref = reference_forward(tokens, params)

    # f32 path (tolerance covers MXU accumulation-order / tanh-sigmoid ULP
    # differences vs the XLA reference).
    logits = gfn_lstm_forward(tokens, params, compute_dtype=jnp.float32)
    jax.block_until_ready(logits)
    assert logits.shape == (BATCH, SEQ, VOCAB)
    assert float(jnp.max(jnp.abs(logits - ref))) < 1e-2

    # bf16 MXU operands, f32 accumulation + f32 gate/cell math (v6e/v7x mode;
    # keep compute_dtype=float32 on v5e).
    logits_bf16 = gfn_lstm_forward(tokens, params, compute_dtype=jnp.bfloat16)
    jax.block_until_ready(logits_bf16)
    assert logits_bf16.shape == (BATCH, SEQ, VOCAB)
    assert float(jnp.max(jnp.abs(logits_bf16 - ref))) < 0.25

    print("KERNEL_OK")
</pallas_src>

<mosaic_0001>
module attributes {stable_mosaic.version = 11 : i64} {
  func.func @lstm_forward_kernel(%arg0: memref<16x32xf32, #tpu.memory_space<vmem>>, %arg1: memref<2x32x128xf32, #tpu.memory_space<vmem>>, %arg2: memref<2x32x128xf32, #tpu.memory_space<vmem>>, %arg3: memref<2x1x128xf32, #tpu.memory_space<vmem>>, %arg4: memref<32x128xf32, #tpu.memory_space<vmem>>, %arg5: memref<1x128xf32, #tpu.memory_space<vmem>>, %arg6: memref<16x128xf32, #tpu.memory_space<vmem>>, %arg7: memref<16x32xf32, #tpu.memory_space<vmem>>) attributes {dimension_semantics = [], scalar_prefetch = 0 : i64, scratch_operands = 1 : i64, tpu.core_type = #tpu.core_type<tc>} {
    %c0 = arith.constant 0 : index
    %c0_0 = arith.constant 0 : index
    %c0_1 = arith.constant 0 : index
    %0 = vector.load %arg3[%c0, %c0_0, %c0_1] : memref<2x1x128xf32, #tpu.memory_space<vmem>>, vector<1x1x128xf32>
    %1 = vector.shape_cast %0 : vector<1x1x128xf32> to vector<1x128xf32>
    %2 = vector.shape_cast %1 : vector<1x128xf32> to vector<1x128xf32>
    %3 = vector.broadcast %2 : vector<1x128xf32> to vector<2x128xf32>
    %c1 = arith.constant 1 : index
    %c0_2 = arith.constant 0 : index
    %c0_3 = arith.constant 0 : index
    %4 = vector.load %arg3[%c1, %c0_2, %c0_3] : memref<2x1x128xf32, #tpu.memory_space<vmem>>, vector<1x1x128xf32>
    %5 = vector.shape_cast %4 : vector<1x1x128xf32> to vector<1x128xf32>
    %6 = vector.shape_cast %5 : vector<1x128xf32> to vector<1x128xf32>
    %7 = vector.broadcast %6 : vector<1x128xf32> to vector<2x128xf32>
    %cst = arith.constant 0.000000e+00 : f32
    %8 = vector.broadcast %cst : f32 to vector<2x32xf32>
    %cst_4 = arith.constant 0.000000e+00 : f32
    %9 = vector.broadcast %cst_4 : f32 to vector<2x32xf32>
    %cst_5 = arith.constant 0.000000e+00 : f32
    %10 = vector.broadcast %cst_5 : f32 to vector<2x32xf32>
    %cst_6 = arith.constant 0.000000e+00 : f32
    %11 = vector.broadcast %cst_6 : f32 to vector<2x32xf32>
    %c0_7 = arith.constant 0 : index
    %c0_8 = arith.constant 0 : index
    %12 = vector.load %arg0[%c0_7, %c0_8] : memref<16x32xf32, #tpu.memory_space<vmem>>, vector<2x32xf32>
    %c0_9 = arith.constant 0 : index
    %c0_10 = arith.constant 0 : index
    %c0_11 = arith.constant 0 : index
    %13 = vector.load %arg1[%c0_9, %c0_10, %c0_11] : memref<2x32x128xf32, #tpu.memory_space<vmem>>, vector<1x32x128xf32>
    %14 = vector.shape_cast %13 : vector<1x32x128xf32> to vector<32x128xf32>
    %cst_12 = arith.constant dense<0.000000e+00> : vector<2x128xf32>
    %15 = tpu.matmul %12, %14, %cst_12 {dimension_numbers = #tpu.dot_dimension_numbers<[1], [0], [0], [1], [0, 0, 1, 1], [], []>} : vector<2x32xf32>, vector<32x128xf32>, vector<2x128xf32> -> vector<2x128xf32>
    %c0_13 = arith.constant 0 : index
    %c0_14 = arith.constant 0 : index
    %c0_15 = arith.constant 0 : index
    %16 = vector.load %arg2[%c0_13, %c0_14, %c0_15] : memref<2x32x128xf32, #tpu.memory_space<vmem>>, vector<1x32x128xf32>
    %17 = vector.shape_cast %16 : vector<1x32x128xf32> to vector<32x128xf32>
    %cst_16 = arith.constant dense<0.000000e+00> : vector<2x128xf32>
    %18 = tpu.matmul %8, %17, %cst_16 {dimension_numbers = #tpu.dot_dimension_numbers<[1], [0], [0], [1], [0, 0, 1, 1], [], []>} : vector<2x32xf32>, vector<32x128xf32>, vector<2x128xf32> -> vector<2x128xf32>
    %19 = arith.addf %15, %18 : vector<2x128xf32>
    %20 = arith.addf %19, %3 : vector<2x128xf32>
    %21 = math.tanh %20 : vector<2x128xf32>
    %cst_17 = arith.constant 5.000000e-01 : f32
    %22 = vector.broadcast %cst_17 : f32 to vector<2x128xf32>
    %23 = arith.mulf %22, %20 : vector<2x128xf32>
    %24 = math.tanh %23 : vector<2x128xf32>
    %cst_18 = arith.constant 5.000000e-01 : f32
    %25 = vector.broadcast %cst_18 : f32 to vector<2x128xf32>
    %26 = arith.mulf %25, %24 : vector<2x128xf32>
    %cst_19 = arith.constant 5.000000e-01 : f32
    %27 = vector.broadcast %cst_19 : f32 to vector<2x128xf32>
    %28 = arith.addf %26, %27 : vector<2x128xf32>
    %29 = vector.extract_strided_slice %28 {offsets = [0, 0], sizes = [2, 32], strides = [1, 1]} : vector<2x128xf32> to vector<2x32xf32>
    %30 = vector.extract_strided_slice %28 {offsets = [0, 32], sizes = [2, 32], strides = [1, 1]} : vector<2x128xf32> to vector<2x32xf32>
    %31 = vector.extract_strided_slice %21 {offsets = [0, 64], sizes = [2, 32], strides = [1, 1]} : vector<2x128xf32> to vector<2x32xf32>
    %32 = vector.extract_strided_slice %28 {offsets = [0, 96], sizes = [2, 32], strides = [1, 1]} : vector<2x128xf32> to vector<2x32xf32>
    %33 = arith.mulf %30, %10 : vector<2x32xf32>
    %34 = arith.mulf %29, %31 : vector<2x32xf32>
    %35 = arith.addf %33, %34 : vector<2x32xf32>
    %36 = math.tanh %35 : vector<2x32xf32>
    %37 = arith.mulf %32, %36 : vector<2x32xf32>
    %c2 = arith.constant 2 : index
    %c0_20 = arith.constant 0 : index
    %38 = vector.load %arg0[%c2, %c0_20] : memref<16x32xf32, #tpu.memory_space<vmem>>, vector<2x32xf32>
    %c0_21 = arith.constant 0 : index
    %c0_22 = arith.constant 0 : index
    %c0_23 = arith.constant 0 : index
    %39 = vector.load %arg1[%c0_21, %c0_22, %c0_23] : memref<2x32x128xf32, #tpu.memory_space<vmem>>, vector<1x32x128xf32>
    %40 = vector.shape_cast %39 : vector<1x32x128xf32> to vector<32x128xf32>
    %cst_24 = arith.constant dense<0.000000e+00> : vector<2x128xf32>
    %41 = tpu.matmul %38, %40, %cst_24 {dimension_numbers = #tpu.dot_dimension_numbers<[1], [0], [0], [1], [0, 0, 1, 1], [], []>} : vector<2x32xf32>, vector<32x128xf32>, vector<2x128xf32> -> vector<2x128xf32>
    %c0_25 = arith.constant 0 : index
    %c0_26 = arith.constant 0 : index
    %c0_27 = arith.constant 0 : index
    %42 = vector.load %arg2[%c0_25, %c0_26, %c0_27] : memref<2x32x128xf32, #tpu.memory_space<vmem>>, vector<1x32x128xf32>
    %43 = vector.shape_cast %42 : vector<1x32x128xf32> to vector<32x128xf32>
    %cst_28 = arith.constant dense<0.000000e+00> : vector<2x128xf32>
    %44 = tpu.matmul %37, %43, %cst_28 {dimension_numbers = #tpu.dot_dimension_numbers<[1], [0], [0], [1], [0, 0, 1, 1], [], []>} : vector<2x32xf32>, vector<32x128xf32>, vector<2x128xf32> -> vector<2x128xf32>
    %45 = arith.addf %41, %44 : vector<2x128xf32>
    %46 = arith.addf %45, %3 : vector<2x128xf32>
    %47 = math.tanh %46 : vector<2x128xf32>
    %cst_29 = arith.constant 5.000000e-01 : f32
    %48 = vector.broadcast %cst_29 : f32 to vector<2x128xf32>
    %49 = arith.mulf %48, %46 : vector<2x128xf32>
    %50 = math.tanh %49 : vector<2x128xf32>
    %cst_30 = arith.constant 5.000000e-01 : f32
    %51 = vector.broadcast %cst_30 : f32 to vector<2x128xf32>
    %52 = arith.mulf %51, %50 : vector<2x128xf32>
    %cst_31 = arith.constant 5.000000e-01 : f32
    %53 = vector.broadcast %cst_31 : f32 to vector<2x128xf32>
    %54 = arith.addf %52, %53 : vector<2x128xf32>
    %55 = vector.extract_strided_slice %54 {offsets = [0, 0], sizes = [2, 32], strides = [1, 1]} : vector<2x128xf32> to vector<2x32xf32>
    %56 = vector.extract_strided_slice %54 {offsets = [0, 32], sizes = [2, 32], strides = [1, 1]} : vector<2x128xf32> to vector<2x32xf32>
    %57 = vector.extract_strided_slice %47 {offsets = [0, 64], sizes = [2, 32], strides = [1, 1]} : vector<2x128xf32> to vector<2x32xf32>
    %58 = vector.extract_strided_slice %54 {offsets = [0, 96], sizes = [2, 32], strides = [1, 1]} : vector<2x128xf32> to vector<2x32xf32>
    %59 = arith.mulf %56, %35 : vector<2x32xf32>
    %60 = arith.mulf %55, %57 : vector<2x32xf32>
    %61 = arith.addf %59, %60 : vector<2x32xf32>
    %62 = math.tanh %61 : vector<2x32xf32>
    %63 = arith.mulf %58, %62 : vector<2x32xf32>
    %c1_32 = arith.constant 1 : index
    %c0_33 = arith.constant 0 : index
    %c0_34 = arith.constant 0 : index
    %64 = vector.load %arg1[%c1_32, %c0_33, %c0_34] : memref<2x32x128xf32, #tpu.memory_space<vmem>>, vector<1x32x128xf32>
    %65 = vector.shape_cast %64 : vector<1x32x128xf32> to vector<32x128xf32>
    %cst_35 = arith.constant dense<0.000000e+00> : vector<2x128xf32>
    %66 = tpu.matmul %37, %65, %cst_35 {dimension_numbers = #tpu.dot_dimension_numbers<[1], [0], [0], [1], [0, 0, 1, 1], [], []>} : vector<2x32xf32>, vector<32x128xf32>, vector<2x128xf32> -> vector<2x128xf32>
    %c1_36 = arith.constant 1 : index
    %c0_37 = arith.constant 0 : index
    %c0_38 = arith.constant 0 : index
    %67 = vector.load %arg2[%c1_36, %c0_37, %c0_38] : memref<2x32x128xf32, #tpu.memory_space<vmem>>, vector<1x32x128xf32>
    %68 = vector.shape_cast %67 : vector<1x32x128xf32> to vector<32x128xf32>
    %cst_39 = arith.constant dense<0.000000e+00> : vector<2x128xf32>
    %69 = tpu.matmul %9, %68, %cst_39 {dimension_numbers = #tpu.dot_dimension_numbers<[1], [0], [0], [1], [0, 0, 1, 1], [], []>} : vector<2x32xf32>, vector<32x128xf32>, vector<2x128xf32> -> vector<2x128xf32>
    %70 = arith.addf %66, %69 : vector<2x128xf32>
    %71 = arith.addf %70, %7 : vector<2x128xf32>
    %72 = math.tanh %71 : vector<2x128xf32>
    %cst_40 = arith.constant 5.000000e-01 : f32
    %73 = vector.broadcast %cst_40 : f32 to vector<2x128xf32>
    %74 = arith.mulf %73, %71 : vector<2x128xf32>
    %75 = math.tanh %74 : vector<2x128xf32>
    %cst_41 = arith.constant 5.000000e-01 : f32
    %76 = vector.broadcast %cst_41 : f32 to vector<2x128xf32>
    %77 = arith.mulf %76, %75 : vector<2x128xf32>
    %cst_42 = arith.constant 5.000000e-01 : f32
    %78 = vector.broadcast %cst_42 : f32 to vector<2x128xf32>
    %79 = arith.addf %77, %78 : vector<2x128xf32>
    %80 = vector.extract_strided_slice %79 {offsets = [0, 0], sizes = [2, 32], strides = [1, 1]} : vector<2x128xf32> to vector<2x32xf32>
    %81 = vector.extract_strided_slice %79 {offsets = [0, 32], sizes = [2, 32], strides = [1, 1]} : vector<2x128xf32> to vector<2x32xf32>
    %82 = vector.extract_strided_slice %72 {offsets = [0, 64], sizes = [2, 32], strides = [1, 1]} : vector<2x128xf32> to vector<2x32xf32>
    %83 = vector.extract_strided_slice %79 {offsets = [0, 96], sizes = [2, 32], strides = [1, 1]} : vector<2x128xf32> to vector<2x32xf32>
    %84 = arith.mulf %81, %11 : vector<2x32xf32>
    %85 = arith.mulf %80, %82 : vector<2x32xf32>
    %86 = arith.addf %84, %85 : vector<2x32xf32>
    %87 = math.tanh %86 : vector<2x32xf32>
    %88 = arith.mulf %83, %87 : vector<2x32xf32>
    %c0_43 = arith.constant 0 : index
    %c0_44 = arith.constant 0 : index
    %89 = vector.load %arg7[%c0_43, %c0_44] : memref<16x32xf32, #tpu.memory_space<vmem>>, vector<2x32xf32>
    tpu.vector_store %arg7[%c0_43, %c0_44], %88 {strides = array<i32>} : memref<16x32xf32, #tpu.memory_space<vmem>>, vector<2x32xf32>,
    %c4 = arith.constant 4 : index
    %c0_45 = arith.constant 0 : index
    %90 = vector.load %arg0[%c4, %c0_45] : memref<16x32xf32, #tpu.memory_space<vmem>>, vector<2x32xf32>
    %c0_46 = arith.constant 0 : index
    %c0_47 = arith.constant 0 : index
    %c0_48 = arith.constant 0 : index
    %91 = vector.load %arg1[%c0_46, %c0_47, %c0_48] : memref<2x32x128xf32, #tpu.memory_space<vmem>>, vector<1x32x128xf32>
    %92 = vector.shape_cast %91 : vector<1x32x128xf32> to vector<32x128xf32>
    %cst_49 = arith.constant dense<0.000000e+00> : vector<2x128xf32>
    %93 = tpu.matmul %90, %92, %cst_49 {dimension_numbers = #tpu.dot_dimension_numbers<[1], [0], [0], [1], [0, 0, 1, 1], [], []>} : vector<2x32xf32>, vector<32x128xf32>, vector<2x128xf32> -> vector<2x128xf32>
    %c0_50 = arith.constant 0 : index
    %c0_51 = arith.constant 0 : index
    %c0_52 = arith.constant 0 : index
    %94 = vector.load %arg2[%c0_50, %c0_51, %c0_52] : memref<2x32x128xf32, #tpu.memory_space<vmem>>, vector<1x32x128xf32>
    %95 = vector.shape_cast %94 : vector<1x32x128xf32> to vector<32x128xf32>
    %cst_53 = arith.constant dense<0.000000e+00> : vector<2x128xf32>
    %96 = tpu.matmul %63, %95, %cst_53 {dimension_numbers = #tpu.dot_dimension_numbers<[1], [0], [0], [1], [0, 0, 1, 1], [], []>} : vector<2x32xf32>, vector<32x128xf32>, vector<2x128xf32> -> vector<2x128xf32>
    %97 = arith.addf %93, %96 : vector<2x128xf32>
    %98 = arith.addf %97, %3 : vector<2x128xf32>
    %99 = math.tanh %98 : vector<2x128xf32>
    %cst_54 = arith.constant 5.000000e-01 : f32
    %100 = vector.broadcast %cst_54 : f32 to vector<2x128xf32>
    %101 = arith.mulf %100, %98 : vector<2x128xf32>
    %102 = math.tanh %101 : vector<2x128xf32>
    %cst_55 = arith.constant 5.000000e-01 : f32
    %103 = vector.broadcast %cst_55 : f32 to vector<2x128xf32>
    %104 = arith.mulf %103, %102 : vector<2x128xf32>
    %cst_56 = arith.constant 5.000000e-01 : f32
    %105 = vector.broadcast %cst_56 : f32 to vector<2x128xf32>
    %106 = arith.addf %104, %105 : vector<2x128xf32>
    %107 = vector.extract_strided_slice %106 {offsets = [0, 0], sizes = [2, 32], strides = [1, 1]} : vector<2x128xf32> to vector<2x32xf32>
    %108 = vector.extract_strided_slice %106 {offsets = [0, 32], sizes = [2, 32], strides = [1, 1]} : vector<2x128xf32> to vector<2x32xf32>
    %109 = vector.extract_strided_slice %99 {offsets = [0, 64], sizes = [2, 32], strides = [1, 1]} : vector<2x128xf32> to vector<2x32xf32>
    %110 = vector.extract_strided_slice %106 {offsets = [0, 96], sizes = [2, 32], strides = [1, 1]} : vector<2x128xf32> to vector<2x32xf32>
    %111 = arith.mulf %108, %61 : vector<2x32xf32>
    %112 = arith.mulf %107, %109 : vector<2x32xf32>
    %113 = arith.addf %111, %112 : vector<2x32xf32>
    %114 = math.tanh %113 : vector<2x32xf32>
    %115 = arith.mulf %110, %114 : vector<2x32xf32>
    %c1_57 = arith.constant 1 : index
    %c0_58 = arith.constant 0 : index
    %c0_59 = arith.constant 0 : index
    %116 = vector.load %arg1[%c1_57, %c0_58, %c0_59] : memref<2x32x128xf32, #tpu.memory_space<vmem>>, vector<1x32x128xf32>
    %117 = vector.shape_cast %116 : vector<1x32x128xf32> to vector<32x128xf32>
    %cst_60 = arith.constant dense<0.000000e+00> : vector<2x128xf32>
    %118 = tpu.matmul %63, %117, %cst_60 {dimension_numbers = #tpu.dot_dimension_numbers<[1], [0], [0], [1], [0, 0, 1, 1], [], []>} : vector<2x32xf32>, vector<32x128xf32>, vector<2x128xf32> -> vector<2x128xf32>
    %c1_61 = arith.constant 1 : index
    %c0_62 = arith.constant 0 : index
    %c0_63 = arith.constant 0 : index
    %119 = vector.load %arg2[%c1_61, %c0_62, %c0_63] : memref<2x32x128xf32, #tpu.memory_space<vmem>>, vector<1x32x128xf32>
    %120 = vector.shape_cast %119 : vector<1x32x128xf32> to vector<32x128xf32>
    %cst_64 = arith.constant dense<0.000000e+00> : vector<2x128xf32>
    %121 = tpu.matmul %88, %120, %cst_64 {dimension_numbers = #tpu.dot_dimension_numbers<[1], [0], [0], [1], [0, 0, 1, 1], [], []>} : vector<2x32xf32>, vector<32x128xf32>, vector<2x128xf32> -> vector<2x128xf32>
    %122 = arith.addf %118, %121 : vector<2x128xf32>
    %123 = arith.addf %122, %7 : vector<2x128xf32>
    %124 = math.tanh %123 : vector<2x128xf32>
    %cst_65 = arith.constant 5.000000e-01 : f32
    %125 = vector.broadcast %cst_65 : f32 to vector<2x128xf32>
    %126 = arith.mulf %125, %123 : vector<2x128xf32>
    %127 = math.tanh %126 : vector<2x128xf32>
    %cst_66 = arith.constant 5.000000e-01 : f32
    %128 = vector.broadcast %cst_66 : f32 to vector<2x128xf32>
    %129 = arith.mulf %128, %127 : vector<2x128xf32>
    %cst_67 = arith.constant 5.000000e-01 : f32
    %130 = vector.broadcast %cst_67 : f32 to vector<2x128xf32>
    %131 = arith.addf %129, %130 : vector<2x128xf32>
    %132 = vector.extract_strided_slice %131 {offsets = [0, 0], sizes = [2, 32], strides = [1, 1]} : vector<2x128xf32> to vector<2x32xf32>
    %133 = vector.extract_strided_slice %131 {offsets = [0, 32], sizes = [2, 32], strides = [1, 1]} : vector<2x128xf32> to vector<2x32xf32>
    %134 = vector.extract_strided_slice %124 {offsets = [0, 64], sizes = [2, 32], strides = [1, 1]} : vector<2x128xf32> to vector<2x32xf32>
    %135 = vector.extract_strided_slice %131 {offsets = [0, 96], sizes = [2, 32], strides = [1, 1]} : vector<2x128xf32> to vector<2x32xf32>
    %136 = arith.mulf %133, %86 : vector<2x32xf32>
    %137 = arith.mulf %132, %134 : vector<2x32xf32>
    %138 = arith.addf %136, %137 : vector<2x32xf32>
    %139 = math.tanh %138 : vector<2x32xf32>
    %140 = arith.mulf %135, %139 : vector<2x32xf32>
    %c2_68 = arith.constant 2 : index
    %c0_69 = arith.constant 0 : index
    %141 = vector.load %arg7[%c2_68, %c0_69] : memref<16x32xf32, #tpu.memory_space<vmem>>, vector<2x32xf32>
    tpu.vector_store %arg7[%c2_68, %c0_69], %140 {strides = array<i32>} : memref<16x32xf32, #tpu.memory_space<vmem>>, vector<2x32xf32>,
    %c6 = arith.constant 6 : index
    %c0_70 = arith.constant 0 : index
    %142 = vector.load %arg0[%c6, %c0_70] : memref<16x32xf32, #tpu.memory_space<vmem>>, vector<2x32xf32>
    %c0_71 = arith.constant 0 : index
    %c0_72 = arith.constant 0 : index
    %c0_73 = arith.constant 0 : index
    %143 = vector.load %arg1[%c0_71, %c0_72, %c0_73] : memref<2x32x128xf32, #tpu.memory_space<vmem>>, vector<1x32x128xf32>
    %144 = vector.shape_cast %143 : vector<1x32x128xf32> to vector<32x128xf32>
    %cst_74 = arith.constant dense<0.000000e+00> : vector<2x128xf32>
    %145 = tpu.matmul %142, %144, %cst_74 {dimension_numbers = #tpu.dot_dimension_numbers<[1], [0], [0], [1], [0, 0, 1, 1], [], []>} : vector<2x32xf32>, vector<32x128xf32>, vector<2x128xf32> -> vector<2x128xf32>
    %c0_75 = arith.constant 0 : index
    %c0_76 = arith.constant 0 : index
    %c0_77 = arith.constant 0 : index
    %146 = vector.load %arg2[%c0_75, %c0_76, %c0_77] : memref<2x32x128xf32, #tpu.memory_space<vmem>>, vector<1x32x128xf32>
    %147 = vector.shape_cast %146 : vector<1x32x128xf32> to vector<32x128xf32>
    %cst_78 = arith.constant dense<0.000000e+00> : vector<2x128xf32>
    %148 = tpu.matmul %115, %147, %cst_78 {dimension_numbers = #tpu.dot_dimension_numbers<[1], [0], [0], [1], [0, 0, 1, 1], [], []>} : vector<2x32xf32>, vector<32x128xf32>, vector<2x128xf32> -> vector<2x128xf32>
    %149 = arith.addf %145, %148 : vector<2x128xf32>
    %150 = arith.addf %149, %3 : vector<2x128xf32>
    %151 = math.tanh %150 : vector<2x128xf32>
    %cst_79 = arith.constant 5.000000e-01 : f32
    %152 = vector.broadcast %cst_79 : f32 to vector<2x128xf32>
    %153 = arith.mulf %152, %150 : vector<2x128xf32>
    %154 = math.tanh %153 : vector<2x128xf32>
    %cst_80 = arith.constant 5.000000e-01 : f32
    %155 = vector.broadcast %cst_80 : f32 to vector<2x128xf32>
    %156 = arith.mulf %155, %154 : vector<2x128xf32>
    %cst_81 = arith.constant 5.000000e-01 : f32
    %157 = vector.broadcast %cst_81 : f32 to vector<2x128xf32>
    %158 = arith.addf %156, %157 : vector<2x128xf32>
    %159 = vector.extract_strided_slice %158 {offsets = [0, 0], sizes = [2, 32], strides = [1, 1]} : vector<2x128xf32> to vector<2x32xf32>
    %160 = vector.extract_strided_slice %158 {offsets = [0, 32], sizes = [2, 32], strides = [1, 1]} : vector<2x128xf32> to vector<2x32xf32>
    %161 = vector.extract_strided_slice %151 {offsets = [0, 64], sizes = [2, 32], strides = [1, 1]} : vector<2x128xf32> to vector<2x32xf32>
    %162 = vector.extract_strided_slice %158 {offsets = [0, 96], sizes = [2, 32], strides = [1, 1]} : vector<2x128xf32> to vector<2x32xf32>
    %163 = arith.mulf %160, %113 : vector<2x32xf32>
    %164 = arith.mulf %159, %161 : vector<2x32xf32>
    %165 = arith.addf %163, %164 : vector<2x32xf32>
    %166 = math.tanh %165 : vector<2x32xf32>
    %167 = arith.mulf %162, %166 : vector<2x32xf32>
    %c1_82 = arith.constant 1 : index
    %c0_83 = arith.constant 0 : index
    %c0_84 = arith.constant 0 : index
    %168 = vector.load %arg1[%c1_82, %c0_83, %c0_84] : memref<2x32x128xf32, #tpu.memory_space<vmem>>, vector<1x32x128xf32>
    %169 = vector.shape_cast %168 : vector<1x32x128xf32> to vector<32x128xf32>
    %cst_85 = arith.constant dense<0.000000e+00> : vector<2x128xf32>
    %170 = tpu.matmul %115, %169, %cst_85 {dimension_numbers = #tpu.dot_dimension_numbers<[1], [0], [0], [1], [0, 0, 1, 1], [], []>} : vector<2x32xf32>, vector<32x128xf32>, vector<2x128xf32> -> vector<2x128xf32>
    %c1_86 = arith.constant 1 : index
    %c0_87 = arith.constant 0 : index
    %c0_88 = arith.constant 0 : index
    %171 = vector.load %arg2[%c1_86, %c0_87, %c0_88] : memref<2x32x128xf32, #tpu.memory_space<vmem>>, vector<1x32x128xf32>
    %172 = vector.shape_cast %171 : vector<1x32x128xf32> to vector<32x128xf32>
    %cst_89 = arith.constant dense<0.000000e+00> : vector<2x128xf32>
    %173 = tpu.matmul %140, %172, %cst_89 {dimension_numbers = #tpu.dot_dimension_numbers<[1], [0], [0], [1], [0, 0, 1, 1], [], []>} : vector<2x32xf32>, vector<32x128xf32>, vector<2x128xf32> -> vector<2x128xf32>
    %174 = arith.addf %170, %173 : vector<2x128xf32>
    %175 = arith.addf %174, %7 : vector<2x128xf32>
    %176 = math.tanh %175 : vector<2x128xf32>
    %cst_90 = arith.constant 5.000000e-01 : f32
    %177 = vector.broadcast %cst_90 : f32 to vector<2x128xf32>
    %178 = arith.mulf %177, %175 : vector<2x128xf32>
    %179 = math.tanh %178 : vector<2x128xf32>
    %cst_91 = arith.constant 5.000000e-01 : f32
    %180 = vector.broadcast %cst_91 : f32 to vector<2x128xf32>
    %181 = arith.mulf %180, %179 : vector<2x128xf32>
    %cst_92 = arith.constant 5.000000e-01 : f32
    %182 = vector.broadcast %cst_92 : f32 to vector<2x128xf32>
    %183 = arith.addf %181, %182 : vector<2x128xf32>
    %184 = vector.extract_strided_slice %183 {offsets = [0, 0], sizes = [2, 32], strides = [1, 1]} : vector<2x128xf32> to vector<2x32xf32>
    %185 = vector.extract_strided_slice %183 {offsets = [0, 32], sizes = [2, 32], strides = [1, 1]} : vector<2x128xf32> to vector<2x32xf32>
    %186 = vector.extract_strided_slice %176 {offsets = [0, 64], sizes = [2, 32], strides = [1, 1]} : vector<2x128xf32> to vector<2x32xf32>
    %187 = vector.extract_strided_slice %183 {offsets = [0, 96], sizes = [2, 32], strides = [1, 1]} : vector<2x128xf32> to vector<2x32xf32>
    %188 = arith.mulf %185, %138 : vector<2x32xf32>
    %189 = arith.mulf %184, %186 : vector<2x32xf32>
    %190 = arith.addf %188, %189 : vector<2x32xf32>
    %191 = math.tanh %190 : vector<2x32xf32>
    %192 = arith.mulf %187, %191 : vector<2x32xf32>
    %c4_93 = arith.constant 4 : index
    %c0_94 = arith.constant 0 : index
    %193 = vector.load %arg7[%c4_93, %c0_94] : memref<16x32xf32, #tpu.memory_space<vmem>>, vector<2x32xf32>
    tpu.vector_store %arg7[%c4_93, %c0_94], %192 {strides = array<i32>} : memref<16x32xf32, #tpu.memory_space<vmem>>, vector<2x32xf32>,
    %c8 = arith.constant 8 : index
    %c0_95 = arith.constant 0 : index
    %194 = vector.load %arg0[%c8, %c0_95] : memref<16x32xf32, #tpu.memory_space<vmem>>, vector<2x32xf32>
    %c0_96 = arith.constant 0 : index
    %c0_97 = arith.constant 0 : index
    %c0_98 = arith.constant 0 : index
    %195 = vector.load %arg1[%c0_96, %c0_97, %c0_98] : memref<2x32x128xf32, #tpu.memory_space<vmem>>, vector<1x32x128xf32>
    %196 = vector.shape_cast %195 : vector<1x32x128xf32> to vector<32x128xf32>
    %cst_99 = arith.constant dense<0.000000e+00> : vector<2x128xf32>
    %197 = tpu.matmul %194, %196, %cst_99 {dimension_numbers = #tpu.dot_dimension_numbers<[1], [0], [0], [1], [0, 0, 1, 1], [], []>} : vector<2x32xf32>, vector<32x128xf32>, vector<2x128xf32> -> vector<2x128xf32>
    %c0_100 = arith.constant 0 : index
    %c0_101 = arith.constant 0 : index
    %c0_102 = arith.constant 0 : index
    %198 = vector.load %arg2[%c0_100, %c0_101, %c0_102] : memref<2x32x128xf32, #tpu.memory_space<vmem>>, vector<1x32x128xf32>
    %199 = vector.shape_cast %198 : vector<1x32x128xf32> to vector<32x128xf32>
    %cst_103 = arith.constant dense<0.000000e+00> : vector<2x128xf32>
    %200 = tpu.matmul %167, %199, %cst_103 {dimension_numbers = #tpu.dot_dimension_numbers<[1], [0], [0], [1], [0, 0, 1, 1], [], []>} : vector<2x32xf32>, vector<32x128xf32>, vector<2x128xf32> -> vector<2x128xf32>
    %201 = arith.addf %197, %200 : vector<2x128xf32>
    %202 = arith.addf %201, %3 : vector<2x128xf32>
    %203 = math.tanh %202 : vector<2x128xf32>
    %cst_104 = arith.constant 5.000000e-01 : f32
    %204 = vector.broadcast %cst_104 : f32 to vector<2x128xf32>
    %205 = arith.mulf %204, %202 : vector<2x128xf32>
    %206 = math.tanh %205 : vector<2x128xf32>
    %cst_105 = arith.constant 5.000000e-01 : f32
    %207 = vector.broadcast %cst_105 : f32 to vector<2x128xf32>
    %208 = arith.mulf %207, %206 : vector<2x128xf32>
    %cst_106 = arith.constant 5.000000e-01 : f32
    %209 = vector.broadcast %cst_106 : f32 to vector<2x128xf32>
    %210 = arith.addf %208, %209 : vector<2x128xf32>
    %211 = vector.extract_strided_slice %210 {offsets = [0, 0], sizes = [2, 32], strides = [1, 1]} : vector<2x128xf32> to vector<2x32xf32>
    %212 = vector.extract_strided_slice %210 {offsets = [0, 32], sizes = [2, 32], strides = [1, 1]} : vector<2x128xf32> to vector<2x32xf32>
    %213 = vector.extract_strided_slice %203 {offsets = [0, 64], sizes = [2, 32], strides = [1, 1]} : vector<2x128xf32> to vector<2x32xf32>
    %214 = vector.extract_strided_slice %210 {offsets = [0, 96], sizes = [2, 32], strides = [1, 1]} : vector<2x128xf32> to vector<2x32xf32>
    %215 = arith.mulf %212, %165 : vector<2x32xf32>
    %216 = arith.mulf %211, %213 : vector<2x32xf32>
    %217 = arith.addf %215, %216 : vector<2x32xf32>
    %218 = math.tanh %217 : vector<2x32xf32>
    %219 = arith.mulf %214, %218 : vector<2x32xf32>
    %c1_107 = arith.constant 1 : index
    %c0_108 = arith.constant 0 : index
    %c0_109 = arith.constant 0 : index
    %220 = vector.load %arg1[%c1_107, %c0_108, %c0_109] : memref<2x32x128xf32, #tpu.memory_space<vmem>>, vector<1x32x128xf32>
    %221 = vector.shape_cast %220 : vector<1x32x128xf32> to vector<32x128xf32>
    %cst_110 = arith.constant dense<0.000000e+00> : vector<2x128xf32>
    %222 = tpu.matmul %167, %221, %cst_110 {dimension_numbers = #tpu.dot_dimension_numbers<[1], [0], [0], [1], [0, 0, 1, 1], [], []>} : vector<2x32xf32>, vector<32x128xf32>, vector<2x128xf32> -> vector<2x128xf32>
    %c1_111 = arith.constant 1 : index
    %c0_112 = arith.constant 0 : index
    %c0_113 = arith.constant 0 : index
    %223 = vector.load %arg2[%c1_111, %c0_112, %c0_113] : memref<2x32x128xf32, #tpu.memory_space<vmem>>, vector<1x32x128xf32>
    %224 = vector.shape_cast %223 : vector<1x32x128xf32> to vector<32x128xf32>
    %cst_114 = arith.constant dense<0.000000e+00> : vector<2x128xf32>
    %225 = tpu.matmul %192, %224, %cst_114 {dimension_numbers = #tpu.dot_dimension_numbers<[1], [0], [0], [1], [0, 0, 1, 1], [], []>} : vector<2x32xf32>, vector<32x128xf32>, vector<2x128xf32> -> vector<2x128xf32>
    %226 = arith.addf %222, %225 : vector<2x128xf32>
    %227 = arith.addf %226, %7 : vector<2x128xf32>
    %228 = math.tanh %227 : vector<2x128xf32>
    %cst_115 = arith.constant 5.000000e-01 : f32
    %229 = vector.broadcast %cst_115 : f32 to vector<2x128xf32>
    %230 = arith.mulf %229, %227 : vector<2x128xf32>
    %231 = math.tanh %230 : vector<2x128xf32>
    %cst_116 = arith.constant 5.000000e-01 : f32
    %232 = vector.broadcast %cst_116 : f32 to vector<2x128xf32>
    %233 = arith.mulf %232, %231 : vector<2x128xf32>
    %cst_117 = arith.constant 5.000000e-01 : f32
    %234 = vector.broadcast %cst_117 : f32 to vector<2x128xf32>
    %235 = arith.addf %233, %234 : vector<2x128xf32>
    %236 = vector.extract_strided_slice %235 {offsets = [0, 0], sizes = [2, 32], strides = [1, 1]} : vector<2x128xf32> to vector<2x32xf32>
    %237 = vector.extract_strided_slice %235 {offsets = [0, 32], sizes = [2, 32], strides = [1, 1]} : vector<2x128xf32> to vector<2x32xf32>
    %238 = vector.extract_strided_slice %228 {offsets = [0, 64], sizes = [2, 32], strides = [1, 1]} : vector<2x128xf32> to vector<2x32xf32>
    %239 = vector.extract_strided_slice %235 {offsets = [0, 96], sizes = [2, 32], strides = [1, 1]} : vector<2x128xf32> to vector<2x32xf32>
    %240 = arith.mulf %237, %190 : vector<2x32xf32>
    %241 = arith.mulf %236, %238 : vector<2x32xf32>
    %242 = arith.addf %240, %241 : vector<2x32xf32>
    %243 = math.tanh %242 : vector<2x32xf32>
    %244 = arith.mulf %239, %243 : vector<2x32xf32>
    %c6_118 = arith.constant 6 : index
    %c0_119 = arith.constant 0 : index
    %245 = vector.load %arg7[%c6_118, %c0_119] : memref<16x32xf32, #tpu.memory_space<vmem>>, vector<2x32xf32>
    tpu.vector_store %arg7[%c6_118, %c0_119], %244 {strides = array<i32>} : memref<16x32xf32, #tpu.memory_space<vmem>>, vector<2x32xf32>,
    %c10 = arith.constant 10 : index
    %c0_120 = arith.constant 0 : index
    %246 = vector.load %arg0[%c10, %c0_120] : memref<16x32xf32, #tpu.memory_space<vmem>>, vector<2x32xf32>
    %c0_121 = arith.constant 0 : index
    %c0_122 = arith.constant 0 : index
    %c0_123 = arith.constant 0 : index
    %247 = vector.load %arg1[%c0_121, %c0_122, %c0_123] : memref<2x32x128xf32, #tpu.memory_space<vmem>>, vector<1x32x128xf32>
    %248 = vector.shape_cast %247 : vector<1x32x128xf32> to vector<32x128xf32>
    %cst_124 = arith.constant dense<0.000000e+00> : vector<2x128xf32>
    %249 = tpu.matmul %246, %248, %cst_124 {dimension_numbers = #tpu.dot_dimension_numbers<[1], [0], [0], [1], [0, 0, 1, 1], [], []>} : vector<2x32xf32>, vector<32x128xf32>, vector<2x128xf32> -> vector<2x128xf32>
    %c0_125 = arith.constant 0 : index
    %c0_126 = arith.constant 0 : index
    %c0_127 = arith.constant 0 : index
    %250 = vector.load %arg2[%c0_125, %c0_126, %c0_127] : memref<2x32x128xf32, #tpu.memory_space<vmem>>, vector<1x32x128xf32>
    %251 = vector.shape_cast %250 : vector<1x32x128xf32> to vector<32x128xf32>
    %cst_128 = arith.constant dense<0.000000e+00> : vector<2x128xf32>
    %252 = tpu.matmul %219, %251, %cst_128 {dimension_numbers = #tpu.dot_dimension_numbers<[1], [0], [0], [1], [0, 0, 1, 1], [], []>} : vector<2x32xf32>, vector<32x128xf32>, vector<2x128xf32> -> vector<2x128xf32>
    %253 = arith.addf %249, %252 : vector<2x128xf32>
    %254 = arith.addf %253, %3 : vector<2x128xf32>
    %255 = math.tanh %254 : vector<2x128xf32>
    %cst_129 = arith.constant 5.000000e-01 : f32
    %256 = vector.broadcast %cst_129 : f32 to vector<2x128xf32>
    %257 = arith.mulf %256, %254 : vector<2x128xf32>
    %258 = math.tanh %257 : vector<2x128xf32>
    %cst_130 = arith.constant 5.000000e-01 : f32
    %259 = vector.broadcast %cst_130 : f32 to vector<2x128xf32>
    %260 = arith.mulf %259, %258 : vector<2x128xf32>
    %cst_131 = arith.constant 5.000000e-01 : f32
    %261 = vector.broadcast %cst_131 : f32 to vector<2x128xf32>
    %262 = arith.addf %260, %261 : vector<2x128xf32>
    %263 = vector.extract_strided_slice %262 {offsets = [0, 0], sizes = [2, 32], strides = [1, 1]} : vector<2x128xf32> to vector<2x32xf32>
    %264 = vector.extract_strided_slice %262 {offsets = [0, 32], sizes = [2, 32], strides = [1, 1]} : vector<2x128xf32> to vector<2x32xf32>
    %265 = vector.extract_strided_slice %255 {offsets = [0, 64], sizes = [2, 32], strides = [1, 1]} : vector<2x128xf32> to vector<2x32xf32>
    %266 = vector.extract_strided_slice %262 {offsets = [0, 96], sizes = [2, 32], strides = [1, 1]} : vector<2x128xf32> to vector<2x32xf32>
    %267 = arith.mulf %264, %217 : vector<2x32xf32>
    %268 = arith.mulf %263, %265 : vector<2x32xf32>
    %269 = arith.addf %267, %268 : vector<2x32xf32>
    %270 = math.tanh %269 : vector<2x32xf32>
    %271 = arith.mulf %266, %270 : vector<2x32xf32>
    %c1_132 = arith.constant 1 : index
    %c0_133 = arith.constant 0 : index
    %c0_134 = arith.constant 0 : index
    %272 = vector.load %arg1[%c1_132, %c0_133, %c0_134] : memref<2x32x128xf32, #tpu.memory_space<vmem>>, vector<1x32x128xf32>
    %273 = vector.shape_cast %272 : vector<1x32x128xf32> to vector<32x128xf32>
    %cst_135 = arith.constant dense<0.000000e+00> : vector<2x128xf32>
    %274 = tpu.matmul %219, %273, %cst_135 {dimension_numbers = #tpu.dot_dimension_numbers<[1], [0], [0], [1], [0, 0, 1, 1], [], []>} : vector<2x32xf32>, vector<32x128xf32>, vector<2x128xf32> -> vector<2x128xf32>
    %c1_136 = arith.constant 1 : index
    %c0_137 = arith.constant 0 : index
    %c0_138 = arith.constant 0 : index
    %275 = vector.load %arg2[%c1_136, %c0_137, %c0_138] : memref<2x32x128xf32, #tpu.memory_space<vmem>>, vector<1x32x128xf32>
    %276 = vector.shape_cast %275 : vector<1x32x128xf32> to vector<32x128xf32>
    %cst_139 = arith.constant dense<0.000000e+00> : vector<2x128xf32>
    %277 = tpu.matmul %244, %276, %cst_139 {dimension_numbers = #tpu.dot_dimension_numbers<[1], [0], [0], [1], [0, 0, 1, 1], [], []>} : vector<2x32xf32>, vector<32x128xf32>, vector<2x128xf32> -> vector<2x128xf32>
    %278 = arith.addf %274, %277 : vector<2x128xf32>
    %279 = arith.addf %278, %7 : vector<2x128xf32>
    %280 = math.tanh %279 : vector<2x128xf32>
    %cst_140 = arith.constant 5.000000e-01 : f32
    %281 = vector.broadcast %cst_140 : f32 to vector<2x128xf32>
    %282 = arith.mulf %281, %279 : vector<2x128xf32>
    %283 = math.tanh %282 : vector<2x128xf32>
    %cst_141 = arith.constant 5.000000e-01 : f32
    %284 = vector.broadcast %cst_141 : f32 to vector<2x128xf32>
    %285 = arith.mulf %284, %283 : vector<2x128xf32>
    %cst_142 = arith.constant 5.000000e-01 : f32
    %286 = vector.broadcast %cst_142 : f32 to vector<2x128xf32>
    %287 = arith.addf %285, %286 : vector<2x128xf32>
    %288 = vector.extract_strided_slice %287 {offsets = [0, 0], sizes = [2, 32], strides = [1, 1]} : vector<2x128xf32> to vector<2x32xf32>
    %289 = vector.extract_strided_slice %287 {offsets = [0, 32], sizes = [2, 32], strides = [1, 1]} : vector<2x128xf32> to vector<2x32xf32>
    %290 = vector.extract_strided_slice %280 {offsets = [0, 64], sizes = [2, 32], strides = [1, 1]} : vector<2x128xf32> to vector<2x32xf32>
    %291 = vector.extract_strided_slice %287 {offsets = [0, 96], sizes = [2, 32], strides = [1, 1]} : vector<2x128xf32> to vector<2x32xf32>
    %292 = arith.mulf %289, %242 : vector<2x32xf32>
    %293 = arith.mulf %288, %290 : vector<2x32xf32>
    %294 = arith.addf %292, %293 : vector<2x32xf32>
    %295 = math.tanh %294 : vector<2x32xf32>
    %296 = arith.mulf %291, %295 : vector<2x32xf32>
    %c8_143 = arith.constant 8 : index
    %c0_144 = arith.constant 0 : index
    %297 = vector.load %arg7[%c8_143, %c0_144] : memref<16x32xf32, #tpu.memory_space<vmem>>, vector<2x32xf32>
    tpu.vector_store %arg7[%c8_143, %c0_144], %296 {strides = array<i32>} : memref<16x32xf32, #tpu.memory_space<vmem>>, vector<2x32xf32>,
    %c12 = arith.constant 12 : index
    %c0_145 = arith.constant 0 : index
    %298 = vector.load %arg0[%c12, %c0_145] : memref<16x32xf32, #tpu.memory_space<vmem>>, vector<2x32xf32>
    %c0_146 = arith.constant 0 : index
    %c0_147 = arith.constant 0 : index
    %c0_148 = arith.constant 0 : index
    %299 = vector.load %arg1[%c0_146, %c0_147, %c0_148] : memref<2x32x128xf32, #tpu.memory_space<vmem>>, vector<1x32x128xf32>
    %300 = vector.shape_cast %299 : vector<1x32x128xf32> to vector<32x128xf32>
    %cst_149 = arith.constant dense<0.000000e+00> : vector<2x128xf32>
    %301 = tpu.matmul %298, %300, %cst_149 {dimension_numbers = #tpu.dot_dimension_numbers<[1], [0], [0], [1], [0, 0, 1, 1], [], []>} : vector<2x32xf32>, vector<32x128xf32>, vector<2x128xf32> -> vector<2x128xf32>
    %c0_150 = arith.constant 0 : index
    %c0_151 = arith.constant 0 : index
    %c0_152 = arith.constant 0 : index
    %302 = vector.load %arg2[%c0_150, %c0_151, %c0_152] : memref<2x32x128xf32, #tpu.memory_space<vmem>>, vector<1x32x128xf32>
    %303 = vector.shape_cast %302 : vector<1x32x128xf32> to vector<32x128xf32>
    %cst_153 = arith.constant dense<0.000000e+00> : vector<2x128xf32>
    %304 = tpu.matmul %271, %303, %cst_153 {dimension_numbers = #tpu.dot_dimension_numbers<[1], [0], [0], [1], [0, 0, 1, 1], [], []>} : vector<2x32xf32>, vector<32x128xf32>, vector<2x128xf32> -> vector<2x128xf32>
    %305 = arith.addf %301, %304 : vector<2x128xf32>
    %306 = arith.addf %305, %3 : vector<2x128xf32>
    %307 = math.tanh %306 : vector<2x128xf32>
    %cst_154 = arith.constant 5.000000e-01 : f32
    %308 = vector.broadcast %cst_154 : f32 to vector<2x128xf32>
    %309 = arith.mulf %308, %306 : vector<2x128xf32>
    %310 = math.tanh %309 : vector<2x128xf32>
    %cst_155 = arith.constant 5.000000e-01 : f32
    %311 = vector.broadcast %cst_155 : f32 to vector<2x128xf32>
    %312 = arith.mulf %311, %310 : vector<2x128xf32>
    %cst_156 = arith.constant 5.000000e-01 : f32
    %313 = vector.broadcast %cst_156 : f32 to vector<2x128xf32>
    %314 = arith.addf %312, %313 : vector<2x128xf32>
    %315 = vector.extract_strided_slice %314 {offsets = [0, 0], sizes = [2, 32], strides = [1, 1]} : vector<2x128xf32> to vector<2x32xf32>
    %316 = vector.extract_strided_slice %314 {offsets = [0, 32], sizes = [2, 32], strides = [1, 1]} : vector<2x128xf32> to vector<2x32xf32>
    %317 = vector.extract_strided_slice %307 {offsets = [0, 64], sizes = [2, 32], strides = [1, 1]} : vector<2x128xf32> to vector<2x32xf32>
    %318 = vector.extract_strided_slice %314 {offsets = [0, 96], sizes = [2, 32], strides = [1, 1]} : vector<2x128xf32> to vector<2x32xf32>
    %319 = arith.mulf %316, %269 : vector<2x32xf32>
    %320 = arith.mulf %315, %317 : vector<2x32xf32>
    %321 = arith.addf %319, %320 : vector<2x32xf32>
    %322 = math.tanh %321 : vector<2x32xf32>
    %323 = arith.mulf %318, %322 : vector<2x32xf32>
    %c1_157 = arith.constant 1 : index
    %c0_158 = arith.constant 0 : index
    %c0_159 = arith.constant 0 : index
    %324 = vector.load %arg1[%c1_157, %c0_158, %c0_159] : memref<2x32x128xf32, #tpu.memory_space<vmem>>, vector<1x32x128xf32>
    %325 = vector.shape_cast %324 : vector<1x32x128xf32> to vector<32x128xf32>
    %cst_160 = arith.constant dense<0.000000e+00> : vector<2x128xf32>
    %326 = tpu.matmul %271, %325, %cst_160 {dimension_numbers = #tpu.dot_dimension_numbers<[1], [0], [0], [1], [0, 0, 1, 1], [], []>} : vector<2x32xf32>, vector<32x128xf32>, vector<2x128xf32> -> vector<2x128xf32>
    %c1_161 = arith.constant 1 : index
    %c0_162 = arith.constant 0 : index
    %c0_163 = arith.constant 0 : index
    %327 = vector.load %arg2[%c1_161, %c0_162, %c0_163] : memref<2x32x128xf32, #tpu.memory_space<vmem>>, vector<1x32x128xf32>
    %328 = vector.shape_cast %327 : vector<1x32x128xf32> to vector<32x128xf32>
    %cst_164 = arith.constant dense<0.000000e+00> : vector<2x128xf32>
    %329 = tpu.matmul %296, %328, %cst_164 {dimension_numbers = #tpu.dot_dimension_numbers<[1], [0], [0], [1], [0, 0, 1, 1], [], []>} : vector<2x32xf32>, vector<32x128xf32>, vector<2x128xf32> -> vector<2x128xf32>
    %330 = arith.addf %326, %329 : vector<2x128xf32>
    %331 = arith.addf %330, %7 : vector<2x128xf32>
    %332 = math.tanh %331 : vector<2x128xf32>
    %cst_165 = arith.constant 5.000000e-01 : f32
    %333 = vector.broadcast %cst_165 : f32 to vector<2x128xf32>
    %334 = arith.mulf %333, %331 : vector<2x128xf32>
    %335 = math.tanh %334 : vector<2x128xf32>
    %cst_166 = arith.constant 5.000000e-01 : f32
    %336 = vector.broadcast %cst_166 : f32 to vector<2x128xf32>
    %337 = arith.mulf %336, %335 : vector<2x128xf32>
    %cst_167 = arith.constant 5.000000e-01 : f32
    %338 = vector.broadcast %cst_167 : f32 to vector<2x128xf32>
    %339 = arith.addf %337, %338 : vector<2x128xf32>
    %340 = vector.extract_strided_slice %339 {offsets = [0, 0], sizes = [2, 32], strides = [1, 1]} : vector<2x128xf32> to vector<2x32xf32>
    %341 = vector.extract_strided_slice %339 {offsets = [0, 32], sizes = [2, 32], strides = [1, 1]} : vector<2x128xf32> to vector<2x32xf32>
    %342 = vector.extract_strided_slice %332 {offsets = [0, 64], sizes = [2, 32], strides = [1, 1]} : vector<2x128xf32> to vector<2x32xf32>
    %343 = vector.extract_strided_slice %339 {offsets = [0, 96], sizes = [2, 32], strides = [1, 1]} : vector<2x128xf32> to vector<2x32xf32>
    %344 = arith.mulf %341, %294 : vector<2x32xf32>
    %345 = arith.mulf %340, %342 : vector<2x32xf32>
    %346 = arith.addf %344, %345 : vector<2x32xf32>
    %347 = math.tanh %346 : vector<2x32xf32>
    %348 = arith.mulf %343, %347 : vector<2x32xf32>
    %c10_168 = arith.constant 10 : index
    %c0_169 = arith.constant 0 : index
    %349 = vector.load %arg7[%c10_168, %c0_169] : memref<16x32xf32, #tpu.memory_space<vmem>>, vector<2x32xf32>
    tpu.vector_store %arg7[%c10_168, %c0_169], %348 {strides = array<i32>} : memref<16x32xf32, #tpu.memory_space<vmem>>, vector<2x32xf32>,
    %c14 = arith.constant 14 : index
    %c0_170 = arith.constant 0 : index
    %350 = vector.load %arg0[%c14, %c0_170] : memref<16x32xf32, #tpu.memory_space<vmem>>, vector<2x32xf32>
    %c0_171 = arith.constant 0 : index
    %c0_172 = arith.constant 0 : index
    %c0_173 = arith.constant 0 : index
    %351 = vector.load %arg1[%c0_171, %c0_172, %c0_173] : memref<2x32x128xf32, #tpu.memory_space<vmem>>, vector<1x32x128xf32>
    %352 = vector.shape_cast %351 : vector<1x32x128xf32> to vector<32x128xf32>
    %cst_174 = arith.constant dense<0.000000e+00> : vector<2x128xf32>
    %353 = tpu.matmul %350, %352, %cst_174 {dimension_numbers = #tpu.dot_dimension_numbers<[1], [0], [0], [1], [0, 0, 1, 1], [], []>} : vector<2x32xf32>, vector<32x128xf32>, vector<2x128xf32> -> vector<2x128xf32>
    %c0_175 = arith.constant 0 : index
    %c0_176 = arith.constant 0 : index
    %c0_177 = arith.constant 0 : index
    %354 = vector.load %arg2[%c0_175, %c0_176, %c0_177] : memref<2x32x128xf32, #tpu.memory_space<vmem>>, vector<1x32x128xf32>
    %355 = vector.shape_cast %354 : vector<1x32x128xf32> to vector<32x128xf32>
    %cst_178 = arith.constant dense<0.000000e+00> : vector<2x128xf32>
    %356 = tpu.matmul %323, %355, %cst_178 {dimension_numbers = #tpu.dot_dimension_numbers<[1], [0], [0], [1], [0, 0, 1, 1], [], []>} : vector<2x32xf32>, vector<32x128xf32>, vector<2x128xf32> -> vector<2x128xf32>
    %357 = arith.addf %353, %356 : vector<2x128xf32>
    %358 = arith.addf %357, %3 : vector<2x128xf32>
    %359 = math.tanh %358 : vector<2x128xf32>
    %cst_179 = arith.constant 5.000000e-01 : f32
    %360 = vector.broadcast %cst_179 : f32 to vector<2x128xf32>
    %361 = arith.mulf %360, %358 : vector<2x128xf32>
    %362 = math.tanh %361 : vector<2x128xf32>
    %cst_180 = arith.constant 5.000000e-01 : f32
    %363 = vector.broadcast %cst_180 : f32 to vector<2x128xf32>
    %364 = arith.mulf %363, %362 : vector<2x128xf32>
    %cst_181 = arith.constant 5.000000e-01 : f32
    %365 = vector.broadcast %cst_181 : f32 to vector<2x128xf32>
    %366 = arith.addf %364, %365 : vector<2x128xf32>
    %367 = vector.extract_strided_slice %366 {offsets = [0, 0], sizes = [2, 32], strides = [1, 1]} : vector<2x128xf32> to vector<2x32xf32>
    %368 = vector.extract_strided_slice %366 {offsets = [0, 32], sizes = [2, 32], strides = [1, 1]} : vector<2x128xf32> to vector<2x32xf32>
    %369 = vector.extract_strided_slice %359 {offsets = [0, 64], sizes = [2, 32], strides = [1, 1]} : vector<2x128xf32> to vector<2x32xf32>
    %370 = vector.extract_strided_slice %366 {offsets = [0, 96], sizes = [2, 32], strides = [1, 1]} : vector<2x128xf32> to vector<2x32xf32>
    %371 = arith.mulf %368, %321 : vector<2x32xf32>
    %372 = arith.mulf %367, %369 : vector<2x32xf32>
    %373 = arith.addf %371, %372 : vector<2x32xf32>
    %374 = math.tanh %373 : vector<2x32xf32>
    %375 = arith.mulf %370, %374 : vector<2x32xf32>
    %c1_182 = arith.constant 1 : index
    %c0_183 = arith.constant 0 : index
    %c0_184 = arith.constant 0 : index
    %376 = vector.load %arg1[%c1_182, %c0_183, %c0_184] : memref<2x32x128xf32, #tpu.memory_space<vmem>>, vector<1x32x128xf32>
    %377 = vector.shape_cast %376 : vector<1x32x128xf32> to vector<32x128xf32>
    %cst_185 = arith.constant dense<0.000000e+00> : vector<2x128xf32>
    %378 = tpu.matmul %323, %377, %cst_185 {dimension_numbers = #tpu.dot_dimension_numbers<[1], [0], [0], [1], [0, 0, 1, 1], [], []>} : vector<2x32xf32>, vector<32x128xf32>, vector<2x128xf32> -> vector<2x128xf32>
    %c1_186 = arith.constant 1 : index
    %c0_187 = arith.constant 0 : index
    %c0_188 = arith.constant 0 : index
    %379 = vector.load %arg2[%c1_186, %c0_187, %c0_188] : memref<2x32x128xf32, #tpu.memory_space<vmem>>, vector<1x32x128xf32>
    %380 = vector.shape_cast %379 : vector<1x32x128xf32> to vector<32x128xf32>
    %cst_189 = arith.constant dense<0.000000e+00> : vector<2x128xf32>
    %381 = tpu.matmul %348, %380, %cst_189 {dimension_numbers = #tpu.dot_dimension_numbers<[1], [0], [0], [1], [0, 0, 1, 1], [], []>} : vector<2x32xf32>, vector<32x128xf32>, vector<2x128xf32> -> vector<2x128xf32>
    %382 = arith.addf %378, %381 : vector<2x128xf32>
    %383 = arith.addf %382, %7 : vector<2x128xf32>
    %384 = math.tanh %383 : vector<2x128xf32>
    %cst_190 = arith.constant 5.000000e-01 : f32
    %385 = vector.broadcast %cst_190 : f32 to vector<2x128xf32>
    %386 = arith.mulf %385, %383 : vector<2x128xf32>
    %387 = math.tanh %386 : vector<2x128xf32>
    %cst_191 = arith.constant 5.000000e-01 : f32
    %388 = vector.broadcast %cst_191 : f32 to vector<2x128xf32>
    %389 = arith.mulf %388, %387 : vector<2x128xf32>
    %cst_192 = arith.constant 5.000000e-01 : f32
    %390 = vector.broadcast %cst_192 : f32 to vector<2x128xf32>
    %391 = arith.addf %389, %390 : vector<2x128xf32>
    %392 = vector.extract_strided_slice %391 {offsets = [0, 0], sizes = [2, 32], strides = [1, 1]} : vector<2x128xf32> to vector<2x32xf32>
    %393 = vector.extract_strided_slice %391 {offsets = [0, 32], sizes = [2, 32], strides = [1, 1]} : vector<2x128xf32> to vector<2x32xf32>
    %394 = vector.extract_strided_slice %384 {offsets = [0, 64], sizes = [2, 32], strides = [1, 1]} : vector<2x128xf32> to vector<2x32xf32>
    %395 = vector.extract_strided_slice %391 {offsets = [0, 96], sizes = [2, 32], strides = [1, 1]} : vector<2x128xf32> to vector<2x32xf32>
    %396 = arith.mulf %393, %346 : vector<2x32xf32>
    %397 = arith.mulf %392, %394 : vector<2x32xf32>
    %398 = arith.addf %396, %397 : vector<2x32xf32>
    %399 = math.tanh %398 : vector<2x32xf32>
    %400 = arith.mulf %395, %399 : vector<2x32xf32>
    %c12_193 = arith.constant 12 : index
    %c0_194 = arith.constant 0 : index
    %401 = vector.load %arg7[%c12_193, %c0_194] : memref<16x32xf32, #tpu.memory_space<vmem>>, vector<2x32xf32>
    tpu.vector_store %arg7[%c12_193, %c0_194], %400 {strides = array<i32>} : memref<16x32xf32, #tpu.memory_space<vmem>>, vector<2x32xf32>,
    %c1_195 = arith.constant 1 : index
    %c0_196 = arith.constant 0 : index
    %c0_197 = arith.constant 0 : index
    %402 = vector.load %arg1[%c1_195, %c0_196, %c0_197] : memref<2x32x128xf32, #tpu.memory_space<vmem>>, vector<1x32x128xf32>
    %403 = vector.shape_cast %402 : vector<1x32x128xf32> to vector<32x128xf32>
    %cst_198 = arith.constant dense<0.000000e+00> : vector<2x128xf32>
    %404 = tpu.matmul %375, %403, %cst_198 {dimension_numbers = #tpu.dot_dimension_numbers<[1], [0], [0], [1], [0, 0, 1, 1], [], []>} : vector<2x32xf32>, vector<32x128xf32>, vector<2x128xf32> -> vector<2x128xf32>
    %c1_199 = arith.constant 1 : index
    %c0_200 = arith.constant 0 : index
    %c0_201 = arith.constant 0 : index
    %405 = vector.load %arg2[%c1_199, %c0_200, %c0_201] : memref<2x32x128xf32, #tpu.memory_space<vmem>>, vector<1x32x128xf32>
    %406 = vector.shape_cast %405 : vector<1x32x128xf32> to vector<32x128xf32>
    %cst_202 = arith.constant dense<0.000000e+00> : vector<2x128xf32>
    %407 = tpu.matmul %400, %406, %cst_202 {dimension_numbers = #tpu.dot_dimension_numbers<[1], [0], [0], [1], [0, 0, 1, 1], [], []>} : vector<2x32xf32>, vector<32x128xf32>, vector<2x128xf32> -> vector<2x128xf32>
    %408 = arith.addf %404, %407 : vector<2x128xf32>
    %409 = arith.addf %408, %7 : vector<2x128xf32>
    %410 = math.tanh %409 : vector<2x128xf32>
    %cst_203 = arith.constant 5.000000e-01 : f32
    %411 = vector.broadcast %cst_203 : f32 to vector<2x128xf32>
    %412 = arith.mulf %411, %409 : vector<2x128xf32>
    %413 = math.tanh %412 : vector<2x128xf32>
    %cst_204 = arith.constant 5.000000e-01 : f32
    %414 = vector.broadcast %cst_204 : f32 to vector<2x128xf32>
    %415 = arith.mulf %414, %413 : vector<2x128xf32>
    %cst_205 = arith.constant 5.000000e-01 : f32
    %416 = vector.broadcast %cst_205 : f32 to vector<2x128xf32>
    %417 = arith.addf %415, %416 : vector<2x128xf32>
    %418 = vector.extract_strided_slice %417 {offsets = [0, 0], sizes = [2, 32], strides = [1, 1]} : vector<2x128xf32> to vector<2x32xf32>
    %419 = vector.extract_strided_slice %417 {offsets = [0, 32], sizes = [2, 32], strides = [1, 1]} : vector<2x128xf32> to vector<2x32xf32>
    %420 = vector.extract_strided_slice %410 {offsets = [0, 64], sizes = [2, 32], strides = [1, 1]} : vector<2x128xf32> to vector<2x32xf32>
    %421 = vector.extract_strided_slice %417 {offsets = [0, 96], sizes = [2, 32], strides = [1, 1]} : vector<2x128xf32> to vector<2x32xf32>
    %422 = arith.mulf %419, %398 : vector<2x32xf32>
    %423 = arith.mulf %418, %420 : vector<2x32xf32>
    %424 = arith.addf %422, %423 : vector<2x32xf32>
    %425 = math.tanh %424 : vector<2x32xf32>
    %426 = arith.mulf %421, %425 : vector<2x32xf32>
    %c14_206 = arith.constant 14 : index
    %c0_207 = arith.constant 0 : index
    %427 = vector.load %arg7[%c14_206, %c0_207] : memref<16x32xf32, #tpu.memory_space<vmem>>, vector<2x32xf32>
    tpu.vector_store %arg7[%c14_206, %c0_207], %426 {strides = array<i32>} : memref<16x32xf32, #tpu.memory_space<vmem>>, vector<2x32xf32>,
    %c0_208 = arith.constant 0 : index
    %c0_209 = arith.constant 0 : index
    %428 = vector.load %arg7[%c0_208, %c0_209] : memref<16x32xf32, #tpu.memory_space<vmem>>, vector<16x32xf32>
    %c0_210 = arith.constant 0 : index
    %c0_211 = arith.constant 0 : index
    %429 = vector.load %arg4[%c0_210, %c0_211] : memref<32x128xf32, #tpu.memory_space<vmem>>, vector<32x128xf32>
    %cst_212 = arith.constant dense<0.000000e+00> : vector<16x128xf32>
    %430 = tpu.matmul %428, %429, %cst_212 {dimension_numbers = #tpu.dot_dimension_numbers<[1], [0], [0], [1], [0, 0, 1, 1], [], []>} : vector<16x32xf32>, vector<32x128xf32>, vector<16x128xf32> -> vector<16x128xf32>
    %c0_213 = arith.constant 0 : index
    %c0_214 = arith.constant 0 : index
    %431 = vector.load %arg5[%c0_213, %c0_214] : memref<1x128xf32, #tpu.memory_space<vmem>>, vector<1x128xf32>
    %432 = vector.broadcast %431 : vector<1x128xf32> to vector<16x128xf32>
    %433 = arith.addf %430, %432 : vector<16x128xf32>
    %c0_215 = arith.constant 0 : index
    %c0_216 = arith.constant 0 : index
    %434 = vector.load %arg6[%c0_215, %c0_216] : memref<16x128xf32, #tpu.memory_space<vmem>>, vector<16x128xf32>
    tpu.vector_store %arg6[%c0_215, %c0_216], %433 {strides = array<i32>} : memref<16x128xf32, #tpu.memory_space<vmem>>, vector<16x128xf32>,
    return
  }
}

</mosaic_0001>

<llo_original>
// kernel: tpu_custom_call.1
$region0: #{tpu_custom_call.1}
  #allocation0 [shape = 'u32[]', space=smem, size = 0x4, offset = 0x4, fixed_abs, tag = 'smem constant byte address 0x4 - core index']
  #allocation1 [shape = 'u32[144,128]{1,0:T(1,128)}', space=vmem, size = 0x12000, scoped, tag = 'internal scratch']
  #allocation2 [shape = 'f32[16,32]{1,0:T(8,128)}', space=vmem, size = 0x2000, scoped, tag = 'scratch operand']
  %s0 = inlined_call_operand.hbm [shape: f32[16,32], index: 0, kind: input, shape index: {}]
  %s1 = inlined_call_operand.hbm [shape: f32[2,32,128], index: 1, kind: input, shape index: {}]
  %s2 = inlined_call_operand.hbm [shape: f32[2,32,128], index: 2, kind: input, shape index: {}]
  %s3 = inlined_call_operand.vmem [shape: f32[2,1,128], index: 3, kind: input, shape index: {}]
  %s4 = inlined_call_operand.hbm [shape: f32[32,128], index: 4, kind: input, shape index: {}]
  %s5 = inlined_call_operand.vmem [shape: f32[1,128], index: 5, kind: input, shape index: {}]
  %s6 = inlined_call_operand.hbm [shape: f32[16,128], index: 6, kind: output, shape index: {}]
  %s7 = sld [smem:[#allocation0]]
  $region50: #{tpu_custom_call.1} parent=0
    _
  %s9 = ssub.s32 1, %s7
  %s10 = scalar_select 0, %s9, %s7
  $region1: #{tpu_custom_call.1} parent=0
    #allocation3 [shape = 'u8[8192]{0}', space=vmem, size = 0x2000, scoped, tag = 'input window, operand 0, single buffered']
    #allocation4 [shape = 's32[1]{0}', space=sflag, size = 0x4, scoped, tag = 'scoped memory for tpu_custom_call.1']
    #allocation5 [shape = 's32[1]{0}', space=sflag, size = 0x4, scoped, tag = 'scoped memory for tpu_custom_call.1']
    #allocation6 [shape = 'u8[32768]{0}', space=vmem, size = 0x8000, scoped, tag = 'input window, operand 1, single buffered']
    #allocation7 [shape = 's32[1]{0}', space=sflag, size = 0x4, scoped, tag = 'scoped memory for tpu_custom_call.1']
    #allocation8 [shape = 'u8[32768]{0}', space=vmem, size = 0x8000, scoped, tag = 'input window, operand 2, single buffered']
    #allocation9 [shape = 'u8[16384]{0}', space=vmem, size = 0x4000, scoped, tag = 'input window, operand 4, single buffered']
    #allocation10 [shape = 's32[1]{0}', space=sflag, size = 0x4, scoped, tag = 'scoped memory for tpu_custom_call.1']
    #allocation11 [shape = 'u8[8192]{0}', space=vmem, size = 0x2000, scoped, tag = 'output window, operand 0, single buffered']
    %11 = vsyncpa [#allocation4], 0
    %12 = vsyncpa [#allocation7], 0
    %13 = vsyncpa [#allocation10], 0
    %14 = vsyncpa [#allocation5], 0
    // Predicated region
    $region2: #{tpu_custom_call.1} parent=1 // pred_check
      _
    $region3: #{tpu_custom_call.1} parent=1 // pred_check_branch
      %16 = sbr.rel (0) target = $region5
    $region4: #{tpu_custom_call.1} parent=1 // pred_region
      %s18 = ssub.s32 256, 256
      %19 = vsyncadd [#allocation4], %s18
      %s20 = sshll.u32 [#allocation3], 4
      %s21 = int_to_ptr.vmem [resolvable:$true] %s20
      %26 = dma.hbm_to_vmem [thread:$0]  %s0, 256, %s21, [#allocation4], 128, 128, 8
    $region5: #{tpu_custom_call.1} parent=1 // pred_fallthru
      _
    // Predicated region
    $region6: #{tpu_custom_call.1} parent=1 // pred_check
      _
    $region7: #{tpu_custom_call.1} parent=1 // pred_check_branch
      %28 = sbr.rel (0) target = $region9
    $region8: #{tpu_custom_call.1} parent=1 // pred_region
      %s30 = ssub.s32 1024, 1024
      %31 = vsyncadd [#allocation7], %s30
      %s32 = sshll.u32 [#allocation6], 4
      %s33 = int_to_ptr.vmem [resolvable:$true] %s32
      %38 = dma.hbm_to_vmem [thread:$0]  %s1, 1024, %s33, [#allocation7], 128, 128, 8
    $region9: #{tpu_custom_call.1} parent=1 // pred_fallthru
      _
    // Predicated region
    $region10: #{tpu_custom_call.1} parent=1 // pred_check
      _
    $region11: #{tpu_custom_call.1} parent=1 // pred_check_branch
      %40 = sbr.rel (0) target = $region13
    $region12: #{tpu_custom_call.1} parent=1 // pred_region
      %s42 = ssub.s32 1024, 1024
      %43 = vsyncadd [#allocation7], %s42
      %s44 = sshll.u32 [#allocation8], 4
      %s45 = int_to_ptr.vmem [resolvable:$true] %s44
      %50 = dma.hbm_to_vmem [thread:$0]  %s2, 1024, %s45, [#allocation7], 128, 128, 8
    $region13: #{tpu_custom_call.1} parent=1 // pred_fallthru
      _
    // Predicated region
    $region14: #{tpu_custom_call.1} parent=1 // pred_check
      _
    $region15: #{tpu_custom_call.1} parent=1 // pred_check_branch
      %52 = sbr.rel (0) target = $region17
    $region16: #{tpu_custom_call.1} parent=1 // pred_region
      _
    $region17: #{tpu_custom_call.1} parent=1 // pred_fallthru
      _
    // Predicated region
    $region18: #{tpu_custom_call.1} parent=1 // pred_check
      _
    $region19: #{tpu_custom_call.1} parent=1 // pred_check_branch
      %54 = sbr.rel (0) target = $region21
    $region20: #{tpu_custom_call.1} parent=1 // pred_region
      %s56 = ssub.s32 512, 512
      %57 = vsyncadd [#allocation10], %s56
      %s58 = sshll.u32 [#allocation9], 4
      %s59 = int_to_ptr.vmem [resolvable:$true] %s58
      %64 = dma.hbm_to_vmem [thread:$0]  %s4, 512, %s59, [#allocation10], 128, 128, 8
    $region21: #{tpu_custom_call.1} parent=1 // pred_fallthru
      _
    // Predicated region
    $region22: #{tpu_custom_call.1} parent=1 // pred_check
      _
    $region23: #{tpu_custom_call.1} parent=1 // pred_check_branch
      %66 = sbr.rel (0) target = $region25
    $region24: #{tpu_custom_call.1} parent=1 // pred_region
      _
    $region25: #{tpu_custom_call.1} parent=1 // pred_fallthru
      _
    // Predicated region
    $region26: #{tpu_custom_call.1} parent=1 // pred_check
      _
    $region27: #{tpu_custom_call.1} parent=1 // pred_check_branch
      %68 = sbr.rel (0) target = $region29
    $region28: #{tpu_custom_call.1} parent=1 // pred_region
      %69 = dma.done [#allocation4], 256
    $region29: #{tpu_custom_call.1} parent=1 // pred_fallthru
      _
    // Predicated region
    $region30: #{tpu_custom_call.1} parent=1 // pred_check
      _
    $region31: #{tpu_custom_call.1} parent=1 // pred_check_branch
      %71 = sbr.rel (0) target = $region33
    $region32: #{tpu_custom_call.1} parent=1 // pred_region
      %72 = dma.done [#allocation7], 1024
    $region33: #{tpu_custom_call.1} parent=1 // pred_fallthru
      _
    // Predicated region
    $region34: #{tpu_custom_call.1} parent=1 // pred_check
      _
    $region35: #{tpu_custom_call.1} parent=1 // pred_check_branch
      %74 = sbr.rel (0) target = $region37
    $region36: #{tpu_custom_call.1} parent=1 // pred_region
      %75 = dma.done [#allocation7], 1024
    $region37: #{tpu_custom_call.1} parent=1 // pred_fallthru
      _
    // Predicated region
    $region38: #{tpu_custom_call.1} parent=1 // pred_check
      _
    $region39: #{tpu_custom_call.1} parent=1 // pred_check_branch
      %77 = sbr.rel (0) target = $region41
    $region40: #{tpu_custom_call.1} parent=1 // pred_region
      %78 = dma.done [#allocation10], 512
    $region41: #{tpu_custom_call.1} parent=1 // pred_fallthru
      _
    %v79 = vld [vmem:[%s3] sm:$0x1]
    %v81 = vlaneseq
    %v82 = vshrl.u32 %v81, 7
    %v83 = vsub.s32 0, %v82
    %v84 = vrot.slane %v79, %v83
    %s86 = scalar_lea.vmem %s3, 1
    %v87 = vld [vmem:[%s86] sm:$0x1]
    %v89 = vlaneseq
    %v90 = vshrl.u32 %v89, 7
    %v91 = vsub.s32 0, %v90
    %v92 = vrot.slane %v87, %v91
    %v94 = vld [vmem:[#allocation3] sm:$0x3]
    %v95 = vld [vmem:[#allocation6] sm:$0xff]
    %v96 = vld [vmem:[#allocation6 + $0x8] sm:$0xff]
    %v97 = vld [vmem:[#allocation6 + $0x10] sm:$0xff]
    %v98 = vld [vmem:[#allocation6 + $0x18] sm:$0xff]
    %v99 = vld [vmem:[#allocation8] sm:$0xff]
    %v100 = vld [vmem:[#allocation8 + $0x8] sm:$0xff]
    %v101 = vld [vmem:[#allocation8 + $0x10] sm:$0xff]
    %v102 = vld [vmem:[#allocation8 + $0x18] sm:$0xff]
    %vm103 = vcmask 261120
    %v105 = vsel %vm103, 0.0, 0
    %107 = vmatprep.subr.mxu0 0.0
    %108 = vmatpush1.msra.mxu0 %v99
    %109 = vmatprep.subr.mxu0 0.0
    %110 = vmatpush1.msra.mxu0 %v100
    %111 = vmatprep.subr.mxu0 0.0
    %112 = vmatpush1.msra.mxu0 %v101
    %113 = vmatprep.subr.mxu0 0.0
    %114 = vmatpush1.msra.mxu0 %v102
    %115 = vmatprep.subr.mxu0 0.0
    %116 = vmatpush1.msra.mxu0 0.0
    %117 = vmatprep.subr.mxu0 0.0
    %118 = vmatpush1.msra.mxu0 0.0
    %119 = vmatprep.subr.mxu0 0.0
    %120 = vmatpush1.msra.mxu0 0.0
    %121 = vmatprep.subr.mxu0 0.0
    %122 = vmatpush1.msra.mxu0 0.0
    %123 = vmatprep.subr.mxu0 0.0
    %124 = vmatpush1.msra.mxu0 0.0
    %125 = vmatprep.subr.mxu0 0.0
    %126 = vmatpush1.msra.mxu0 0.0
    %127 = vmatprep.subr.mxu0 0.0
    %128 = vmatpush1.msra.mxu0 0.0
    %129 = vmatprep.subr.mxu0 0.0
    %130 = vmatpush1.msra.mxu0 0.0
    %131 = vmatprep.subr.mxu0 0.0
    %132 = vmatpush1.msra.mxu0 0.0
    %133 = vmatprep.subr.mxu0 0.0
    %134 = vmatpush1.msra.mxu0 0.0
    %135 = vmatprep.subr.mxu0 0.0
    %136 = vmatpush1.msra.mxu0 0.0
    %137 = vmatprep.subr.mxu0 0.0
    %138 = vmatpush1.msra.mxu0 0.0
    %139 = vmatprep.subr.mxu0 0.0
    %140 = vmatpush1.msra.mxu0 0.0
    %141 = vmatprep.subr.mxu0 0.0
    %142 = vmatpush1.msra.mxu0 0.0
    %143 = vmatprep.subr.mxu0 0.0
    %144 = vmatpush1.msra.mxu0 0.0
    %145 = vmatprep.subr.mxu0 0.0
    %146 = vmatpush1.msra.mxu0 0.0
    %147 = vmatprep.subr.mxu0 0.0
    %148 = vmatpush1.msra.mxu0 0.0
    %149 = vmatprep.subr.mxu0 0.0
    %150 = vmatpush1.msra.mxu0 0.0
    %151 = vmatprep.subr.mxu0 0.0
    %152 = vmatpush1.msra.mxu0 0.0
    %153 = vmatprep.subr.mxu0 0.0
    %154 = vmatpush1.msra.mxu0 0.0
    %155 = vmatprep.subr.mxu0 0.0
    %156 = vmatpush1.msra.mxu0 0.0
    %157 = vmatprep.subr.mxu0 0.0
    %158 = vmatpush1.msra.mxu0 0.0
    %159 = vmatprep.subr.mxu0 0.0
    %160 = vmatpush1.msra.mxu0 0.0
    %161 = vmatprep.subr.mxu0 0.0
    %162 = vmatpush1.msra.mxu0 0.0
    %163 = vmatprep.subr.mxu0 0.0
    %164 = vmatpush1.msra.mxu0 0.0
    %165 = vmatprep.subr.mxu0 0.0
    %166 = vmatpush1.msra.mxu0 0.0
    %167 = vmatprep.subr.mxu0 0.0
    %168 = vmatpush1.msra.mxu0 0.0
    %169 = vmatprep.subr.mxu0 0.0
    %170 = vmatpush1.msra.mxu0 0.0
    %171 = vmatprep.mubr.f32.mxu0 0.0
    %172 = vmatmul.mubr.f32.gmra.mrb[0].mxu0 %v105
    %v173 = vpop.f32.mrb[0].mxu0
    %v174 = vadd.f32 0.0, %v173
    %v175 = vpop.f32.mrb[0].mxu0
    %176 = vdwg.mxu0
    %v178 = vsel %vm103, %v94, 0
    %180 = vmatprep.subr.mxu0 0.0
    %181 = vmatpush1.msra.mxu0 %v95
    %182 = vmatprep.subr.mxu0 0.0
    %183 = vmatpush1.msra.mxu0 %v96
    %184 = vmatprep.subr.mxu0 0.0
    %185 = vmatpush1.msra.mxu0 %v97
    %186 = vmatprep.subr.mxu0 0.0
    %187 = vmatpush1.msra.mxu0 %v98
    %188 = vmatprep.subr.mxu0 0.0
    %189 = vmatpush1.msra.mxu0 0.0
    %190 = vmatprep.subr.mxu0 0.0
    %191 = vmatpush1.msra.mxu0 0.0
    %192 = vmatprep.subr.mxu0 0.0
    %193 = vmatpush1.msra.mxu0 0.0
    %194 = vmatprep.subr.mxu0 0.0
    %195 = vmatpush1.msra.mxu0 0.0
    %196 = vmatprep.subr.mxu0 0.0
    %197 = vmatpush1.msra.mxu0 0.0
    %198 = vmatprep.subr.mxu0 0.0
    %199 = vmatpush1.msra.mxu0 0.0
    %200 = vmatprep.subr.mxu0 0.0
    %201 = vmatpush1.msra.mxu0 0.0
    %202 = vmatprep.subr.mxu0 0.0
    %203 = vmatpush1.msra.mxu0 0.0
    %204 = vmatprep.subr.mxu0 0.0
    %205 = vmatpush1.msra.mxu0 0.0
    %206 = vmatprep.subr.mxu0 0.0
    %207 = vmatpush1.msra.mxu0 0.0
    %208 = vmatprep.subr.mxu0 0.0
    %209 = vmatpush1.msra.mxu0 0.0
    %210 = vmatprep.subr.mxu0 0.0
    %211 = vmatpush1.msra.mxu0 0.0
    %212 = vmatprep.subr.mxu0 0.0
    %213 = vmatpush1.msra.mxu0 0.0
    %214 = vmatprep.subr.mxu0 0.0
    %215 = vmatpush1.msra.mxu0 0.0
    %216 = vmatprep.subr.mxu0 0.0
    %217 = vmatpush1.msra.mxu0 0.0
    %218 = vmatprep.subr.mxu0 0.0
    %219 = vmatpush1.msra.mxu0 0.0
    %220 = vmatprep.subr.mxu0 0.0
    %221 = vmatpush1.msra.mxu0 0.0
    %222 = vmatprep.subr.mxu0 0.0
    %223 = vmatpush1.msra.mxu0 0.0
    %224 = vmatprep.subr.mxu0 0.0
    %225 = vmatpush1.msra.mxu0 0.0
    %226 = vmatprep.subr.mxu0 0.0
    %227 = vmatpush1.msra.mxu0 0.0
    %228 = vmatprep.subr.mxu0 0.0
    %229 = vmatpush1.msra.mxu0 0.0
    %230 = vmatprep.subr.mxu0 0.0
    %231 = vmatpush1.msra.mxu0 0.0
    %232 = vmatprep.subr.mxu0 0.0
    %233 = vmatpush1.msra.mxu0 0.0
    %234 = vmatprep.subr.mxu0 0.0
    %235 = vmatpush1.msra.mxu0 0.0
    %236 = vmatprep.subr.mxu0 0.0
    %237 = vmatpush1.msra.mxu0 0.0
    %238 = vmatprep.subr.mxu0 0.0
    %239 = vmatpush1.msra.mxu0 0.0
    %240 = vmatprep.subr.mxu0 0.0
    %241 = vmatpush1.msra.mxu0 0.0
    %242 = vmatprep.subr.mxu0 0.0
    %243 = vmatpush1.msra.mxu0 0.0
    %244 = vmatprep.mubr.f32.mxu0 0.0
    %245 = vmatmul.mubr.f32.gmra.mrb[0].mxu0 %v178
    %v246 = vpop.f32.mrb[0].mxu0
    %v247 = vadd.f32 %v174, %v246
    %v248 = vpop.f32.mrb[0].mxu0
    %249 = vdwg.mxu0
    %v250 = vadd.f32 %v247, %v84
    %v251 = vtanh.pop %v250
    %v252 = vmul.f32 %v250, 0.5
    %v253 = vtanh.pop %v252
    %v254 = vmul.f32 %v253, 0.5
    %v255 = vadd.f32 %v254, 0.5
    %v256 = vmul.f32 %v255, 0.0
    %258 = vrot.lane.b32.xlu0 %v251, 64
    %v259 = vpop.permute.xlu0 %258
    %v261 = vmul.f32 %v255, %v259
    %263 = vrot.lane.b32.xlu0 %v261, 32
    %v264 = vpop.permute.xlu0 %263
    %v266 = vadd.f32 %v256, %v264
    %v267 = vtanh.pop %v266
    %269 = vrot.lane.b32.xlu0 %v267, 64
    %v270 = vpop.permute.xlu0 %269
    %v272 = vmul.f32 %v255, %v270
    %v273 = vld [vmem:[#allocation3 + $0x2] sm:$0x3]
    %275 = vrot.lane.b32.xlu0 %v272, 32
    %v276 = vpop.permute.xlu0 %275
    %v277 = vsel %vm103, %v276, 0
    %279 = vmatprep.subr.mxu0 0.0
    %280 = vmatpush1.msra.mxu0 %v99
    %281 = vmatprep.subr.mxu0 0.0
    %282 = vmatpush1.msra.mxu0 %v100
    %283 = vmatprep.subr.mxu0 0.0
    %284 = vmatpush1.msra.mxu0 %v101
    %285 = vmatprep.subr.mxu0 0.0
    %286 = vmatpush1.msra.mxu0 %v102
    %287 = vmatprep.subr.mxu0 0.0
    %288 = vmatpush1.msra.mxu0 0.0
    %289 = vmatprep.subr.mxu0 0.0
    %290 = vmatpush1.msra.mxu0 0.0
    %291 = vmatprep.subr.mxu0 0.0
    %292 = vmatpush1.msra.mxu0 0.0
    %293 = vmatprep.subr.mxu0 0.0
    %294 = vmatpush1.msra.mxu0 0.0
    %295 = vmatprep.subr.mxu0 0.0
    %296 = vmatpush1.msra.mxu0 0.0
    %297 = vmatprep.subr.mxu0 0.0
    %298 = vmatpush1.msra.mxu0 0.0
    %299 = vmatprep.subr.mxu0 0.0
    %300 = vmatpush1.msra.mxu0 0.0
    %301 = vmatprep.subr.mxu0 0.0
    %302 = vmatpush1.msra.mxu0 0.0
    %303 = vmatprep.subr.mxu0 0.0
    %304 = vmatpush1.msra.mxu0 0.0
    %305 = vmatprep.subr.mxu0 0.0
    %306 = vmatpush1.msra.mxu0 0.0
    %307 = vmatprep.subr.mxu0 0.0
    %308 = vmatpush1.msra.mxu0 0.0
    %309 = vmatprep.subr.mxu0 0.0
    %310 = vmatpush1.msra.mxu0 0.0
    %311 = vmatprep.subr.mxu0 0.0
    %312 = vmatpush1.msra.mxu0 0.0
    %313 = vmatprep.subr.mxu0 0.0
    %314 = vmatpush1.msra.mxu0 0.0
    %315 = vmatprep.subr.mxu0 0.0
    %316 = vmatpush1.msra.mxu0 0.0
    %317 = vmatprep.subr.mxu0 0.0
    %318 = vmatpush1.msra.mxu0 0.0
    %319 = vmatprep.subr.mxu0 0.0
    %320 = vmatpush1.msra.mxu0 0.0
    %321 = vmatprep.subr.mxu0 0.0
    %322 = vmatpush1.msra.mxu0 0.0
    %323 = vmatprep.subr.mxu0 0.0
    %324 = vmatpush1.msra.mxu0 0.0
    %325 = vmatprep.subr.mxu0 0.0
    %326 = vmatpush1.msra.mxu0 0.0
    %327 = vmatprep.subr.mxu0 0.0
    %328 = vmatpush1.msra.mxu0 0.0
    %329 = vmatprep.subr.mxu0 0.0
    %330 = vmatpush1.msra.mxu0 0.0
    %331 = vmatprep.subr.mxu0 0.0
    %332 = vmatpush1.msra.mxu0 0.0
    %333 = vmatprep.subr.mxu0 0.0
    %334 = vmatpush1.msra.mxu0 0.0
    %335 = vmatprep.subr.mxu0 0.0
    %336 = vmatpush1.msra.mxu0 0.0
    %337 = vmatprep.subr.mxu0 0.0
    %338 = vmatpush1.msra.mxu0 0.0
    %339 = vmatprep.subr.mxu0 0.0
    %340 = vmatpush1.msra.mxu0 0.0
    %341 = vmatprep.subr.mxu0 0.0
    %342 = vmatpush1.msra.mxu0 0.0
    %343 = vmatprep.mubr.f32.mxu0 0.0
    %344 = vmatmul.mubr.f32.gmra.mrb[0].mxu0 %v277
    %v345 = vpop.f32.mrb[0].mxu0
    %v346 = vadd.f32 0.0, %v345
    %v347 = vpop.f32.mrb[0].mxu0
    %348 = vdwg.mxu0
    %v350 = vsel %vm103, %v273, 0
    %352 = vmatprep.subr.mxu0 0.0
    %353 = vmatpush1.msra.mxu0 %v95
    %354 = vmatprep.subr.mxu0 0.0
    %355 = vmatpush1.msra.mxu0 %v96
    %356 = vmatprep.subr.mxu0 0.0
    %357 = vmatpush1.msra.mxu0 %v97
    %358 = vmatprep.subr.mxu0 0.0
    %359 = vmatpush1.msra.mxu0 %v98
    %360 = vmatprep.subr.mxu0 0.0
    %361 = vmatpush1.msra.mxu0 0.0
    %362 = vmatprep.subr.mxu0 0.0
    %363 = vmatpush1.msra.mxu0 0.0
    %364 = vmatprep.subr.mxu0 0.0
    %365 = vmatpush1.msra.mxu0 0.0
    %366 = vmatprep.subr.mxu0 0.0
    %367 = vmatpush1.msra.mxu0 0.0
    %368 = vmatprep.subr.mxu0 0.0
    %369 = vmatpush1.msra.mxu0 0.0
    %370 = vmatprep.subr.mxu0 0.0
    %371 = vmatpush1.msra.mxu0 0.0
    %372 = vmatprep.subr.mxu0 0.0
    %373 = vmatpush1.msra.mxu0 0.0
    %374 = vmatprep.subr.mxu0 0.0
    %375 = vmatpush1.msra.mxu0 0.0
    %376 = vmatprep.subr.mxu0 0.0
    %377 = vmatpush1.msra.mxu0 0.0
    %378 = vmatprep.subr.mxu0 0.0
    %379 = vmatpush1.msra.mxu0 0.0
    %380 = vmatprep.subr.mxu0 0.0
    %381 = vmatpush1.msra.mxu0 0.0
    %382 = vmatprep.subr.mxu0 0.0
    %383 = vmatpush1.msra.mxu0 0.0
    %384 = vmatprep.subr.mxu0 0.0
    %385 = vmatpush1.msra.mxu0 0.0
    %386 = vmatprep.subr.mxu0 0.0
    %387 = vmatpush1.msra.mxu0 0.0
    %388 = vmatprep.subr.mxu0 0.0
    %389 = vmatpush1.msra.mxu0 0.0
    %390 = vmatprep.subr.mxu0 0.0
    %391 = vmatpush1.msra.mxu0 0.0
    %392 = vmatprep.subr.mxu0 0.0
    %393 = vmatpush1.msra.mxu0 0.0
    %394 = vmatprep.subr.mxu0 0.0
    %395 = vmatpush1.msra.mxu0 0.0
    %396 = vmatprep.subr.mxu0 0.0
    %397 = vmatpush1.msra.mxu0 0.0
    %398 = vmatprep.subr.mxu0 0.0
    %399 = vmatpush1.msra.mxu0 0.0
    %400 = vmatprep.subr.mxu0 0.0
    %401 = vmatpush1.msra.mxu0 0.0
    %402 = vmatprep.subr.mxu0 0.0
    %403 = vmatpush1.msra.mxu0 0.0
    %404 = vmatprep.subr.mxu0 0.0
    %405 = vmatpush1.msra.mxu0 0.0
    %406 = vmatprep.subr.mxu0 0.0
    %407 = vmatpush1.msra.mxu0 0.0
    %408 = vmatprep.subr.mxu0 0.0
    %409 = vmatpush1.msra.mxu0 0.0
    %410 = vmatprep.subr.mxu0 0.0
    %411 = vmatpush1.msra.mxu0 0.0
    %412 = vmatprep.subr.mxu0 0.0
    %413 = vmatpush1.msra.mxu0 0.0
    %414 = vmatprep.subr.mxu0 0.0
    %415 = vmatpush1.msra.mxu0 0.0
    %416 = vmatprep.mubr.f32.mxu0 0.0
    %417 = vmatmul.mubr.f32.gmra.mrb[0].mxu0 %v350
    %v418 = vpop.f32.mrb[0].mxu0
    %v419 = vadd.f32 %v346, %v418
    %v420 = vpop.f32.mrb[0].mxu0
    %421 = vdwg.mxu0
    %v422 = vadd.f32 %v419, %v84
    %v423 = vtanh.pop %v422
    %v424 = vmul.f32 %v422, 0.5
    %v425 = vtanh.pop %v424
    %v426 = vmul.f32 %v425, 0.5
    %v427 = vadd.f32 %v426, 0.5
    %v428 = vmul.f32 %v427, %v266
    %430 = vrot.lane.b32.xlu0 %v423, 64
    %v431 = vpop.permute.xlu0 %430
    %v433 = vmul.f32 %v427, %v431
    %435 = vrot.lane.b32.xlu0 %v433, 32
    %v436 = vpop.permute.xlu0 %435
    %v438 = vadd.f32 %v428, %v436
    %v439 = vtanh.pop %v438
    %441 = vrot.lane.b32.xlu0 %v439, 64
    %v442 = vpop.permute.xlu0 %441
    %v444 = vmul.f32 %v427, %v442
    %s445 = scalar_lea.vmem [#allocation6], 32
    %v446 = vld [vmem:[%s445] sm:$0xff]
    %v447 = vld [vmem:[%s445 + $0x8] sm:$0xff]
    %v448 = vld [vmem:[%s445 + $0x10] sm:$0xff]
    %v449 = vld [vmem:[%s445 + $0x18] sm:$0xff]
    %s450 = scalar_lea.vmem [#allocation8], 32
    %v451 = vld [vmem:[%s450] sm:$0xff]
    %v452 = vld [vmem:[%s450 + $0x8] sm:$0xff]
    %v453 = vld [vmem:[%s450 + $0x10] sm:$0xff]
    %v454 = vld [vmem:[%s450 + $0x18] sm:$0xff]
    %455 = vmatprep.subr.mxu0 0.0
    %456 = vmatpush1.msra.mxu0 %v451
    %457 = vmatprep.subr.mxu0 0.0
    %458 = vmatpush1.msra.mxu0 %v452
    %459 = vmatprep.subr.mxu0 0.0
    %460 = vmatpush1.msra.mxu0 %v453
    %461 = vmatprep.subr.mxu0 0.0
    %462 = vmatpush1.msra.mxu0 %v454
    %463 = vmatprep.subr.mxu0 0.0
    %464 = vmatpush1.msra.mxu0 0.0
    %465 = vmatprep.subr.mxu0 0.0
    %466 = vmatpush1.msra.mxu0 0.0
    %467 = vmatprep.subr.mxu0 0.0
    %468 = vmatpush1.msra.mxu0 0.0
    %469 = vmatprep.subr.mxu0 0.0
    %470 = vmatpush1.msra.mxu0 0.0
    %471 = vmatprep.subr.mxu0 0.0
    %472 = vmatpush1.msra.mxu0 0.0
    %473 = vmatprep.subr.mxu0 0.0
    %474 = vmatpush1.msra.mxu0 0.0
    %475 = vmatprep.subr.mxu0 0.0
    %476 = vmatpush1.msra.mxu0 0.0
    %477 = vmatprep.subr.mxu0 0.0
    %478 = vmatpush1.msra.mxu0 0.0
    %479 = vmatprep.subr.mxu0 0.0
    %480 = vmatpush1.msra.mxu0 0.0
    %481 = vmatprep.subr.mxu0 0.0
    %482 = vmatpush1.msra.mxu0 0.0
    %483 = vmatprep.subr.mxu0 0.0
    %484 = vmatpush1.msra.mxu0 0.0
    %485 = vmatprep.subr.mxu0 0.0
    %486 = vmatpush1.msra.mxu0 0.0
    %487 = vmatprep.subr.mxu0 0.0
    %488 = vmatpush1.msra.mxu0 0.0
    %489 = vmatprep.subr.mxu0 0.0
    %490 = vmatpush1.msra.mxu0 0.0
    %491 = vmatprep.subr.mxu0 0.0
    %492 = vmatpush1.msra.mxu0 0.0
    %493 = vmatprep.subr.mxu0 0.0
    %494 = vmatpush1.msra.mxu0 0.0
    %495 = vmatprep.subr.mxu0 0.0
    %496 = vmatpush1.msra.mxu0 0.0
    %497 = vmatprep.subr.mxu0 0.0
    %498 = vmatpush1.msra.mxu0 0.0
    %499 = vmatprep.subr.mxu0 0.0
    %500 = vmatpush1.msra.mxu0 0.0
    %501 = vmatprep.subr.mxu0 0.0
    %502 = vmatpush1.msra.mxu0 0.0
    %503 = vmatprep.subr.mxu0 0.0
    %504 = vmatpush1.msra.mxu0 0.0
    %505 = vmatprep.subr.mxu0 0.0
    %506 = vmatpush1.msra.mxu0 0.0
    %507 = vmatprep.subr.mxu0 0.0
    %508 = vmatpush1.msra.mxu0 0.0
    %509 = vmatprep.subr.mxu0 0.0
    %510 = vmatpush1.msra.mxu0 0.0
    %511 = vmatprep.subr.mxu0 0.0
    %512 = vmatpush1.msra.mxu0 0.0
    %513 = vmatprep.subr.mxu0 0.0
    %514 = vmatpush1.msra.mxu0 0.0
    %515 = vmatprep.subr.mxu0 0.0
    %516 = vmatpush1.msra.mxu0 0.0
    %517 = vmatprep.subr.mxu0 0.0
    %518 = vmatpush1.msra.mxu0 0.0
    %519 = vmatprep.mubr.f32.mxu0 0.0
    %520 = vmatmul.mubr.f32.gmra.mrb[0].mxu0 %v105
    %v521 = vpop.f32.mrb[0].mxu0
    %v522 = vadd.f32 0.0, %v521
    %v523 = vpop.f32.mrb[0].mxu0
    %524 = vdwg.mxu0
    %525 = vmatprep.subr.mxu0 0.0
    %526 = vmatpush1.msra.mxu0 %v446
    %527 = vmatprep.subr.mxu0 0.0
    %528 = vmatpush1.msra.mxu0 %v447
    %529 = vmatprep.subr.mxu0 0.0
    %530 = vmatpush1.msra.mxu0 %v448
    %531 = vmatprep.subr.mxu0 0.0
    %532 = vmatpush1.msra.mxu0 %v449
    %533 = vmatprep.subr.mxu0 0.0
    %534 = vmatpush1.msra.mxu0 0.0
    %535 = vmatprep.subr.mxu0 0.0
    %536 = vmatpush1.msra.mxu0 0.0
    %537 = vmatprep.subr.mxu0 0.0
    %538 = vmatpush1.msra.mxu0 0.0
    %539 = vmatprep.subr.mxu0 0.0
    %540 = vmatpush1.msra.mxu0 0.0
    %541 = vmatprep.subr.mxu0 0.0
    %542 = vmatpush1.msra.mxu0 0.0
    %543 = vmatprep.subr.mxu0 0.0
    %544 = vmatpush1.msra.mxu0 0.0
    %545 = vmatprep.subr.mxu0 0.0
    %546 = vmatpush1.msra.mxu0 0.0
    %547 = vmatprep.subr.mxu0 0.0
    %548 = vmatpush1.msra.mxu0 0.0
    %549 = vmatprep.subr.mxu0 0.0
    %550 = vmatpush1.msra.mxu0 0.0
    %551 = vmatprep.subr.mxu0 0.0
    %552 = vmatpush1.msra.mxu0 0.0
    %553 = vmatprep.subr.mxu0 0.0
    %554 = vmatpush1.msra.mxu0 0.0
    %555 = vmatprep.subr.mxu0 0.0
    %556 = vmatpush1.msra.mxu0 0.0
    %557 = vmatprep.subr.mxu0 0.0
    %558 = vmatpush1.msra.mxu0 0.0
    %559 = vmatprep.subr.mxu0 0.0
    %560 = vmatpush1.msra.mxu0 0.0
    %561 = vmatprep.subr.mxu0 0.0
    %562 = vmatpush1.msra.mxu0 0.0
    %563 = vmatprep.subr.mxu0 0.0
    %564 = vmatpush1.msra.mxu0 0.0
    %565 = vmatprep.subr.mxu0 0.0
    %566 = vmatpush1.msra.mxu0 0.0
    %567 = vmatprep.subr.mxu0 0.0
    %568 = vmatpush1.msra.mxu0 0.0
    %569 = vmatprep.subr.mxu0 0.0
    %570 = vmatpush1.msra.mxu0 0.0
    %571 = vmatprep.subr.mxu0 0.0
    %572 = vmatpush1.msra.mxu0 0.0
    %573 = vmatprep.subr.mxu0 0.0
    %574 = vmatpush1.msra.mxu0 0.0
    %575 = vmatprep.subr.mxu0 0.0
    %576 = vmatpush1.msra.mxu0 0.0
    %577 = vmatprep.subr.mxu0 0.0
    %578 = vmatpush1.msra.mxu0 0.0
    %579 = vmatprep.subr.mxu0 0.0
    %580 = vmatpush1.msra.mxu0 0.0
    %581 = vmatprep.subr.mxu0 0.0
    %582 = vmatpush1.msra.mxu0 0.0
    %583 = vmatprep.subr.mxu0 0.0
    %584 = vmatpush1.msra.mxu0 0.0
    %585 = vmatprep.subr.mxu0 0.0
    %586 = vmatpush1.msra.mxu0 0.0
    %587 = vmatprep.subr.mxu0 0.0
    %588 = vmatpush1.msra.mxu0 0.0
    %589 = vmatprep.mubr.f32.mxu0 0.0
    %590 = vmatmul.mubr.f32.gmra.mrb[0].mxu0 %v277
    %v591 = vpop.f32.mrb[0].mxu0
    %v592 = vadd.f32 %v522, %v591
    %v593 = vpop.f32.mrb[0].mxu0
    %594 = vdwg.mxu0
    %v595 = vadd.f32 %v592, %v92
    %v596 = vtanh.pop %v595
    %v597 = vmul.f32 %v595, 0.5
    %v598 = vtanh.pop %v597
    %v599 = vmul.f32 %v598, 0.5
    %v600 = vadd.f32 %v599, 0.5
    %v601 = vmul.f32 %v600, 0.0
    %603 = vrot.lane.b32.xlu0 %v596, 64
    %v604 = vpop.permute.xlu0 %603
    %v606 = vmul.f32 %v600, %v604
    %608 = vrot.lane.b32.xlu0 %v606, 32
    %v609 = vpop.permute.xlu0 %608
    %v611 = vadd.f32 %v601, %v609
    %v612 = vtanh.pop %v611
    %614 = vrot.lane.b32.xlu0 %v612, 64
    %v615 = vpop.permute.xlu0 %614
    %v617 = vmul.f32 %v600, %v615
    %619 = vrot.lane.b32.xlu0 %v617, 32
    %v620 = vpop.permute.xlu0 %619
    %vm622 = vcmask 254976
    %623 = vst.msk [vmem:[#allocation2] sm:$0x3] %vm622, %v620
    %v624 = vld [vmem:[#allocation3 + $0x4] sm:$0x3]
    %v625 = vld [vmem:[#allocation6] sm:$0xff]
    %v626 = vld [vmem:[#allocation6 + $0x8] sm:$0xff]
    %v627 = vld [vmem:[#allocation6 + $0x10] sm:$0xff]
    %v628 = vld [vmem:[#allocation6 + $0x18] sm:$0xff]
    %v629 = vld [vmem:[#allocation8] sm:$0xff]
    %v630 = vld [vmem:[#allocation8 + $0x8] sm:$0xff]
    %v631 = vld [vmem:[#allocation8 + $0x10] sm:$0xff]
    %v632 = vld [vmem:[#allocation8 + $0x18] sm:$0xff]
    %634 = vrot.lane.b32.xlu0 %v444, 32
    %v635 = vpop.permute.xlu0 %634
    %v636 = vsel %vm103, %v635, 0
    %638 = vmatprep.subr.mxu0 0.0
    %639 = vmatpush1.msra.mxu0 %v629
    %640 = vmatprep.subr.mxu0 0.0
    %641 = vmatpush1.msra.mxu0 %v630
    %642 = vmatprep.subr.mxu0 0.0
    %643 = vmatpush1.msra.mxu0 %v631
    %644 = vmatprep.subr.mxu0 0.0
    %645 = vmatpush1.msra.mxu0 %v632
    %646 = vmatprep.subr.mxu0 0.0
    %647 = vmatpush1.msra.mxu0 0.0
    %648 = vmatprep.subr.mxu0 0.0
    %649 = vmatpush1.msra.mxu0 0.0
    %650 = vmatprep.subr.mxu0 0.0
    %651 = vmatpush1.msra.mxu0 0.0
    %652 = vmatprep.subr.mxu0 0.0
    %653 = vmatpush1.msra.mxu0 0.0
    %654 = vmatprep.subr.mxu0 0.0
    %655 = vmatpush1.msra.mxu0 0.0
    %656 = vmatprep.subr.mxu0 0.0
    %657 = vmatpush1.msra.mxu0 0.0
    %658 = vmatprep.subr.mxu0 0.0
    %659 = vmatpush1.msra.mxu0 0.0
    %660 = vmatprep.subr.mxu0 0.0
    %661 = vmatpush1.msra.mxu0 0.0
    %662 = vmatprep.subr.mxu0 0.0
    %663 = vmatpush1.msra.mxu0 0.0
    %664 = vmatprep.subr.mxu0 0.0
    %665 = vmatpush1.msra.mxu0 0.0
    %666 = vmatprep.subr.mxu0 0.0
    %667 = vmatpush1.msra.mxu0 0.0
    %668 = vmatprep.subr.mxu0 0.0
    %669 = vmatpush1.msra.mxu0 0.0
    %670 = vmatprep.subr.mxu0 0.0
    %671 = vmatpush1.msra.mxu0 0.0
    %672 = vmatprep.subr.mxu0 0.0
    %673 = vmatpush1.msra.mxu0 0.0
    %674 = vmatprep.subr.mxu0 0.0
    %675 = vmatpush1.msra.mxu0 0.0
    %676 = vmatprep.subr.mxu0 0.0
    %677 = vmatpush1.msra.mxu0 0.0
    %678 = vmatprep.subr.mxu0 0.0
    %679 = vmatpush1.msra.mxu0 0.0
    %680 = vmatprep.subr.mxu0 0.0
    %681 = vmatpush1.msra.mxu0 0.0
    %682 = vmatprep.subr.mxu0 0.0
    %683 = vmatpush1.msra.mxu0 0.0
    %684 = vmatprep.subr.mxu0 0.0
    %685 = vmatpush1.msra.mxu0 0.0
    %686 = vmatprep.subr.mxu0 0.0
    %687 = vmatpush1.msra.mxu0 0.0
    %688 = vmatprep.subr.mxu0 0.0
    %689 = vmatpush1.msra.mxu0 0.0
    %690 = vmatprep.subr.mxu0 0.0
    %691 = vmatpush1.msra.mxu0 0.0
    %692 = vmatprep.subr.mxu0 0.0
    %693 = vmatpush1.msra.mxu0 0.0
    %694 = vmatprep.subr.mxu0 0.0
    %695 = vmatpush1.msra.mxu0 0.0
    %696 = vmatprep.subr.mxu0 0.0
    %697 = vmatpush1.msra.mxu0 0.0
    %698 = vmatprep.subr.mxu0 0.0
    %699 = vmatpush1.msra.mxu0 0.0
    %700 = vmatprep.subr.mxu0 0.0
    %701 = vmatpush1.msra.mxu0 0.0
    %702 = vmatprep.mubr.f32.mxu0 0.0
    %703 = vmatmul.mubr.f32.gmra.mrb[0].mxu0 %v636
    %v704 = vpop.f32.mrb[0].mxu0
    %v705 = vadd.f32 0.0, %v704
    %v706 = vpop.f32.mrb[0].mxu0
    %707 = vdwg.mxu0
    %v709 = vsel %vm103, %v624, 0
    %711 = vmatprep.subr.mxu0 0.0
    %712 = vmatpush1.msra.mxu0 %v625
    %713 = vmatprep.subr.mxu0 0.0
    %714 = vmatpush1.msra.mxu0 %v626
    %715 = vmatprep.subr.mxu0 0.0
    %716 = vmatpush1.msra.mxu0 %v627
    %717 = vmatprep.subr.mxu0 0.0
    %718 = vmatpush1.msra.mxu0 %v628
    %719 = vmatprep.subr.mxu0 0.0
    %720 = vmatpush1.msra.mxu0 0.0
    %721 = vmatprep.subr.mxu0 0.0
    %722 = vmatpush1.msra.mxu0 0.0
    %723 = vmatprep.subr.mxu0 0.0
    %724 = vmatpush1.msra.mxu0 0.0
    %725 = vmatprep.subr.mxu0 0.0
    %726 = vmatpush1.msra.mxu0 0.0
    %727 = vmatprep.subr.mxu0 0.0
    %728 = vmatpush1.msra.mxu0 0.0
    %729 = vmatprep.subr.mxu0 0.0
    %730 = vmatpush1.msra.mxu0 0.0
    %731 = vmatprep.subr.mxu0 0.0
    %732 = vmatpush1.msra.mxu0 0.0
    %733 = vmatprep.subr.mxu0 0.0
    %734 = vmatpush1.msra.mxu0 0.0
    %735 = vmatprep.subr.mxu0 0.0
    %736 = vmatpush1.msra.mxu0 0.0
    %737 = vmatprep.subr.mxu0 0.0
    %738 = vmatpush1.msra.mxu0 0.0
    %739 = vmatprep.subr.mxu0 0.0
    %740 = vmatpush1.msra.mxu0 0.0
    %741 = vmatprep.subr.mxu0 0.0
    %742 = vmatpush1.msra.mxu0 0.0
    %743 = vmatprep.subr.mxu0 0.0
    %744 = vmatpush1.msra.mxu0 0.0
    %745 = vmatprep.subr.mxu0 0.0
    %746 = vmatpush1.msra.mxu0 0.0
    %747 = vmatprep.subr.mxu0 0.0
    %748 = vmatpush1.msra.mxu0 0.0
    %749 = vmatprep.subr.mxu0 0.0
    %750 = vmatpush1.msra.mxu0 0.0
    %751 = vmatprep.subr.mxu0 0.0
    %752 = vmatpush1.msra.mxu0 0.0
    %753 = vmatprep.subr.mxu0 0.0
    %754 = vmatpush1.msra.mxu0 0.0
    %755 = vmatprep.subr.mxu0 0.0
    %756 = vmatpush1.msra.mxu0 0.0
    %757 = vmatprep.subr.mxu0 0.0
    %758 = vmatpush1.msra.mxu0 0.0
    %759 = vmatprep.subr.mxu0 0.0
    %760 = vmatpush1.msra.mxu0 0.0
    %761 = vmatprep.subr.mxu0 0.0
    %762 = vmatpush1.msra.mxu0 0.0
    %763 = vmatprep.subr.mxu0 0.0
    %764 = vmatpush1.msra.mxu0 0.0
    %765 = vmatprep.subr.mxu0 0.0
    %766 = vmatpush1.msra.mxu0 0.0
    %767 = vmatprep.subr.mxu0 0.0
    %768 = vmatpush1.msra.mxu0 0.0
    %769 = vmatprep.subr.mxu0 0.0
    %770 = vmatpush1.msra.mxu0 0.0
    %771 = vmatprep.subr.mxu0 0.0
    %772 = vmatpush1.msra.mxu0 0.0
    %773 = vmatprep.subr.mxu0 0.0
    %774 = vmatpush1.msra.mxu0 0.0
    %775 = vmatprep.mubr.f32.mxu0 0.0
    %776 = vmatmul.mubr.f32.gmra.mrb[0].mxu0 %v709
    %v777 = vpop.f32.mrb[0].mxu0
    %v778 = vadd.f32 %v705, %v777
    %v779 = vpop.f32.mrb[0].mxu0
    %780 = vdwg.mxu0
    %v781 = vadd.f32 %v778, %v84
    %v782 = vtanh.pop %v781
    %v783 = vmul.f32 %v781, 0.5
    %v784 = vtanh.pop %v783
    %v785 = vmul.f32 %v784, 0.5
    %v786 = vadd.f32 %v785, 0.5
    %v787 = vmul.f32 %v786, %v438
    %789 = vrot.lane.b32.xlu0 %v782, 64
    %v790 = vpop.permute.xlu0 %789
    %v792 = vmul.f32 %v786, %v790
    %794 = vrot.lane.b32.xlu0 %v792, 32
    %v795 = vpop.permute.xlu0 %794
    %v797 = vadd.f32 %v787, %v795
    %v798 = vtanh.pop %v797
    %800 = vrot.lane.b32.xlu0 %v798, 64
    %v801 = vpop.permute.xlu0 %800
    %v803 = vmul.f32 %v786, %v801
    %v804 = vld [vmem:[%s445] sm:$0xff]
    %v805 = vld [vmem:[%s445 + $0x8] sm:$0xff]
    %v806 = vld [vmem:[%s445 + $0x10] sm:$0xff]
    %v807 = vld [vmem:[%s445 + $0x18] sm:$0xff]
    %v808 = vld [vmem:[%s450] sm:$0xff]
    %v809 = vld [vmem:[%s450 + $0x8] sm:$0xff]
    %v810 = vld [vmem:[%s450 + $0x10] sm:$0xff]
    %v811 = vld [vmem:[%s450 + $0x18] sm:$0xff]
    %v812 = vsel %vm103, %v620, 0
    %814 = vmatprep.subr.mxu0 0.0
    %815 = vmatpush1.msra.mxu0 %v808
    %816 = vmatprep.subr.mxu0 0.0
    %817 = vmatpush1.msra.mxu0 %v809
    %818 = vmatprep.subr.mxu0 0.0
    %819 = vmatpush1.msra.mxu0 %v810
    %820 = vmatprep.subr.mxu0 0.0
    %821 = vmatpush1.msra.mxu0 %v811
    %822 = vmatprep.subr.mxu0 0.0
    %823 = vmatpush1.msra.mxu0 0.0
    %824 = vmatprep.subr.mxu0 0.0
    %825 = vmatpush1.msra.mxu0 0.0
    %826 = vmatprep.subr.mxu0 0.0
    %827 = vmatpush1.msra.mxu0 0.0
    %828 = vmatprep.subr.mxu0 0.0
    %829 = vmatpush1.msra.mxu0 0.0
    %830 = vmatprep.subr.mxu0 0.0
    %831 = vmatpush1.msra.mxu0 0.0
    %832 = vmatprep.subr.mxu0 0.0
    %833 = vmatpush1.msra.mxu0 0.0
    %834 = vmatprep.subr.mxu0 0.0
    %835 = vmatpush1.msra.mxu0 0.0
    %836 = vmatprep.subr.mxu0 0.0
    %837 = vmatpush1.msra.mxu0 0.0
    %838 = vmatprep.subr.mxu0 0.0
    %839 = vmatpush1.msra.mxu0 0.0
    %840 = vmatprep.subr.mxu0 0.0
    %841 = vmatpush1.msra.mxu0 0.0
    %842 = vmatprep.subr.mxu0 0.0
    %843 = vmatpush1.msra.mxu0 0.0
    %844 = vmatprep.subr.mxu0 0.0
    %845 = vmatpush1.msra.mxu0 0.0
    %846 = vmatprep.subr.mxu0 0.0
    %847 = vmatpush1.msra.mxu0 0.0
    %848 = vmatprep.subr.mxu0 0.0
    %849 = vmatpush1.msra.mxu0 0.0
    %850 = vmatprep.subr.mxu0 0.0
    %851 = vmatpush1.msra.mxu0 0.0
    %852 = vmatprep.subr.mxu0 0.0
    %853 = vmatpush1.msra.mxu0 0.0
    %854 = vmatprep.subr.mxu0 0.0
    %855 = vmatpush1.msra.mxu0 0.0
    %856 = vmatprep.subr.mxu0 0.0
    %857 = vmatpush1.msra.mxu0 0.0
    %858 = vmatprep.subr.mxu0 0.0
    %859 = vmatpush1.msra.mxu0 0.0
    %860 = vmatprep.subr.mxu0 0.0
    %861 = vmatpush1.msra.mxu0 0.0
    %862 = vmatprep.subr.mxu0 0.0
    %863 = vmatpush1.msra.mxu0 0.0
    %864 = vmatprep.subr.mxu0 0.0
    %865 = vmatpush1.msra.mxu0 0.0
    %866 = vmatprep.subr.mxu0 0.0
    %867 = vmatpush1.msra.mxu0 0.0
    %868 = vmatprep.subr.mxu0 0.0
    %869 = vmatpush1.msra.mxu0 0.0
    %870 = vmatprep.subr.mxu0 0.0
    %871 = vmatpush1.msra.mxu0 0.0
    %872 = vmatprep.subr.mxu0 0.0
    %873 = vmatpush1.msra.mxu0 0.0
    %874 = vmatprep.subr.mxu0 0.0
    %875 = vmatpush1.msra.mxu0 0.0
    %876 = vmatprep.subr.mxu0 0.0
    %877 = vmatpush1.msra.mxu0 0.0
    %878 = vmatprep.mubr.f32.mxu0 0.0
    %879 = vmatmul.mubr.f32.gmra.mrb[0].mxu0 %v812
    %v880 = vpop.f32.mrb[0].mxu0
    %v881 = vadd.f32 0.0, %v880
    %v882 = vpop.f32.mrb[0].mxu0
    %883 = vdwg.mxu0
    %884 = vmatprep.subr.mxu0 0.0
    %885 = vmatpush1.msra.mxu0 %v804
    %886 = vmatprep.subr.mxu0 0.0
    %887 = vmatpush1.msra.mxu0 %v805
    %888 = vmatprep.subr.mxu0 0.0
    %889 = vmatpush1.msra.mxu0 %v806
    %890 = vmatprep.subr.mxu0 0.0
    %891 = vmatpush1.msra.mxu0 %v807
    %892 = vmatprep.subr.mxu0 0.0
    %893 = vmatpush1.msra.mxu0 0.0
    %894 = vmatprep.subr.mxu0 0.0
    %895 = vmatpush1.msra.mxu0 0.0
    %896 = vmatprep.subr.mxu0 0.0
    %897 = vmatpush1.msra.mxu0 0.0
    %898 = vmatprep.subr.mxu0 0.0
    %899 = vmatpush1.msra.mxu0 0.0
    %900 = vmatprep.subr.mxu0 0.0
    %901 = vmatpush1.msra.mxu0 0.0
    %902 = vmatprep.subr.mxu0 0.0
    %903 = vmatpush1.msra.mxu0 0.0
    %904 = vmatprep.subr.mxu0 0.0
    %905 = vmatpush1.msra.mxu0 0.0
    %906 = vmatprep.subr.mxu0 0.0
    %907 = vmatpush1.msra.mxu0 0.0
    %908 = vmatprep.subr.mxu0 0.0
    %909 = vmatpush1.msra.mxu0 0.0
    %910 = vmatprep.subr.mxu0 0.0
    %911 = vmatpush1.msra.mxu0 0.0
    %912 = vmatprep.subr.mxu0 0.0
    %913 = vmatpush1.msra.mxu0 0.0
    %914 = vmatprep.subr.mxu0 0.0
    %915 = vmatpush1.msra.mxu0 0.0
    %916 = vmatprep.subr.mxu0 0.0
    %917 = vmatpush1.msra.mxu0 0.0
    %918 = vmatprep.subr.mxu0 0.0
    %919 = vmatpush1.msra.mxu0 0.0
    %920 = vmatprep.subr.mxu0 0.0
    %921 = vmatpush1.msra.mxu0 0.0
    %922 = vmatprep.subr.mxu0 0.0
    %923 = vmatpush1.msra.mxu0 0.0
    %924 = vmatprep.subr.mxu0 0.0
    %925 = vmatpush1.msra.mxu0 0.0
    %926 = vmatprep.subr.mxu0 0.0
    %927 = vmatpush1.msra.mxu0 0.0
    %928 = vmatprep.subr.mxu0 0.0
    %929 = vmatpush1.msra.mxu0 0.0
    %930 = vmatprep.subr.mxu0 0.0
    %931 = vmatpush1.msra.mxu0 0.0
    %932 = vmatprep.subr.mxu0 0.0
    %933 = vmatpush1.msra.mxu0 0.0
    %934 = vmatprep.subr.mxu0 0.0
    %935 = vmatpush1.msra.mxu0 0.0
    %936 = vmatprep.subr.mxu0 0.0
    %937 = vmatpush1.msra.mxu0 0.0
    %938 = vmatprep.subr.mxu0 0.0
    %939 = vmatpush1.msra.mxu0 0.0
    %940 = vmatprep.subr.mxu0 0.0
    %941 = vmatpush1.msra.mxu0 0.0
    %942 = vmatprep.subr.mxu0 0.0
    %943 = vmatpush1.msra.mxu0 0.0
    %944 = vmatprep.subr.mxu0 0.0
    %945 = vmatpush1.msra.mxu0 0.0
    %946 = vmatprep.subr.mxu0 0.0
    %947 = vmatpush1.msra.mxu0 0.0
    %948 = vmatprep.mubr.f32.mxu0 0.0
    %949 = vmatmul.mubr.f32.gmra.mrb[0].mxu0 %v636
    %v950 = vpop.f32.mrb[0].mxu0
    %v951 = vadd.f32 %v881, %v950
    %v952 = vpop.f32.mrb[0].mxu0
    %953 = vdwg.mxu0
    %v954 = vadd.f32 %v951, %v92
    %v955 = vtanh.pop %v954
    %v956 = vmul.f32 %v954, 0.5
    %v957 = vtanh.pop %v956
    %v958 = vmul.f32 %v957, 0.5
    %v959 = vadd.f32 %v958, 0.5
    %v960 = vmul.f32 %v959, %v611
    %962 = vrot.lane.b32.xlu0 %v955, 64
    %v963 = vpop.permute.xlu0 %962
    %v965 = vmul.f32 %v959, %v963
    %967 = vrot.lane.b32.xlu0 %v965, 32
    %v968 = vpop.permute.xlu0 %967
    %v970 = vadd.f32 %v960, %v968
    %v971 = vtanh.pop %v970
    %973 = vrot.lane.b32.xlu0 %v971, 64
    %v974 = vpop.permute.xlu0 %973
    %v976 = vmul.f32 %v959, %v974
    %978 = vrot.lane.b32.xlu0 %v976, 32
    %v979 = vpop.permute.xlu0 %978
    %981 = vst.msk [vmem:[#allocation2 + $0x2] sm:$0x3] %vm622, %v979
    %v982 = vld [vmem:[#allocation3 + $0x6] sm:$0x3]
    %v983 = vld [vmem:[#allocation6] sm:$0xff]
    %v984 = vld [vmem:[#allocation6 + $0x8] sm:$0xff]
    %v985 = vld [vmem:[#allocation6 + $0x10] sm:$0xff]
    %v986 = vld [vmem:[#allocation6 + $0x18] sm:$0xff]
    %v987 = vld [vmem:[#allocation8] sm:$0xff]
    %v988 = vld [vmem:[#allocation8 + $0x8] sm:$0xff]
    %v989 = vld [vmem:[#allocation8 + $0x10] sm:$0xff]
    %v990 = vld [vmem:[#allocation8 + $0x18] sm:$0xff]
    %992 = vrot.lane.b32.xlu0 %v803, 32
    %v993 = vpop.permute.xlu0 %992
    %v994 = vsel %vm103, %v993, 0
    %996 = vmatprep.subr.mxu0 0.0
    %997 = vmatpush1.msra.mxu0 %v987
    %998 = vmatprep.subr.mxu0 0.0
    %999 = vmatpush1.msra.mxu0 %v988
    %1000 = vmatprep.subr.mxu0 0.0
    %1001 = vmatpush1.msra.mxu0 %v989
    %1002 = vmatprep.subr.mxu0 0.0
    %1003 = vmatpush1.msra.mxu0 %v990
    %1004 = vmatprep.subr.mxu0 0.0
    %1005 = vmatpush1.msra.mxu0 0.0
    %1006 = vmatprep.subr.mxu0 0.0
    %1007 = vmatpush1.msra.mxu0 0.0
    %1008 = vmatprep.subr.mxu0 0.0
    %1009 = vmatpush1.msra.mxu0 0.0
    %1010 = vmatprep.subr.mxu0 0.0
    %1011 = vmatpush1.msra.mxu0 0.0
    %1012 = vmatprep.subr.mxu0 0.0
    %1013 = vmatpush1.msra.mxu0 0.0
    %1014 = vmatprep.subr.mxu0 0.0
    %1015 = vmatpush1.msra.mxu0 0.0
    %1016 = vmatprep.subr.mxu0 0.0
    %1017 = vmatpush1.msra.mxu0 0.0
    %1018 = vmatprep.subr.mxu0 0.0
    %1019 = vmatpush1.msra.mxu0 0.0
    %1020 = vmatprep.subr.mxu0 0.0
    %1021 = vmatpush1.msra.mxu0 0.0
    %1022 = vmatprep.subr.mxu0 0.0
    %1023 = vmatpush1.msra.mxu0 0.0
    %1024 = vmatprep.subr.mxu0 0.0
    %1025 = vmatpush1.msra.mxu0 0.0
    %1026 = vmatprep.subr.mxu0 0.0
    %1027 = vmatpush1.msra.mxu0 0.0
    %1028 = vmatprep.subr.mxu0 0.0
    %1029 = vmatpush1.msra.mxu0 0.0
    %1030 = vmatprep.subr.mxu0 0.0
    %1031 = vmatpush1.msra.mxu0 0.0
    %1032 = vmatprep.subr.mxu0 0.0
    %1033 = vmatpush1.msra.mxu0 0.0
    %1034 = vmatprep.subr.mxu0 0.0
    %1035 = vmatpush1.msra.mxu0 0.0
    %1036 = vmatprep.subr.mxu0 0.0
    %1037 = vmatpush1.msra.mxu0 0.0
    %1038 = vmatprep.subr.mxu0 0.0
    %1039 = vmatpush1.msra.mxu0 0.0
    %1040 = vmatprep.subr.mxu0 0.0
    %1041 = vmatpush1.msra.mxu0 0.0
    %1042 = vmatprep.subr.mxu0 0.0
    %1043 = vmatpush1.msra.mxu0 0.0
    %1044 = vmatprep.subr.mxu0 0.0
    %1045 = vmatpush1.msra.mxu0 0.0
    %1046 = vmatprep.subr.mxu0 0.0
    %1047 = vmatpush1.msra.mxu0 0.0
    %1048 = vmatprep.subr.mxu0 0.0
    %1049 = vmatpush1.msra.mxu0 0.0
    %1050 = vmatprep.subr.mxu0 0.0
    %1051 = vmatpush1.msra.mxu0 0.0
    %1052 = vmatprep.subr.mxu0 0.0
    %1053 = vmatpush1.msra.mxu0 0.0
    %1054 = vmatprep.subr.mxu0 0.0
    %1055 = vmatpush1.msra.mxu0 0.0
    %1056 = vmatprep.subr.mxu0 0.0
    %1057 = vmatpush1.msra.mxu0 0.0
    %1058 = vmatprep.subr.mxu0 0.0
    %1059 = vmatpush1.msra.mxu0 0.0
    %1060 = vmatprep.mubr.f32.mxu0 0.0
    %1061 = vmatmul.mubr.f32.gmra.mrb[0].mxu0 %v994
    %v1062 = vpop.f32.mrb[0].mxu0
    %v1063 = vadd.f32 0.0, %v1062
    %v1064 = vpop.f32.mrb[0].mxu0
    %1065 = vdwg.mxu0
    %v1067 = vsel %vm103, %v982, 0
    %1069 = vmatprep.subr.mxu0 0.0
    %1070 = vmatpush1.msra.mxu0 %v983
    %1071 = vmatprep.subr.mxu0 0.0
    %1072 = vmatpush1.msra.mxu0 %v984
    %1073 = vmatprep.subr.mxu0 0.0
    %1074 = vmatpush1.msra.mxu0 %v985
    %1075 = vmatprep.subr.mxu0 0.0
    %1076 = vmatpush1.msra.mxu0 %v986
    %1077 = vmatprep.subr.mxu0 0.0
    %1078 = vmatpush1.msra.mxu0 0.0
    %1079 = vmatprep.subr.mxu0 0.0
    %1080 = vmatpush1.msra.mxu0 0.0
    %1081 = vmatprep.subr.mxu0 0.0
    %1082 = vmatpush1.msra.mxu0 0.0
    %1083 = vmatprep.subr.mxu0 0.0
    %1084 = vmatpush1.msra.mxu0 0.0
    %1085 = vmatprep.subr.mxu0 0.0
    %1086 = vmatpush1.msra.mxu0 0.0
    %1087 = vmatprep.subr.mxu0 0.0
    %1088 = vmatpush1.msra.mxu0 0.0
    %1089 = vmatprep.subr.mxu0 0.0
    %1090 = vmatpush1.msra.mxu0 0.0
    %1091 = vmatprep.subr.mxu0 0.0
    %1092 = vmatpush1.msra.mxu0 0.0
    %1093 = vmatprep.subr.mxu0 0.0
    %1094 = vmatpush1.msra.mxu0 0.0
    %1095 = vmatprep.subr.mxu0 0.0
    %1096 = vmatpush1.msra.mxu0 0.0
    %1097 = vmatprep.subr.mxu0 0.0
    %1098 = vmatpush1.msra.mxu0 0.0
    %1099 = vmatprep.subr.mxu0 0.0
    %1100 = vmatpush1.msra.mxu0 0.0
    %1101 = vmatprep.subr.mxu0 0.0
    %1102 = vmatpush1.msra.mxu0 0.0
    %1103 = vmatprep.subr.mxu0 0.0
    %1104 = vmatpush1.msra.mxu0 0.0
    %1105 = vmatprep.subr.mxu0 0.0
    %1106 = vmatpush1.msra.mxu0 0.0
    %1107 = vmatprep.subr.mxu0 0.0
    %1108 = vmatpush1.msra.mxu0 0.0
    %1109 = vmatprep.subr.mxu0 0.0
    %1110 = vmatpush1.msra.mxu0 0.0
    %1111 = vmatprep.subr.mxu0 0.0
    %1112 = vmatpush1.msra.mxu0 0.0
    %1113 = vmatprep.subr.mxu0 0.0
    %1114 = vmatpush1.msra.mxu0 0.0
    %1115 = vmatprep.subr.mxu0 0.0
    %1116 = vmatpush1.msra.mxu0 0.0
    %1117 = vmatprep.subr.mxu0 0.0
    %1118 = vmatpush1.msra.mxu0 0.0
    %1119 = vmatprep.subr.mxu0 0.0
    %1120 = vmatpush1.msra.mxu0 0.0
    %1121 = vmatprep.subr.mxu0 0.0
    %1122 = vmatpush1.msra.mxu0 0.0
    %1123 = vmatprep.subr.mxu0 0.0
    %1124 = vmatpush1.msra.mxu0 0.0
    %1125 = vmatprep.subr.mxu0 0.0
    %1126 = vmatpush1.msra.mxu0 0.0
    %1127 = vmatprep.subr.mxu0 0.0
    %1128 = vmatpush1.msra.mxu0 0.0
    %1129 = vmatprep.subr.mxu0 0.0
    %1130 = vmatpush1.msra.mxu0 0.0
    %1131 = vmatprep.subr.mxu0 0.0
    %1132 = vmatpush1.msra.mxu0 0.0
    %1133 = vmatprep.mubr.f32.mxu0 0.0
    %1134 = vmatmul.mubr.f32.gmra.mrb[0].mxu0 %v1067
    %v1135 = vpop.f32.mrb[0].mxu0
    %v1136 = vadd.f32 %v1063, %v1135
    %v1137 = vpop.f32.mrb[0].mxu0
    %1138 = vdwg.mxu0
    %v1139 = vadd.f32 %v1136, %v84
    %v1140 = vtanh.pop %v1139
    %v1141 = vmul.f32 %v1139, 0.5
    %v1142 = vtanh.pop %v1141
    %v1143 = vmul.f32 %v1142, 0.5
    %v1144 = vadd.f32 %v1143, 0.5
    %v1145 = vmul.f32 %v1144, %v797
    %1147 = vrot.lane.b32.xlu0 %v1140, 64
    %v1148 = vpop.permute.xlu0 %1147
    %v1150 = vmul.f32 %v1144, %v1148
    %1152 = vrot.lane.b32.xlu0 %v1150, 32
    %v1153 = vpop.permute.xlu0 %1152
    %v1155 = vadd.f32 %v1145, %v1153
    %v1156 = vtanh.pop %v1155
    %1158 = vrot.lane.b32.xlu0 %v1156, 64
    %v1159 = vpop.permute.xlu0 %1158
    %v1161 = vmul.f32 %v1144, %v1159
    %v1162 = vld [vmem:[%s445] sm:$0xff]
    %v1163 = vld [vmem:[%s445 + $0x8] sm:$0xff]
    %v1164 = vld [vmem:[%s445 + $0x10] sm:$0xff]
    %v1165 = vld [vmem:[%s445 + $0x18] sm:$0xff]
    %v1166 = vld [vmem:[%s450] sm:$0xff]
    %v1167 = vld [vmem:[%s450 + $0x8] sm:$0xff]
    %v1168 = vld [vmem:[%s450 + $0x10] sm:$0xff]
    %v1169 = vld [vmem:[%s450 + $0x18] sm:$0xff]
    %v1170 = vsel %vm103, %v979, 0
    %1172 = vmatprep.subr.mxu0 0.0
    %1173 = vmatpush1.msra.mxu0 %v1166
    %1174 = vmatprep.subr.mxu0 0.0
    %1175 = vmatpush1.msra.mxu0 %v1167
    %1176 = vmatprep.subr.mxu0 0.0
    %1177 = vmatpush1.msra.mxu0 %v1168
    %1178 = vmatprep.subr.mxu0 0.0
    %1179 = vmatpush1.msra.mxu0 %v1169
    %1180 = vmatprep.subr.mxu0 0.0
    %1181 = vmatpush1.msra.mxu0 0.0
    %1182 = vmatprep.subr.mxu0 0.0
    %1183 = vmatpush1.msra.mxu0 0.0
    %1184 = vmatprep.subr.mxu0 0.0
    %1185 = vmatpush1.msra.mxu0 0.0
    %1186 = vmatprep.subr.mxu0 0.0
    %1187 = vmatpush1.msra.mxu0 0.0
    %1188 = vmatprep.subr.mxu0 0.0
    %1189 = vmatpush1.msra.mxu0 0.0
    %1190 = vmatprep.subr.mxu0 0.0
    %1191 = vmatpush1.msra.mxu0 0.0
    %1192 = vmatprep.subr.mxu0 0.0
    %1193 = vmatpush1.msra.mxu0 0.0
    %1194 = vmatprep.subr.mxu0 0.0
    %1195 = vmatpush1.msra.mxu0 0.0
    %1196 = vmatprep.subr.mxu0 0.0
    %1197 = vmatpush1.msra.mxu0 0.0
    %1198 = vmatprep.subr.mxu0 0.0
    %1199 = vmatpush1.msra.mxu0 0.0
    %1200 = vmatprep.subr.mxu0 0.0
    %1201 = vmatpush1.msra.mxu0 0.0
    %1202 = vmatprep.subr.mxu0 0.0
    %1203 = vmatpush1.msra.mxu0 0.0
    %1204 = vmatprep.subr.mxu0 0.0
    %1205 = vmatpush1.msra.mxu0 0.0
    %1206 = vmatprep.subr.mxu0 0.0
    %1207 = vmatpush1.msra.mxu0 0.0
    %1208 = vmatprep.subr.mxu0 0.0
    %1209 = vmatpush1.msra.mxu0 0.0
    %1210 = vmatprep.subr.mxu0 0.0
    %1211 = vmatpush1.msra.mxu0 0.0
    %1212 = vmatprep.subr.mxu0 0.0
    %1213 = vmatpush1.msra.mxu0 0.0
    %1214 = vmatprep.subr.mxu0 0.0
    %1215 = vmatpush1.msra.mxu0 0.0
    %1216 = vmatprep.subr.mxu0 0.0
    %1217 = vmatpush1.msra.mxu0 0.0
    %1218 = vmatprep.subr.mxu0 0.0
    %1219 = vmatpush1.msra.mxu0 0.0
    %1220 = vmatprep.subr.mxu0 0.0
    %1221 = vmatpush1.msra.mxu0 0.0
    %1222 = vmatprep.subr.mxu0 0.0
    %1223 = vmatpush1.msra.mxu0 0.0
    %1224 = vmatprep.subr.mxu0 0.0
    %1225 = vmatpush1.msra.mxu0 0.0
    %1226 = vmatprep.subr.mxu0 0.0
    %1227 = vmatpush1.msra.mxu0 0.0
    %1228 = vmatprep.subr.mxu0 0.0
    %1229 = vmatpush1.msra.mxu0 0.0
    %1230 = vmatprep.subr.mxu0 0.0
    %1231 = vmatpush1.msra.mxu0 0.0
    %1232 = vmatprep.subr.mxu0 0.0
    %1233 = vmatpush1.msra.mxu0 0.0
    %1234 = vmatprep.subr.mxu0 0.0
    %1235 = vmatpush1.msra.mxu0 0.0
    %1236 = vmatprep.mubr.f32.mxu0 0.0
    %1237 = vmatmul.mubr.f32.gmra.mrb[0].mxu0 %v1170
    %v1238 = vpop.f32.mrb[0].mxu0
    %v1239 = vadd.f32 0.0, %v1238
    %v1240 = vpop.f32.mrb[0].mxu0
    %1241 = vdwg.mxu0
    %1242 = vmatprep.subr.mxu0 0.0
    %1243 = vmatpush1.msra.mxu0 %v1162
    %1244 = vmatprep.subr.mxu0 0.0
    %1245 = vmatpush1.msra.mxu0 %v1163
    %1246 = vmatprep.subr.mxu0 0.0
    %1247 = vmatpush1.msra.mxu0 %v1164
    %1248 = vmatprep.subr.mxu0 0.0
    %1249 = vmatpush1.msra.mxu0 %v1165
    %1250 = vmatprep.subr.mxu0 0.0
    %1251 = vmatpush1.msra.mxu0 0.0
    %1252 = vmatprep.subr.mxu0 0.0
    %1253 = vmatpush1.msra.mxu0 0.0
    %1254 = vmatprep.subr.mxu0 0.0
    %1255 = vmatpush1.msra.mxu0 0.0
    %1256 = vmatprep.subr.mxu0 0.0
    %1257 = vmatpush1.msra.mxu0 0.0
    %1258 = vmatprep.subr.mxu0 0.0
    %1259 = vmatpush1.msra.mxu0 0.0
    %1260 = vmatprep.subr.mxu0 0.0
    %1261 = vmatpush1.msra.mxu0 0.0
    %1262 = vmatprep.subr.mxu0 0.0
    %1263 = vmatpush1.msra.mxu0 0.0
    %1264 = vmatprep.subr.mxu0 0.0
    %1265 = vmatpush1.msra.mxu0 0.0
    %1266 = vmatprep.subr.mxu0 0.0
    %1267 = vmatpush1.msra.mxu0 0.0
    %1268 = vmatprep.subr.mxu0 0.0
    %1269 = vmatpush1.msra.mxu0 0.0
    %1270 = vmatprep.subr.mxu0 0.0
    %1271 = vmatpush1.msra.mxu0 0.0
    %1272 = vmatprep.subr.mxu0 0.0
    %1273 = vmatpush1.msra.mxu0 0.0
    %1274 = vmatprep.subr.mxu0 0.0
    %1275 = vmatpush1.msra.mxu0 0.0
    %1276 = vmatprep.subr.mxu0 0.0
    %1277 = vmatpush1.msra.mxu0 0.0
    %1278 = vmatprep.subr.mxu0 0.0
    %1279 = vmatpush1.msra.mxu0 0.0
    %1280 = vmatprep.subr.mxu0 0.0
    %1281 = vmatpush1.msra.mxu0 0.0
    %1282 = vmatprep.subr.mxu0 0.0
    %1283 = vmatpush1.msra.mxu0 0.0
    %1284 = vmatprep.subr.mxu0 0.0
    %1285 = vmatpush1.msra.mxu0 0.0
    %1286 = vmatprep.subr.mxu0 0.0
    %1287 = vmatpush1.msra.mxu0 0.0
    %1288 = vmatprep.subr.mxu0 0.0
    %1289 = vmatpush1.msra.mxu0 0.0
    %1290 = vmatprep.subr.mxu0 0.0
    %1291 = vmatpush1.msra.mxu0 0.0
    %1292 = vmatprep.subr.mxu0 0.0
    %1293 = vmatpush1.msra.mxu0 0.0
    %1294 = vmatprep.subr.mxu0 0.0
    %1295 = vmatpush1.msra.mxu0 0.0
    %1296 = vmatprep.subr.mxu0 0.0
    %1297 = vmatpush1.msra.mxu0 0.0
    %1298 = vmatprep.subr.mxu0 0.0
    %1299 = vmatpush1.msra.mxu0 0.0
    %1300 = vmatprep.subr.mxu0 0.0
    %1301 = vmatpush1.msra.mxu0 0.0
    %1302 = vmatprep.subr.mxu0 0.0
    %1303 = vmatpush1.msra.mxu0 0.0
    %1304 = vmatprep.subr.mxu0 0.0
    %1305 = vmatpush1.msra.mxu0 0.0
    %1306 = vmatprep.mubr.f32.mxu0 0.0
    %1307 = vmatmul.mubr.f32.gmra.mrb[0].mxu0 %v994
    %v1308 = vpop.f32.mrb[0].mxu0
    %v1309 = vadd.f32 %v1239, %v1308
    %v1310 = vpop.f32.mrb[0].mxu0
    %1311 = vdwg.mxu0
    %v1312 = vadd.f32 %v1309, %v92
    %v1313 = vtanh.pop %v1312
    %v1314 = vmul.f32 %v1312, 0.5
    %v1315 = vtanh.pop %v1314
    %v1316 = vmul.f32 %v1315, 0.5
    %v1317 = vadd.f32 %v1316, 0.5
    %v1318 = vmul.f32 %v1317, %v970
    %1320 = vrot.lane.b32.xlu0 %v1313, 64
    %v1321 = vpop.permute.xlu0 %1320
    %v1323 = vmul.f32 %v1317, %v1321
    %1325 = vrot.lane.b32.xlu0 %v1323, 32
    %v1326 = vpop.permute.xlu0 %1325
    %v1328 = vadd.f32 %v1318, %v1326
    %v1329 = vtanh.pop %v1328
    %1331 = vrot.lane.b32.xlu0 %v1329, 64
    %v1332 = vpop.permute.xlu0 %1331
    %v1334 = vmul.f32 %v1317, %v1332
    %1336 = vrot.lane.b32.xlu0 %v1334, 32
    %v1337 = vpop.permute.xlu0 %1336
    %1339 = vst.msk [vmem:[#allocation2 + $0x4] sm:$0x3] %vm622, %v1337
    %v1340 = vld [vmem:[#allocation3 + $0x8] sm:$0x3]
    %v1341 = vld [vmem:[#allocation6] sm:$0xff]
    %v1342 = vld [vmem:[#allocation6 + $0x8] sm:$0xff]
    %v1343 = vld [vmem:[#allocation6 + $0x10] sm:$0xff]
    %v1344 = vld [vmem:[#allocation6 + $0x18] sm:$0xff]
    %v1345 = vld [vmem:[#allocation8] sm:$0xff]
    %v1346 = vld [vmem:[#allocation8 + $0x8] sm:$0xff]
    %v1347 = vld [vmem:[#allocation8 + $0x10] sm:$0xff]
    %v1348 = vld [vmem:[#allocation8 + $0x18] sm:$0xff]
    %1350 = vrot.lane.b32.xlu0 %v1161, 32
    %v1351 = vpop.permute.xlu0 %1350
    %v1352 = vsel %vm103, %v1351, 0
    %1354 = vmatprep.subr.mxu0 0.0
    %1355 = vmatpush1.msra.mxu0 %v1345
    %1356 = vmatprep.subr.mxu0 0.0
    %1357 = vmatpush1.msra.mxu0 %v1346
    %1358 = vmatprep.subr.mxu0 0.0
    %1359 = vmatpush1.msra.mxu0 %v1347
    %1360 = vmatprep.subr.mxu0 0.0
    %1361 = vmatpush1.msra.mxu0 %v1348
    %1362 = vmatprep.subr.mxu0 0.0
    %1363 = vmatpush1.msra.mxu0 0.0
    %1364 = vmatprep.subr.mxu0 0.0
    %1365 = vmatpush1.msra.mxu0 0.0
    %1366 = vmatprep.subr.mxu0 0.0
    %1367 = vmatpush1.msra.mxu0 0.0
    %1368 = vmatprep.subr.mxu0 0.0
    %1369 = vmatpush1.msra.mxu0 0.0
    %1370 = vmatprep.subr.mxu0 0.0
    %1371 = vmatpush1.msra.mxu0 0.0
    %1372 = vmatprep.subr.mxu0 0.0
    %1373 = vmatpush1.msra.mxu0 0.0
    %1374 = vmatprep.subr.mxu0 0.0
    %1375 = vmatpush1.msra.mxu0 0.0
    %1376 = vmatprep.subr.mxu0 0.0
    %1377 = vmatpush1.msra.mxu0 0.0
    %1378 = vmatprep.subr.mxu0 0.0
    %1379 = vmatpush1.msra.mxu0 0.0
    %1380 = vmatprep.subr.mxu0 0.0
    %1381 = vmatpush1.msra.mxu0 0.0
    %1382 = vmatprep.subr.mxu0 0.0
    %1383 = vmatpush1.msra.mxu0 0.0
    %1384 = vmatprep.subr.mxu0 0.0
    %1385 = vmatpush1.msra.mxu0 0.0
    %1386 = vmatprep.subr.mxu0 0.0
    %1387 = vmatpush1.msra.mxu0 0.0
    %1388 = vmatprep.subr.mxu0 0.0
    %1389 = vmatpush1.msra.mxu0 0.0
    %1390 = vmatprep.subr.mxu0 0.0
    %1391 = vmatpush1.msra.mxu0 0.0
    %1392 = vmatprep.subr.mxu0 0.0
    %1393 = vmatpush1.msra.mxu0 0.0
    %1394 = vmatprep.subr.mxu0 0.0
    %1395 = vmatpush1.msra.mxu0 0.0
    %1396 = vmatprep.subr.mxu0 0.0
    %1397 = vmatpush1.msra.mxu0 0.0
    %1398 = vmatprep.subr.mxu0 0.0
    %1399 = vmatpush1.msra.mxu0 0.0
    %1400 = vmatprep.subr.mxu0 0.0
    %1401 = vmatpush1.msra.mxu0 0.0
    %1402 = vmatprep.subr.mxu0 0.0
    %1403 = vmatpush1.msra.mxu0 0.0
    %1404 = vmatprep.subr.mxu0 0.0
    %1405 = vmatpush1.msra.mxu0 0.0
    %1406 = vmatprep.subr.mxu0 0.0
    %1407 = vmatpush1.msra.mxu0 0.0
    %1408 = vmatprep.subr.mxu0 0.0
    %1409 = vmatpush1.msra.mxu0 0.0
    %1410 = vmatprep.subr.mxu0 0.0
    %1411 = vmatpush1.msra.mxu0 0.0
    %1412 = vmatprep.subr.mxu0 0.0
    %1413 = vmatpush1.msra.mxu0 0.0
    %1414 = vmatprep.subr.mxu0 0.0
    %1415 = vmatpush1.msra.mxu0 0.0
    %1416 = vmatprep.subr.mxu0 0.0
    %1417 = vmatpush1.msra.mxu0 0.0
    %1418 = vmatprep.mubr.f32.mxu0 0.0
    %1419 = vmatmul.mubr.f32.gmra.mrb[0].mxu0 %v1352
    %v1420 = vpop.f32.mrb[0].mxu0
    %v1421 = vadd.f32 0.0, %v1420
    %v1422 = vpop.f32.mrb[0].mxu0
    %1423 = vdwg.mxu0
    %v1425 = vsel %vm103, %v1340, 0
    %1427 = vmatprep.subr.mxu0 0.0
    %1428 = vmatpush1.msra.mxu0 %v1341
    %1429 = vmatprep.subr.mxu0 0.0
    %1430 = vmatpush1.msra.mxu0 %v1342
    %1431 = vmatprep.subr.mxu0 0.0
    %1432 = vmatpush1.msra.mxu0 %v1343
    %1433 = vmatprep.subr.mxu0 0.0
    %1434 = vmatpush1.msra.mxu0 %v1344
    %1435 = vmatprep.subr.mxu0 0.0
    %1436 = vmatpush1.msra.mxu0 0.0
    %1437 = vmatprep.subr.mxu0 0.0
    %1438 = vmatpush1.msra.mxu0 0.0
    %1439 = vmatprep.subr.mxu0 0.0
    %1440 = vmatpush1.msra.mxu0 0.0
    %1441 = vmatprep.subr.mxu0 0.0
    %1442 = vmatpush1.msra.mxu0 0.0
    %1443 = vmatprep.subr.mxu0 0.0
    %1444 = vmatpush1.msra.mxu0 0.0
    %1445 = vmatprep.subr.mxu0 0.0
    %1446 = vmatpush1.msra.mxu0 0.0
    %1447 = vmatprep.subr.mxu0 0.0
    %1448 = vmatpush1.msra.mxu0 0.0
    %1449 = vmatprep.subr.mxu0 0.0
    %1450 = vmatpush1.msra.mxu0 0.0
    %1451 = vmatprep.subr.mxu0 0.0
    %1452 = vmatpush1.msra.mxu0 0.0
    %1453 = vmatprep.subr.mxu0 0.0
    %1454 = vmatpush1.msra.mxu0 0.0
    %1455 = vmatprep.subr.mxu0 0.0
    %1456 = vmatpush1.msra.mxu0 0.0
    %1457 = vmatprep.subr.mxu0 0.0
    %1458 = vmatpush1.msra.mxu0 0.0
    %1459 = vmatprep.subr.mxu0 0.0
    %1460 = vmatpush1.msra.mxu0 0.0
    %1461 = vmatprep.subr.mxu0 0.0
    %1462 = vmatpush1.msra.mxu0 0.0
    %1463 = vmatprep.subr.mxu0 0.0
    %1464 = vmatpush1.msra.mxu0 0.0
    %1465 = vmatprep.subr.mxu0 0.0
    %1466 = vmatpush1.msra.mxu0 0.0
    %1467 = vmatprep.subr.mxu0 0.0
    %1468 = vmatpush1.msra.mxu0 0.0
    %1469 = vmatprep.subr.mxu0 0.0
    %1470 = vmatpush1.msra.mxu0 0.0
    %1471 = vmatprep.subr.mxu0 0.0
    %1472 = vmatpush1.msra.mxu0 0.0
    %1473 = vmatprep.subr.mxu0 0.0
    %1474 = vmatpush1.msra.mxu0 0.0
    %1475 = vmatprep.subr.mxu0 0.0
    %1476 = vmatpush1.msra.mxu0 0.0
    %1477 = vmatprep.subr.mxu0 0.0
    %1478 = vmatpush1.msra.mxu0 0.0
    %1479 = vmatprep.subr.mxu0 0.0
    %1480 = vmatpush1.msra.mxu0 0.0
    %1481 = vmatprep.subr.mxu0 0.0
    %1482 = vmatpush1.msra.mxu0 0.0
    %1483 = vmatprep.subr.mxu0 0.0
    %1484 = vmatpush1.msra.mxu0 0.0
    %1485 = vmatprep.subr.mxu0 0.0
    %1486 = vmatpush1.msra.mxu0 0.0
    %1487 = vmatprep.subr.mxu0 0.0
    %1488 = vmatpush1.msra.mxu0 0.0
    %1489 = vmatprep.subr.mxu0 0.0
    %1490 = vmatpush1.msra.mxu0 0.0
    %1491 = vmatprep.mubr.f32.mxu0 0.0
    %1492 = vmatmul.mubr.f32.gmra.mrb[0].mxu0 %v1425
    %v1493 = vpop.f32.mrb[0].mxu0
    %v1494 = vadd.f32 %v1421, %v1493
    %v1495 = vpop.f32.mrb[0].mxu0
    %1496 = vdwg.mxu0
    %v1497 = vadd.f32 %v1494, %v84
    %v1498 = vtanh.pop %v1497
    %v1499 = vmul.f32 %v1497, 0.5
    %v1500 = vtanh.pop %v1499
    %v1501 = vmul.f32 %v1500, 0.5
    %v1502 = vadd.f32 %v1501, 0.5
    %v1503 = vmul.f32 %v1502, %v1155
    %1505 = vrot.lane.b32.xlu0 %v1498, 64
    %v1506 = vpop.permute.xlu0 %1505
    %v1508 = vmul.f32 %v1502, %v1506
    %1510 = vrot.lane.b32.xlu0 %v1508, 32
    %v1511 = vpop.permute.xlu0 %1510
    %v1513 = vadd.f32 %v1503, %v1511
    %v1514 = vtanh.pop %v1513
    %1516 = vrot.lane.b32.xlu0 %v1514, 64
    %v1517 = vpop.permute.xlu0 %1516
    %v1519 = vmul.f32 %v1502, %v1517
    %v1520 = vld [vmem:[%s445] sm:$0xff]
    %v1521 = vld [vmem:[%s445 + $0x8] sm:$0xff]
    %v1522 = vld [vmem:[%s445 + $0x10] sm:$0xff]
    %v1523 = vld [vmem:[%s445 + $0x18] sm:$0xff]
    %v1524 = vld [vmem:[%s450] sm:$0xff]
    %v1525 = vld [vmem:[%s450 + $0x8] sm:$0xff]
    %v1526 = vld [vmem:[%s450 + $0x10] sm:$0xff]
    %v1527 = vld [vmem:[%s450 + $0x18] sm:$0xff]
    %v1528 = vsel %vm103, %v1337, 0
    %1530 = vmatprep.subr.mxu0 0.0
    %1531 = vmatpush1.msra.mxu0 %v1524
    %1532 = vmatprep.subr.mxu0 0.0
    %1533 = vmatpush1.msra.mxu0 %v1525
    %1534 = vmatprep.subr.mxu0 0.0
    %1535 = vmatpush1.msra.mxu0 %v1526
    %1536 = vmatprep.subr.mxu0 0.0
    %1537 = vmatpush1.msra.mxu0 %v1527
    %1538 = vmatprep.subr.mxu0 0.0
    %1539 = vmatpush1.msra.mxu0 0.0
    %1540 = vmatprep.subr.mxu0 0.0
    %1541 = vmatpush1.msra.mxu0 0.0
    %1542 = vmatprep.subr.mxu0 0.0
    %1543 = vmatpush1.msra.mxu0 0.0
    %1544 = vmatprep.subr.mxu0 0.0
    %1545 = vmatpush1.msra.mxu0 0.0
    %1546 = vmatprep.subr.mxu0 0.0
    %1547 = vmatpush1.msra.mxu0 0.0
    %1548 = vmatprep.subr.mxu0 0.0
    %1549 = vmatpush1.msra.mxu0 0.0
    %1550 = vmatprep.subr.mxu0 0.0
    %1551 = vmatpush1.msra.mxu0 0.0
    %1552 = vmatprep.subr.mxu0 0.0
    %1553 = vmatpush1.msra.mxu0 0.0
    %1554 = vmatprep.subr.mxu0 0.0
    %1555 = vmatpush1.msra.mxu0 0.0
    %1556 = vmatprep.subr.mxu0 0.0
    %1557 = vmatpush1.msra.mxu0 0.0
    %1558 = vmatprep.subr.mxu0 0.0
    %1559 = vmatpush1.msra.mxu0 0.0
    %1560 = vmatprep.subr.mxu0 0.0
    %1561 = vmatpush1.msra.mxu0 0.0
    %1562 = vmatprep.subr.mxu0 0.0
    %1563 = vmatpush1.msra.mxu0 0.0
    %1564 = vmatprep.subr.mxu0 0.0
    %1565 = vmatpush1.msra.mxu0 0.0
    %1566 = vmatprep.subr.mxu0 0.0
    %1567 = vmatpush1.msra.mxu0 0.0
    %1568 = vmatprep.subr.mxu0 0.0
    %1569 = vmatpush1.msra.mxu0 0.0
    %1570 = vmatprep.subr.mxu0 0.0
    %1571 = vmatpush1.msra.mxu0 0.0
    %1572 = vmatprep.subr.mxu0 0.0
    %1573 = vmatpush1.msra.mxu0 0.0
    %1574 = vmatprep.subr.mxu0 0.0
    %1575 = vmatpush1.msra.mxu0 0.0
    %1576 = vmatprep.subr.mxu0 0.0
    %1577 = vmatpush1.msra.mxu0 0.0
    %1578 = vmatprep.subr.mxu0 0.0
    %1579 = vmatpush1.msra.mxu0 0.0
    %1580 = vmatprep.subr.mxu0 0.0
    %1581 = vmatpush1.msra.mxu0 0.0
    %1582 = vmatprep.subr.mxu0 0.0
    %1583 = vmatpush1.msra.mxu0 0.0
    %1584 = vmatprep.subr.mxu0 0.0
    %1585 = vmatpush1.msra.mxu0 0.0
    %1586 = vmatprep.subr.mxu0 0.0
    %1587 = vmatpush1.msra.mxu0 0.0
    %1588 = vmatprep.subr.mxu0 0.0
    %1589 = vmatpush1.msra.mxu0 0.0
    %1590 = vmatprep.subr.mxu0 0.0
    %1591 = vmatpush1.msra.mxu0 0.0
    %1592 = vmatprep.subr.mxu0 0.0
    %1593 = vmatpush1.msra.mxu0 0.0
    %1594 = vmatprep.mubr.f32.mxu0 0.0
    %1595 = vmatmul.mubr.f32.gmra.mrb[0].mxu0 %v1528
    %v1596 = vpop.f32.mrb[0].mxu0
    %v1597 = vadd.f32 0.0, %v1596
    %v1598 = vpop.f32.mrb[0].mxu0
    %1599 = vdwg.mxu0
    %1600 = vmatprep.subr.mxu0 0.0
    %1601 = vmatpush1.msra.mxu0 %v1520
    %1602 = vmatprep.subr.mxu0 0.0
    %1603 = vmatpush1.msra.mxu0 %v1521
    %1604 = vmatprep.subr.mxu0 0.0
    %1605 = vmatpush1.msra.mxu0 %v1522
    %1606 = vmatprep.subr.mxu0 0.0
    %1607 = vmatpush1.msra.mxu0 %v1523
    %1608 = vmatprep.subr.mxu0 0.0
    %1609 = vmatpush1.msra.mxu0 0.0
    %1610 = vmatprep.subr.mxu0 0.0
    %1611 = vmatpush1.msra.mxu0 0.0
    %1612 = vmatprep.subr.mxu0 0.0
    %1613 = vmatpush1.msra.mxu0 0.0
    %1614 = vmatprep.subr.mxu0 0.0
    %1615 = vmatpush1.msra.mxu0 0.0
    %1616 = vmatprep.subr.mxu0 0.0
    %1617 = vmatpush1.msra.mxu0 0.0
    %1618 = vmatprep.subr.mxu0 0.0
    %1619 = vmatpush1.msra.mxu0 0.0
    %1620 = vmatprep.subr.mxu0 0.0
    %1621 = vmatpush1.msra.mxu0 0.0
    %1622 = vmatprep.subr.mxu0 0.0
    %1623 = vmatpush1.msra.mxu0 0.0
    %1624 = vmatprep.subr.mxu0 0.0
    %1625 = vmatpush1.msra.mxu0 0.0
    %1626 = vmatprep.subr.mxu0 0.0
    %1627 = vmatpush1.msra.mxu0 0.0
    %1628 = vmatprep.subr.mxu0 0.0
    %1629 = vmatpush1.msra.mxu0 0.0
    %1630 = vmatprep.subr.mxu0 0.0
    %1631 = vmatpush1.msra.mxu0 0.0
    %1632 = vmatprep.subr.mxu0 0.0
    %1633 = vmatpush1.msra.mxu0 0.0
    %1634 = vmatprep.subr.mxu0 0.0
    %1635 = vmatpush1.msra.mxu0 0.0
    %1636 = vmatprep.subr.mxu0 0.0
    %1637 = vmatpush1.msra.mxu0 0.0
    %1638 = vmatprep.subr.mxu0 0.0
    %1639 = vmatpush1.msra.mxu0 0.0
    %1640 = vmatprep.subr.mxu0 0.0
    %1641 = vmatpush1.msra.mxu0 0.0
    %1642 = vmatprep.subr.mxu0 0.0
    %1643 = vmatpush1.msra.mxu0 0.0
    %1644 = vmatprep.subr.mxu0 0.0
    %1645 = vmatpush1.msra.mxu0 0.0
    %1646 = vmatprep.subr.mxu0 0.0
    %1647 = vmatpush1.msra.mxu0 0.0
    %1648 = vmatprep.subr.mxu0 0.0
    %1649 = vmatpush1.msra.mxu0 0.0
    %1650 = vmatprep.subr.mxu0 0.0
    %1651 = vmatpush1.msra.mxu0 0.0
    %1652 = vmatprep.subr.mxu0 0.0
    %1653 = vmatpush1.msra.mxu0 0.0
    %1654 = vmatprep.subr.mxu0 0.0
    %1655 = vmatpush1.msra.mxu0 0.0
    %1656 = vmatprep.subr.mxu0 0.0
    %1657 = vmatpush1.msra.mxu0 0.0
    %1658 = vmatprep.subr.mxu0 0.0
    %1659 = vmatpush1.msra.mxu0 0.0
    %1660 = vmatprep.subr.mxu0 0.0
    %1661 = vmatpush1.msra.mxu0 0.0
    %1662 = vmatprep.subr.mxu0 0.0
    %1663 = vmatpush1.msra.mxu0 0.0
    %1664 = vmatprep.mubr.f32.mxu0 0.0
    %1665 = vmatmul.mubr.f32.gmra.mrb[0].mxu0 %v1352
    %v1666 = vpop.f32.mrb[0].mxu0
    %v1667 = vadd.f32 %v1597, %v1666
    %v1668 = vpop.f32.mrb[0].mxu0
    %1669 = vdwg.mxu0
    %v1670 = vadd.f32 %v1667, %v92
    %v1671 = vtanh.pop %v1670
    %v1672 = vmul.f32 %v1670, 0.5
    %v1673 = vtanh.pop %v1672
    %v1674 = vmul.f32 %v1673, 0.5
    %v1675 = vadd.f32 %v1674, 0.5
    %v1676 = vmul.f32 %v1675, %v1328
    %1678 = vrot.lane.b32.xlu0 %v1671, 64
    %v1679 = vpop.permute.xlu0 %1678
    %v1681 = vmul.f32 %v1675, %v1679
    %1683 = vrot.lane.b32.xlu0 %v1681, 32
    %v1684 = vpop.permute.xlu0 %1683
    %v1686 = vadd.f32 %v1676, %v1684
    %v1687 = vtanh.pop %v1686
    %1689 = vrot.lane.b32.xlu0 %v1687, 64
    %v1690 = vpop.permute.xlu0 %1689
    %v1692 = vmul.f32 %v1675, %v1690
    %1694 = vrot.lane.b32.xlu0 %v1692, 32
    %v1695 = vpop.permute.xlu0 %1694
    %1697 = vst.msk [vmem:[#allocation2 + $0x6] sm:$0x3] %vm622, %v1695
    %v1698 = vld [vmem:[#allocation3 + $0xa] sm:$0x3]
    %v1699 = vld [vmem:[#allocation6] sm:$0xff]
    %v1700 = vld [vmem:[#allocation6 + $0x8] sm:$0xff]
    %v1701 = vld [vmem:[#allocation6 + $0x10] sm:$0xff]
    %v1702 = vld [vmem:[#allocation6 + $0x18] sm:$0xff]
    %v1703 = vld [vmem:[#allocation8] sm:$0xff]
    %v1704 = vld [vmem:[#allocation8 + $0x8] sm:$0xff]
    %v1705 = vld [vmem:[#allocation8 + $0x10] sm:$0xff]
    %v1706 = vld [vmem:[#allocation8 + $0x18] sm:$0xff]
    %1708 = vrot.lane.b32.xlu0 %v1519, 32
    %v1709 = vpop.permute.xlu0 %1708
    %v1710 = vsel %vm103, %v1709, 0
    %1712 = vmatprep.subr.mxu0 0.0
    %1713 = vmatpush1.msra.mxu0 %v1703
    %1714 = vmatprep.subr.mxu0 0.0
    %1715 = vmatpush1.msra.mxu0 %v1704
    %1716 = vmatprep.subr.mxu0 0.0
    %1717 = vmatpush1.msra.mxu0 %v1705
    %1718 = vmatprep.subr.mxu0 0.0
    %1719 = vmatpush1.msra.mxu0 %v1706
    %1720 = vmatprep.subr.mxu0 0.0
    %1721 = vmatpush1.msra.mxu0 0.0
    %1722 = vmatprep.subr.mxu0 0.0
    %1723 = vmatpush1.msra.mxu0 0.0
    %1724 = vmatprep.subr.mxu0 0.0
    %1725 = vmatpush1.msra.mxu0 0.0
    %1726 = vmatprep.subr.mxu0 0.0
    %1727 = vmatpush1.msra.mxu0 0.0
    %1728 = vmatprep.subr.mxu0 0.0
    %1729 = vmatpush1.msra.mxu0 0.0
    %1730 = vmatprep.subr.mxu0 0.0
    %1731 = vmatpush1.msra.mxu0 0.0
    %1732 = vmatprep.subr.mxu0 0.0
    %1733 = vmatpush1.msra.mxu0 0.0
    %1734 = vmatprep.subr.mxu0 0.0
    %1735 = vmatpush1.msra.mxu0 0.0
    %1736 = vmatprep.subr.mxu0 0.0
    %1737 = vmatpush1.msra.mxu0 0.0
    %1738 = vmatprep.subr.mxu0 0.0
    %1739 = vmatpush1.msra.mxu0 0.0
    %1740 = vmatprep.subr.mxu0 0.0
    %1741 = vmatpush1.msra.mxu0 0.0
    %1742 = vmatprep.subr.mxu0 0.0
    %1743 = vmatpush1.msra.mxu0 0.0
    %1744 = vmatprep.subr.mxu0 0.0
    %1745 = vmatpush1.msra.mxu0 0.0
    %1746 = vmatprep.subr.mxu0 0.0
    %1747 = vmatpush1.msra.mxu0 0.0
    %1748 = vmatprep.subr.mxu0 0.0
    %1749 = vmatpush1.msra.mxu0 0.0
    %1750 = vmatprep.subr.mxu0 0.0
    %1751 = vmatpush1.msra.mxu0 0.0
    %1752 = vmatprep.subr.mxu0 0.0
    %1753 = vmatpush1.msra.mxu0 0.0
    %1754 = vmatprep.subr.mxu0 0.0
    %1755 = vmatpush1.msra.mxu0 0.0
    %1756 = vmatprep.subr.mxu0 0.0
    %1757 = vmatpush1.msra.mxu0 0.0
    %1758 = vmatprep.subr.mxu0 0.0
    %1759 = vmatpush1.msra.mxu0 0.0
    %1760 = vmatprep.subr.mxu0 0.0
    %1761 = vmatpush1.msra.mxu0 0.0
    %1762 = vmatprep.subr.mxu0 0.0
    %1763 = vmatpush1.msra.mxu0 0.0
    %1764 = vmatprep.subr.mxu0 0.0
    %1765 = vmatpush1.msra.mxu0 0.0
    %1766 = vmatprep.subr.mxu0 0.0
    %1767 = vmatpush1.msra.mxu0 0.0
    %1768 = vmatprep.subr.mxu0 0.0
    %1769 = vmatpush1.msra.mxu0 0.0
    %1770 = vmatprep.subr.mxu0 0.0
    %1771 = vmatpush1.msra.mxu0 0.0
    %1772 = vmatprep.subr.mxu0 0.0
    %1773 = vmatpush1.msra.mxu0 0.0
    %1774 = vmatprep.subr.mxu0 0.0
    %1775 = vmatpush1.msra.mxu0 0.0
    %1776 = vmatprep.mubr.f32.mxu0 0.0
    %1777 = vmatmul.mubr.f32.gmra.mrb[0].mxu0 %v1710
    %v1778 = vpop.f32.mrb[0].mxu0
    %v1779 = vadd.f32 0.0, %v1778
    %v1780 = vpop.f32.mrb[0].mxu0
    %1781 = vdwg.mxu0
    %v1783 = vsel %vm103, %v1698, 0
    %1785 = vmatprep.subr.mxu0 0.0
    %1786 = vmatpush1.msra.mxu0 %v1699
    %1787 = vmatprep.subr.mxu0 0.0
    %1788 = vmatpush1.msra.mxu0 %v1700
    %1789 = vmatprep.subr.mxu0 0.0
    %1790 = vmatpush1.msra.mxu0 %v1701
    %1791 = vmatprep.subr.mxu0 0.0
    %1792 = vmatpush1.msra.mxu0 %v1702
    %1793 = vmatprep.subr.mxu0 0.0
    %1794 = vmatpush1.msra.mxu0 0.0
    %1795 = vmatprep.subr.mxu0 0.0
    %1796 = vmatpush1.msra.mxu0 0.0
    %1797 = vmatprep.subr.mxu0 0.0
    %1798 = vmatpush1.msra.mxu0 0.0
    %1799 = vmatprep.subr.mxu0 0.0
    %1800 = vmatpush1.msra.mxu0 0.0
    %1801 = vmatprep.subr.mxu0 0.0
    %1802 = vmatpush1.msra.mxu0 0.0
    %1803 = vmatprep.subr.mxu0 0.0
    %1804 = vmatpush1.msra.mxu0 0.0
    %1805 = vmatprep.subr.mxu0 0.0
    %1806 = vmatpush1.msra.mxu0 0.0
    %1807 = vmatprep.subr.mxu0 0.0
    %1808 = vmatpush1.msra.mxu0 0.0
    %1809 = vmatprep.subr.mxu0 0.0
    %1810 = vmatpush1.msra.mxu0 0.0
    %1811 = vmatprep.subr.mxu0 0.0
    %1812 = vmatpush1.msra.mxu0 0.0
    %1813 = vmatprep.subr.mxu0 0.0
    %1814 = vmatpush1.msra.mxu0 0.0
    %1815 = vmatprep.subr.mxu0 0.0
    %1816 = vmatpush1.msra.mxu0 0.0
    %1817 = vmatprep.subr.mxu0 0.0
    %1818 = vmatpush1.msra.mxu0 0.0
    %1819 = vmatprep.subr.mxu0 0.0
    %1820 = vmatpush1.msra.mxu0 0.0
    %1821 = vmatprep.subr.mxu0 0.0
    %1822 = vmatpush1.msra.mxu0 0.0
    %1823 = vmatprep.subr.mxu0 0.0
    %1824 = vmatpush1.msra.mxu0 0.0
    %1825 = vmatprep.subr.mxu0 0.0
    %1826 = vmatpush1.msra.mxu0 0.0
    %1827 = vmatprep.subr.mxu0 0.0
    %1828 = vmatpush1.msra.mxu0 0.0
    %1829 = vmatprep.subr.mxu0 0.0
    %1830 = vmatpush1.msra.mxu0 0.0
    %1831 = vmatprep.subr.mxu0 0.0
    %1832 = vmatpush1.msra.mxu0 0.0
    %1833 = vmatprep.subr.mxu0 0.0
    %1834 = vmatpush1.msra.mxu0 0.0
    %1835 = vmatprep.subr.mxu0 0.0
    %1836 = vmatpush1.msra.mxu0 0.0
    %1837 = vmatprep.subr.mxu0 0.0
    %1838 = vmatpush1.msra.mxu0 0.0
    %1839 = vmatprep.subr.mxu0 0.0
    %1840 = vmatpush1.msra.mxu0 0.0
    %1841 = vmatprep.subr.mxu0 0.0
    %1842 = vmatpush1.msra.mxu0 0.0
    %1843 = vmatprep.subr.mxu0 0.0
    %1844 = vmatpush1.msra.mxu0 0.0
    %1845 = vmatprep.subr.mxu0 0.0
    %1846 = vmatpush1.msra.mxu0 0.0
    %1847 = vmatprep.subr.mxu0 0.0
    %1848 = vmatpush1.msra.mxu0 0.0
    %1849 = vmatprep.mubr.f32.mxu0 0.0
    %1850 = vmatmul.mubr.f32.gmra.mrb[0].mxu0 %v1783
    %v1851 = vpop.f32.mrb[0].mxu0
    %v1852 = vadd.f32 %v1779, %v1851
    %v1853 = vpop.f32.mrb[0].mxu0
    %1854 = vdwg.mxu0
    %v1855 = vadd.f32 %v1852, %v84
    %v1856 = vtanh.pop %v1855
    %v1857 = vmul.f32 %v1855, 0.5
    %v1858 = vtanh.pop %v1857
    %v1859 = vmul.f32 %v1858, 0.5
    %v1860 = vadd.f32 %v1859, 0.5
    %v1861 = vmul.f32 %v1860, %v1513
    %1863 = vrot.lane.b32.xlu0 %v1856, 64
    %v1864 = vpop.permute.xlu0 %1863
    %v1866 = vmul.f32 %v1860, %v1864
    %1868 = vrot.lane.b32.xlu0 %v1866, 32
    %v1869 = vpop.permute.xlu0 %1868
    %v1871 = vadd.f32 %v1861, %v1869
    %v1872 = vtanh.pop %v1871
    %1874 = vrot.lane.b32.xlu0 %v1872, 64
    %v1875 = vpop.permute.xlu0 %1874
    %v1877 = vmul.f32 %v1860, %v1875
    %v1878 = vld [vmem:[%s445] sm:$0xff]
    %v1879 = vld [vmem:[%s445 + $0x8] sm:$0xff]
    %v1880 = vld [vmem:[%s445 + $0x10] sm:$0xff]
    %v1881 = vld [vmem:[%s445 + $0x18] sm:$0xff]
    %v1882 = vld [vmem:[%s450] sm:$0xff]
    %v1883 = vld [vmem:[%s450 + $0x8] sm:$0xff]
    %v1884 = vld [vmem:[%s450 + $0x10] sm:$0xff]
    %v1885 = vld [vmem:[%s450 + $0x18] sm:$0xff]
    %v1886 = vsel %vm103, %v1695, 0
    %1888 = vmatprep.subr.mxu0 0.0
    %1889 = vmatpush1.msra.mxu0 %v1882
    %1890 = vmatprep.subr.mxu0 0.0
    %1891 = vmatpush1.msra.mxu0 %v1883
    %1892 = vmatprep.subr.mxu0 0.0
    %1893 = vmatpush1.msra.mxu0 %v1884
    %1894 = vmatprep.subr.mxu0 0.0
    %1895 = vmatpush1.msra.mxu0 %v1885
    %1896 = vmatprep.subr.mxu0 0.0
    %1897 = vmatpush1.msra.mxu0 0.0
    %1898 = vmatprep.subr.mxu0 0.0
    %1899 = vmatpush1.msra.mxu0 0.0
    %1900 = vmatprep.subr.mxu0 0.0
    %1901 = vmatpush1.msra.mxu0 0.0
    %1902 = vmatprep.subr.mxu0 0.0
    %1903 = vmatpush1.msra.mxu0 0.0
    %1904 = vmatprep.subr.mxu0 0.0
    %1905 = vmatpush1.msra.mxu0 0.0
    %1906 = vmatprep.subr.mxu0 0.0
    %1907 = vmatpush1.msra.mxu0 0.0
    %1908 = vmatprep.subr.mxu0 0.0
    %1909 = vmatpush1.msra.mxu0 0.0
    %1910 = vmatprep.subr.mxu0 0.0
    %1911 = vmatpush1.msra.mxu0 0.0
    %1912 = vmatprep.subr.mxu0 0.0
    %1913 = vmatpush1.msra.mxu0 0.0
    %1914 = vmatprep.subr.mxu0 0.0
    %1915 = vmatpush1.msra.mxu0 0.0
    %1916 = vmatprep.subr.mxu0 0.0
    %1917 = vmatpush1.msra.mxu0 0.0
    %1918 = vmatprep.subr.mxu0 0.0
    %1919 = vmatpush1.msra.mxu0 0.0
    %1920 = vmatprep.subr.mxu0 0.0
    %1921 = vmatpush1.msra.mxu0 0.0
    %1922 = vmatprep.subr.mxu0 0.0
    %1923 = vmatpush1.msra.mxu0 0.0
    %1924 = vmatprep.subr.mxu0 0.0
    %1925 = vmatpush1.msra.mxu0 0.0
    %1926 = vmatprep.subr.mxu0 0.0
    %1927 = vmatpush1.msra.mxu0 0.0
    %1928 = vmatprep.subr.mxu0 0.0
    %1929 = vmatpush1.msra.mxu0 0.0
    %1930 = vmatprep.subr.mxu0 0.0
    %1931 = vmatpush1.msra.mxu0 0.0
    %1932 = vmatprep.subr.mxu0 0.0
    %1933 = vmatpush1.msra.mxu0 0.0
    %1934 = vmatprep.subr.mxu0 0.0
    %1935 = vmatpush1.msra.mxu0 0.0
    %1936 = vmatprep.subr.mxu0 0.0
    %1937 = vmatpush1.msra.mxu0 0.0
    %1938 = vmatprep.subr.mxu0 0.0
    %1939 = vmatpush1.msra.mxu0 0.0
    %1940 = vmatprep.subr.mxu0 0.0
    %1941 = vmatpush1.msra.mxu0 0.0
    %1942 = vmatprep.subr.mxu0 0.0
    %1943 = vmatpush1.msra.mxu0 0.0
    %1944 = vmatprep.subr.mxu0 0.0
    %1945 = vmatpush1.msra.mxu0 0.0
    %1946 = vmatprep.subr.mxu0 0.0
    %1947 = vmatpush1.msra.mxu0 0.0
    %1948 = vmatprep.subr.mxu0 0.0
    %1949 = vmatpush1.msra.mxu0 0.0
    %1950 = vmatprep.subr.mxu0 0.0
    %1951 = vmatpush1.msra.mxu0 0.0
    %1952 = vmatprep.mubr.f32.mxu0 0.0
    %1953 = vmatmul.mubr.f32.gmra.mrb[0].mxu0 %v1886
    %v1954 = vpop.f32.mrb[0].mxu0
    %v1955 = vadd.f32 0.0, %v1954
    %v1956 = vpop.f32.mrb[0].mxu0
    %1957 = vdwg.mxu0
    %1958 = vmatprep.subr.mxu0 0.0
    %1959 = vmatpush1.msra.mxu0 %v1878
    %1960 = vmatprep.subr.mxu0 0.0
    %1961 = vmatpush1.msra.mxu0 %v1879
    %1962 = vmatprep.subr.mxu0 0.0
    %1963 = vmatpush1.msra.mxu0 %v1880
    %1964 = vmatprep.subr.mxu0 0.0
    %1965 = vmatpush1.msra.mxu0 %v1881
    %1966 = vmatprep.subr.mxu0 0.0
    %1967 = vmatpush1.msra.mxu0 0.0
    %1968 = vmatprep.subr.mxu0 0.0
    %1969 = vmatpush1.msra.mxu0 0.0
    %1970 = vmatprep.subr.mxu0 0.0
    %1971 = vmatpush1.msra.mxu0 0.0
    %1972 = vmatprep.subr.mxu0 0.0
    %1973 = vmatpush1.msra.mxu0 0.0
    %1974 = vmatprep.subr.mxu0 0.0
    %1975 = vmatpush1.msra.mxu0 0.0
    %1976 = vmatprep.subr.mxu0 0.0
    %1977 = vmatpush1.msra.mxu0 0.0
    %1978 = vmatprep.subr.mxu0 0.0
    %1979 = vmatpush1.msra.mxu0 0.0
    %1980 = vmatprep.subr.mxu0 0.0
    %1981 = vmatpush1.msra.mxu0 0.0
    %1982 = vmatprep.subr.mxu0 0.0
    %1983 = vmatpush1.msra.mxu0 0.0
    %1984 = vmatprep.subr.mxu0 0.0
    %1985 = vmatpush1.msra.mxu0 0.0
    %1986 = vmatprep.subr.mxu0 0.0
    %1987 = vmatpush1.msra.mxu0 0.0
    %1988 = vmatprep.subr.mxu0 0.0
    %1989 = vmatpush1.msra.mxu0 0.0
    %1990 = vmatprep.subr.mxu0 0.0
    %1991 = vmatpush1.msra.mxu0 0.0
    %1992 = vmatprep.subr.mxu0 0.0
    %1993 = vmatpush1.msra.mxu0 0.0
    %1994 = vmatprep.subr.mxu0 0.0
    %1995 = vmatpush1.msra.mxu0 0.0
    %1996 = vmatprep.subr.mxu0 0.0
    %1997 = vmatpush1.msra.mxu0 0.0
    %1998 = vmatprep.subr.mxu0 0.0
    %1999 = vmatpush1.msra.mxu0 0.0
    %2000 = vmatprep.subr.mxu0 0.0
    %2001 = vmatpush1.msra.mxu0 0.0
    %2002 = vmatprep.subr.mxu0 0.0
    %2003 = vmatpush1.msra.mxu0 0.0
    %2004 = vmatprep.subr.mxu0 0.0
    %2005 = vmatpush1.msra.mxu0 0.0
    %2006 = vmatprep.subr.mxu0 0.0
    %2007 = vmatpush1.msra.mxu0 0.0
    %2008 = vmatprep.subr.mxu0 0.0
    %2009 = vmatpush1.msra.mxu0 0.0
    %2010 = vmatprep.subr.mxu0 0.0
    %2011 = vmatpush1.msra.mxu0 0.0
    %2012 = vmatprep.subr.mxu0 0.0
    %2013 = vmatpush1.msra.mxu0 0.0
    %2014 = vmatprep.subr.mxu0 0.0
    %2015 = vmatpush1.msra.mxu0 0.0
    %2016 = vmatprep.subr.mxu0 0.0
    %2017 = vmatpush1.msra.mxu0 0.0
    %2018 = vmatprep.subr.mxu0 0.0
    %2019 = vmatpush1.msra.mxu0 0.0
    %2020 = vmatprep.subr.mxu0 0.0
    %2021 = vmatpush1.msra.mxu0 0.0
    %2022 = vmatprep.mubr.f32.mxu0 0.0
    %2023 = vmatmul.mubr.f32.gmra.mrb[0].mxu0 %v1710
    %v2024 = vpop.f32.mrb[0].mxu0
    %v2025 = vadd.f32 %v1955, %v2024
    %v2026 = vpop.f32.mrb[0].mxu0
    %2027 = vdwg.mxu0
    %v2028 = vadd.f32 %v2025, %v92
    %v2029 = vtanh.pop %v2028
    %v2030 = vmul.f32 %v2028, 0.5
    %v2031 = vtanh.pop %v2030
    %v2032 = vmul.f32 %v2031, 0.5
    %v2033 = vadd.f32 %v2032, 0.5
    %v2034 = vmul.f32 %v2033, %v1686
    %2036 = vrot.lane.b32.xlu0 %v2029, 64
    %v2037 = vpop.permute.xlu0 %2036
    %v2039 = vmul.f32 %v2033, %v2037
    %2041 = vrot.lane.b32.xlu0 %v2039, 32
    %v2042 = vpop.permute.xlu0 %2041
    %v2044 = vadd.f32 %v2034, %v2042
    %v2045 = vtanh.pop %v2044
    %2047 = vrot.lane.b32.xlu0 %v2045, 64
    %v2048 = vpop.permute.xlu0 %2047
    %v2050 = vmul.f32 %v2033, %v2048
    %2052 = vrot.lane.b32.xlu0 %v2050, 32
    %v2053 = vpop.permute.xlu0 %2052
    %2055 = vst.msk [vmem:[#allocation2 + $0x8] sm:$0x3] %vm622, %v2053
    %v2056 = vld [vmem:[#allocation3 + $0xc] sm:$0x3]
    %v2057 = vld [vmem:[#allocation6] sm:$0xff]
    %v2058 = vld [vmem:[#allocation6 + $0x8] sm:$0xff]
    %v2059 = vld [vmem:[#allocation6 + $0x10] sm:$0xff]
    %v2060 = vld [vmem:[#allocation6 + $0x18] sm:$0xff]
    %v2061 = vld [vmem:[#allocation8] sm:$0xff]
    %v2062 = vld [vmem:[#allocation8 + $0x8] sm:$0xff]
    %v2063 = vld [vmem:[#allocation8 + $0x10] sm:$0xff]
    %v2064 = vld [vmem:[#allocation8 + $0x18] sm:$0xff]
    %2066 = vrot.lane.b32.xlu0 %v1877, 32
    %v2067 = vpop.permute.xlu0 %2066
    %v2068 = vsel %vm103, %v2067, 0
    %2070 = vmatprep.subr.mxu0 0.0
    %2071 = vmatpush1.msra.mxu0 %v2061
    %2072 = vmatprep.subr.mxu0 0.0
    %2073 = vmatpush1.msra.mxu0 %v2062
    %2074 = vmatprep.subr.mxu0 0.0
    %2075 = vmatpush1.msra.mxu0 %v2063
    %2076 = vmatprep.subr.mxu0 0.0
    %2077 = vmatpush1.msra.mxu0 %v2064
    %2078 = vmatprep.subr.mxu0 0.0
    %2079 = vmatpush1.msra.mxu0 0.0
    %2080 = vmatprep.subr.mxu0 0.0
    %2081 = vmatpush1.msra.mxu0 0.0
    %2082 = vmatprep.subr.mxu0 0.0
    %2083 = vmatpush1.msra.mxu0 0.0
    %2084 = vmatprep.subr.mxu0 0.0
    %2085 = vmatpush1.msra.mxu0 0.0
    %2086 = vmatprep.subr.mxu0 0.0
    %2087 = vmatpush1.msra.mxu0 0.0
    %2088 = vmatprep.subr.mxu0 0.0
    %2089 = vmatpush1.msra.mxu0 0.0
    %2090 = vmatprep.subr.mxu0 0.0
    %2091 = vmatpush1.msra.mxu0 0.0
    %2092 = vmatprep.subr.mxu0 0.0
    %2093 = vmatpush1.msra.mxu0 0.0
    %2094 = vmatprep.subr.mxu0 0.0
    %2095 = vmatpush1.msra.mxu0 0.0
    %2096 = vmatprep.subr.mxu0 0.0
    %2097 = vmatpush1.msra.mxu0 0.0
    %2098 = vmatprep.subr.mxu0 0.0
    %2099 = vmatpush1.msra.mxu0 0.0
    %2100 = vmatprep.subr.mxu0 0.0
    %2101 = vmatpush1.msra.mxu0 0.0
    %2102 = vmatprep.subr.mxu0 0.0
    %2103 = vmatpush1.msra.mxu0 0.0
    %2104 = vmatprep.subr.mxu0 0.0
    %2105 = vmatpush1.msra.mxu0 0.0
    %2106 = vmatprep.subr.mxu0 0.0
    %2107 = vmatpush1.msra.mxu0 0.0
    %2108 = vmatprep.subr.mxu0 0.0
    %2109 = vmatpush1.msra.mxu0 0.0
    %2110 = vmatprep.subr.mxu0 0.0
    %2111 = vmatpush1.msra.mxu0 0.0
    %2112 = vmatprep.subr.mxu0 0.0
    %2113 = vmatpush1.msra.mxu0 0.0
    %2114 = vmatprep.subr.mxu0 0.0
    %2115 = vmatpush1.msra.mxu0 0.0
    %2116 = vmatprep.subr.mxu0 0.0
    %2117 = vmatpush1.msra.mxu0 0.0
    %2118 = vmatprep.subr.mxu0 0.0
    %2119 = vmatpush1.msra.mxu0 0.0
    %2120 = vmatprep.subr.mxu0 0.0
    %2121 = vmatpush1.msra.mxu0 0.0
    %2122 = vmatprep.subr.mxu0 0.0
    %2123 = vmatpush1.msra.mxu0 0.0
    %2124 = vmatprep.subr.mxu0 0.0
    %2125 = vmatpush1.msra.mxu0 0.0
    %2126 = vmatprep.subr.mxu0 0.0
    %2127 = vmatpush1.msra.mxu0 0.0
    %2128 = vmatprep.subr.mxu0 0.0
    %2129 = vmatpush1.msra.mxu0 0.0
    %2130 = vmatprep.subr.mxu0 0.0
    %2131 = vmatpush1.msra.mxu0 0.0
    %2132 = vmatprep.subr.mxu0 0.0
    %2133 = vmatpush1.msra.mxu0 0.0
    %2134 = vmatprep.mubr.f32.mxu0 0.0
    %2135 = vmatmul.mubr.f32.gmra.mrb[0].mxu0 %v2068
    %v2136 = vpop.f32.mrb[0].mxu0
    %v2137 = vadd.f32 0.0, %v2136
    %v2138 = vpop.f32.mrb[0].mxu0
    %2139 = vdwg.mxu0
    %v2141 = vsel %vm103, %v2056, 0
    %2143 = vmatprep.subr.mxu0 0.0
    %2144 = vmatpush1.msra.mxu0 %v2057
    %2145 = vmatprep.subr.mxu0 0.0
    %2146 = vmatpush1.msra.mxu0 %v2058
    %2147 = vmatprep.subr.mxu0 0.0
    %2148 = vmatpush1.msra.mxu0 %v2059
    %2149 = vmatprep.subr.mxu0 0.0
    %2150 = vmatpush1.msra.mxu0 %v2060
    %2151 = vmatprep.subr.mxu0 0.0
    %2152 = vmatpush1.msra.mxu0 0.0
    %2153 = vmatprep.subr.mxu0 0.0
    %2154 = vmatpush1.msra.mxu0 0.0
    %2155 = vmatprep.subr.mxu0 0.0
    %2156 = vmatpush1.msra.mxu0 0.0
    %2157 = vmatprep.subr.mxu0 0.0
    %2158 = vmatpush1.msra.mxu0 0.0
    %2159 = vmatprep.subr.mxu0 0.0
    %2160 = vmatpush1.msra.mxu0 0.0
    %2161 = vmatprep.subr.mxu0 0.0
    %2162 = vmatpush1.msra.mxu0 0.0
    %2163 = vmatprep.subr.mxu0 0.0
    %2164 = vmatpush1.msra.mxu0 0.0
    %2165 = vmatprep.subr.mxu0 0.0
    %2166 = vmatpush1.msra.mxu0 0.0
    %2167 = vmatprep.subr.mxu0 0.0
    %2168 = vmatpush1.msra.mxu0 0.0
    %2169 = vmatprep.subr.mxu0 0.0
    %2170 = vmatpush1.msra.mxu0 0.0
    %2171 = vmatprep.subr.mxu0 0.0
    %2172 = vmatpush1.msra.mxu0 0.0
    %2173 = vmatprep.subr.mxu0 0.0
    %2174 = vmatpush1.msra.mxu0 0.0
    %2175 = vmatprep.subr.mxu0 0.0
    %2176 = vmatpush1.msra.mxu0 0.0
    %2177 = vmatprep.subr.mxu0 0.0
    %2178 = vmatpush1.msra.mxu0 0.0
    %2179 = vmatprep.subr.mxu0 0.0
    %2180 = vmatpush1.msra.mxu0 0.0
    %2181 = vmatprep.subr.mxu0 0.0
    %2182 = vmatpush1.msra.mxu0 0.0
    %2183 = vmatprep.subr.mxu0 0.0
    %2184 = vmatpush1.msra.mxu0 0.0
    %2185 = vmatprep.subr.mxu0 0.0
    %2186 = vmatpush1.msra.mxu0 0.0
    %2187 = vmatprep.subr.mxu0 0.0
    %2188 = vmatpush1.msra.mxu0 0.0
    %2189 = vmatprep.subr.mxu0 0.0
    %2190 = vmatpush1.msra.mxu0 0.0
    %2191 = vmatprep.subr.mxu0 0.0
    %2192 = vmatpush1.msra.mxu0 0.0
    %2193 = vmatprep.subr.mxu0 0.0
    %2194 = vmatpush1.msra.mxu0 0.0
    %2195 = vmatprep.subr.mxu0 0.0
    %2196 = vmatpush1.msra.mxu0 0.0
    %2197 = vmatprep.subr.mxu0 0.0
    %2198 = vmatpush1.msra.mxu0 0.0
    %2199 = vmatprep.subr.mxu0 0.0
    %2200 = vmatpush1.msra.mxu0 0.0
    %2201 = vmatprep.subr.mxu0 0.0
    %2202 = vmatpush1.msra.mxu0 0.0
    %2203 = vmatprep.subr.mxu0 0.0
    %2204 = vmatpush1.msra.mxu0 0.0
    %2205 = vmatprep.subr.mxu0 0.0
    %2206 = vmatpush1.msra.mxu0 0.0
    %2207 = vmatprep.mubr.f32.mxu0 0.0
    %2208 = vmatmul.mubr.f32.gmra.mrb[0].mxu0 %v2141
    %v2209 = vpop.f32.mrb[0].mxu0
    %v2210 = vadd.f32 %v2137, %v2209
    %v2211 = vpop.f32.mrb[0].mxu0
    %2212 = vdwg.mxu0
    %v2213 = vadd.f32 %v2210, %v84
    %v2214 = vtanh.pop %v2213
    %v2215 = vmul.f32 %v2213, 0.5
    %v2216 = vtanh.pop %v2215
    %v2217 = vmul.f32 %v2216, 0.5
    %v2218 = vadd.f32 %v2217, 0.5
    %v2219 = vmul.f32 %v2218, %v1871
    %2221 = vrot.lane.b32.xlu0 %v2214, 64
    %v2222 = vpop.permute.xlu0 %2221
    %v2224 = vmul.f32 %v2218, %v2222
    %2226 = vrot.lane.b32.xlu0 %v2224, 32
    %v2227 = vpop.permute.xlu0 %2226
    %v2229 = vadd.f32 %v2219, %v2227
    %v2230 = vtanh.pop %v2229
    %2232 = vrot.lane.b32.xlu0 %v2230, 64
    %v2233 = vpop.permute.xlu0 %2232
    %v2235 = vmul.f32 %v2218, %v2233
    %v2236 = vld [vmem:[%s445] sm:$0xff]
    %v2237 = vld [vmem:[%s445 + $0x8] sm:$0xff]
    %v2238 = vld [vmem:[%s445 + $0x10] sm:$0xff]
    %v2239 = vld [vmem:[%s445 + $0x18] sm:$0xff]
    %v2240 = vld [vmem:[%s450] sm:$0xff]
    %v2241 = vld [vmem:[%s450 + $0x8] sm:$0xff]
    %v2242 = vld [vmem:[%s450 + $0x10] sm:$0xff]
    %v2243 = vld [vmem:[%s450 + $0x18] sm:$0xff]
    %v2244 = vsel %vm103, %v2053, 0
    %2246 = vmatprep.subr.mxu0 0.0
    %2247 = vmatpush1.msra.mxu0 %v2240
    %2248 = vmatprep.subr.mxu0 0.0
    %2249 = vmatpush1.msra.mxu0 %v2241
    %2250 = vmatprep.subr.mxu0 0.0
    %2251 = vmatpush1.msra.mxu0 %v2242
    %2252 = vmatprep.subr.mxu0 0.0
    %2253 = vmatpush1.msra.mxu0 %v2243
    %2254 = vmatprep.subr.mxu0 0.0
    %2255 = vmatpush1.msra.mxu0 0.0
    %2256 = vmatprep.subr.mxu0 0.0
    %2257 = vmatpush1.msra.mxu0 0.0
    %2258 = vmatprep.subr.mxu0 0.0
    %2259 = vmatpush1.msra.mxu0 0.0
    %2260 = vmatprep.subr.mxu0 0.0
    %2261 = vmatpush1.msra.mxu0 0.0
    %2262 = vmatprep.subr.mxu0 0.0
    %2263 = vmatpush1.msra.mxu0 0.0
    %2264 = vmatprep.subr.mxu0 0.0
    %2265 = vmatpush1.msra.mxu0 0.0
    %2266 = vmatprep.subr.mxu0 0.0
    %2267 = vmatpush1.msra.mxu0 0.0
    %2268 = vmatprep.subr.mxu0 0.0
    %2269 = vmatpush1.msra.mxu0 0.0
    %2270 = vmatprep.subr.mxu0 0.0
    %2271 = vmatpush1.msra.mxu0 0.0
    %2272 = vmatprep.subr.mxu0 0.0
    %2273 = vmatpush1.msra.mxu0 0.0
    %2274 = vmatprep.subr.mxu0 0.0
    %2275 = vmatpush1.msra.mxu0 0.0
    %2276 = vmatprep.subr.mxu0 0.0
    %2277 = vmatpush1.msra.mxu0 0.0
    %2278 = vmatprep.subr.mxu0 0.0
    %2279 = vmatpush1.msra.mxu0 0.0
    %2280 = vmatprep.subr.mxu0 0.0
    %2281 = vmatpush1.msra.mxu0 0.0
    %2282 = vmatprep.subr.mxu0 0.0
    %2283 = vmatpush1.msra.mxu0 0.0
    %2284 = vmatprep.subr.mxu0 0.0
    %2285 = vmatpush1.msra.mxu0 0.0
    %2286 = vmatprep.subr.mxu0 0.0
    %2287 = vmatpush1.msra.mxu0 0.0
    %2288 = vmatprep.subr.mxu0 0.0
    %2289 = vmatpush1.msra.mxu0 0.0
    %2290 = vmatprep.subr.mxu0 0.0
    %2291 = vmatpush1.msra.mxu0 0.0
    %2292 = vmatprep.subr.mxu0 0.0
    %2293 = vmatpush1.msra.mxu0 0.0
    %2294 = vmatprep.subr.mxu0 0.0
    %2295 = vmatpush1.msra.mxu0 0.0
    %2296 = vmatprep.subr.mxu0 0.0
    %2297 = vmatpush1.msra.mxu0 0.0
    %2298 = vmatprep.subr.mxu0 0.0
    %2299 = vmatpush1.msra.mxu0 0.0
    %2300 = vmatprep.subr.mxu0 0.0
    %2301 = vmatpush1.msra.mxu0 0.0
    %2302 = vmatprep.subr.mxu0 0.0
    %2303 = vmatpush1.msra.mxu0 0.0
    %2304 = vmatprep.subr.mxu0 0.0
    %2305 = vmatpush1.msra.mxu0 0.0
    %2306 = vmatprep.subr.mxu0 0.0
    %2307 = vmatpush1.msra.mxu0 0.0
    %2308 = vmatprep.subr.mxu0 0.0
    %2309 = vmatpush1.msra.mxu0 0.0
    %2310 = vmatprep.mubr.f32.mxu0 0.0
    %2311 = vmatmul.mubr.f32.gmra.mrb[0].mxu0 %v2244
    %v2312 = vpop.f32.mrb[0].mxu0
    %v2313 = vadd.f32 0.0, %v2312
    %v2314 = vpop.f32.mrb[0].mxu0
    %2315 = vdwg.mxu0
    %2316 = vmatprep.subr.mxu0 0.0
    %2317 = vmatpush1.msra.mxu0 %v2236
    %2318 = vmatprep.subr.mxu0 0.0
    %2319 = vmatpush1.msra.mxu0 %v2237
    %2320 = vmatprep.subr.mxu0 0.0
    %2321 = vmatpush1.msra.mxu0 %v2238
    %2322 = vmatprep.subr.mxu0 0.0
    %2323 = vmatpush1.msra.mxu0 %v2239
    %2324 = vmatprep.subr.mxu0 0.0
    %2325 = vmatpush1.msra.mxu0 0.0
    %2326 = vmatprep.subr.mxu0 0.0
    %2327 = vmatpush1.msra.mxu0 0.0
    %2328 = vmatprep.subr.mxu0 0.0
    %2329 = vmatpush1.msra.mxu0 0.0
    %2330 = vmatprep.subr.mxu0 0.0
    %2331 = vmatpush1.msra.mxu0 0.0
    %2332 = vmatprep.subr.mxu0 0.0
    %2333 = vmatpush1.msra.mxu0 0.0
    %2334 = vmatprep.subr.mxu0 0.0
    %2335 = vmatpush1.msra.mxu0 0.0
    %2336 = vmatprep.subr.mxu0 0.0
    %2337 = vmatpush1.msra.mxu0 0.0
    %2338 = vmatprep.subr.mxu0 0.0
    %2339 = vmatpush1.msra.mxu0 0.0
    %2340 = vmatprep.subr.mxu0 0.0
    %2341 = vmatpush1.msra.mxu0 0.0
    %2342 = vmatprep.subr.mxu0 0.0
    %2343 = vmatpush1.msra.mxu0 0.0
    %2344 = vmatprep.subr.mxu0 0.0
    %2345 = vmatpush1.msra.mxu0 0.0
    %2346 = vmatprep.subr.mxu0 0.0
    %2347 = vmatpush1.msra.mxu0 0.0
    %2348 = vmatprep.subr.mxu0 0.0
    %2349 = vmatpush1.msra.mxu0 0.0
    %2350 = vmatprep.subr.mxu0 0.0
    %2351 = vmatpush1.msra.mxu0 0.0
    %2352 = vmatprep.subr.mxu0 0.0
    %2353 = vmatpush1.msra.mxu0 0.0
    %2354 = vmatprep.subr.mxu0 0.0
    %2355 = vmatpush1.msra.mxu0 0.0
    %2356 = vmatprep.subr.mxu0 0.0
    %2357 = vmatpush1.msra.mxu0 0.0
    %2358 = vmatprep.subr.mxu0 0.0
    %2359 = vmatpush1.msra.mxu0 0.0
    %2360 = vmatprep.subr.mxu0 0.0
    %2361 = vmatpush1.msra.mxu0 0.0
    %2362 = vmatprep.subr.mxu0 0.0
    %2363 = vmatpush1.msra.mxu0 0.0
    %2364 = vmatprep.subr.mxu0 0.0
    %2365 = vmatpush1.msra.mxu0 0.0
    %2366 = vmatprep.subr.mxu0 0.0
    %2367 = vmatpush1.msra.mxu0 0.0
    %2368 = vmatprep.subr.mxu0 0.0
    %2369 = vmatpush1.msra.mxu0 0.0
    %2370 = vmatprep.subr.mxu0 0.0
    %2371 = vmatpush1.msra.mxu0 0.0
    %2372 = vmatprep.subr.mxu0 0.0
    %2373 = vmatpush1.msra.mxu0 0.0
    %2374 = vmatprep.subr.mxu0 0.0
    %2375 = vmatpush1.msra.mxu0 0.0
    %2376 = vmatprep.subr.mxu0 0.0
    %2377 = vmatpush1.msra.mxu0 0.0
    %2378 = vmatprep.subr.mxu0 0.0
    %2379 = vmatpush1.msra.mxu0 0.0
    %2380 = vmatprep.mubr.f32.mxu0 0.0
    %2381 = vmatmul.mubr.f32.gmra.mrb[0].mxu0 %v2068
    %v2382 = vpop.f32.mrb[0].mxu0
    %v2383 = vadd.f32 %v2313, %v2382
    %v2384 = vpop.f32.mrb[0].mxu0
    %2385 = vdwg.mxu0
    %v2386 = vadd.f32 %v2383, %v92
    %v2387 = vtanh.pop %v2386
    %v2388 = vmul.f32 %v2386, 0.5
    %v2389 = vtanh.pop %v2388
    %v2390 = vmul.f32 %v2389, 0.5
    %v2391 = vadd.f32 %v2390, 0.5
    %v2392 = vmul.f32 %v2391, %v2044
    %2394 = vrot.lane.b32.xlu0 %v2387, 64
    %v2395 = vpop.permute.xlu0 %2394
    %v2397 = vmul.f32 %v2391, %v2395
    %2399 = vrot.lane.b32.xlu0 %v2397, 32
    %v2400 = vpop.permute.xlu0 %2399
    %v2402 = vadd.f32 %v2392, %v2400
    %v2403 = vtanh.pop %v2402
    %2405 = vrot.lane.b32.xlu0 %v2403, 64
    %v2406 = vpop.permute.xlu0 %2405
    %v2408 = vmul.f32 %v2391, %v2406
    %2410 = vrot.lane.b32.xlu0 %v2408, 32
    %v2411 = vpop.permute.xlu0 %2410
    %2413 = vst.msk [vmem:[#allocation2 + $0xa] sm:$0x3] %vm622, %v2411
    %v2414 = vld [vmem:[#allocation3 + $0xe] sm:$0x3]
    %v2415 = vld [vmem:[#allocation6] sm:$0xff]
    %v2416 = vld [vmem:[#allocation6 + $0x8] sm:$0xff]
    %v2417 = vld [vmem:[#allocation6 + $0x10] sm:$0xff]
    %v2418 = vld [vmem:[#allocation6 + $0x18] sm:$0xff]
    %v2419 = vld [vmem:[#allocation8] sm:$0xff]
    %v2420 = vld [vmem:[#allocation8 + $0x8] sm:$0xff]
    %v2421 = vld [vmem:[#allocation8 + $0x10] sm:$0xff]
    %v2422 = vld [vmem:[#allocation8 + $0x18] sm:$0xff]
    %2424 = vrot.lane.b32.xlu0 %v2235, 32
    %v2425 = vpop.permute.xlu0 %2424
    %v2426 = vsel %vm103, %v2425, 0
    %2428 = vmatprep.subr.mxu0 0.0
    %2429 = vmatpush1.msra.mxu0 %v2419
    %2430 = vmatprep.subr.mxu0 0.0
    %2431 = vmatpush1.msra.mxu0 %v2420
    %2432 = vmatprep.subr.mxu0 0.0
    %2433 = vmatpush1.msra.mxu0 %v2421
    %2434 = vmatprep.subr.mxu0 0.0
    %2435 = vmatpush1.msra.mxu0 %v2422
    %2436 = vmatprep.subr.mxu0 0.0
    %2437 = vmatpush1.msra.mxu0 0.0
    %2438 = vmatprep.subr.mxu0 0.0
    %2439 = vmatpush1.msra.mxu0 0.0
    %2440 = vmatprep.subr.mxu0 0.0
    %2441 = vmatpush1.msra.mxu0 0.0
    %2442 = vmatprep.subr.mxu0 0.0
    %2443 = vmatpush1.msra.mxu0 0.0
    %2444 = vmatprep.subr.mxu0 0.0
    %2445 = vmatpush1.msra.mxu0 0.0
    %2446 = vmatprep.subr.mxu0 0.0
    %2447 = vmatpush1.msra.mxu0 0.0
    %2448 = vmatprep.subr.mxu0 0.0
    %2449 = vmatpush1.msra.mxu0 0.0
    %2450 = vmatprep.subr.mxu0 0.0
    %2451 = vmatpush1.msra.mxu0 0.0
    %2452 = vmatprep.subr.mxu0 0.0
    %2453 = vmatpush1.msra.mxu0 0.0
    %2454 = vmatprep.subr.mxu0 0.0
    %2455 = vmatpush1.msra.mxu0 0.0
    %2456 = vmatprep.subr.mxu0 0.0
    %2457 = vmatpush1.msra.mxu0 0.0
    %2458 = vmatprep.subr.mxu0 0.0
    %2459 = vmatpush1.msra.mxu0 0.0
    %2460 = vmatprep.subr.mxu0 0.0
    %2461 = vmatpush1.msra.mxu0 0.0
    %2462 = vmatprep.subr.mxu0 0.0
    %2463 = vmatpush1.msra.mxu0 0.0
    %2464 = vmatprep.subr.mxu0 0.0
    %2465 = vmatpush1.msra.mxu0 0.0
    %2466 = vmatprep.subr.mxu0 0.0
    %2467 = vmatpush1.msra.mxu0 0.0
    %2468 = vmatprep.subr.mxu0 0.0
    %2469 = vmatpush1.msra.mxu0 0.0
    %2470 = vmatprep.subr.mxu0 0.0
    %2471 = vmatpush1.msra.mxu0 0.0
    %2472 = vmatprep.subr.mxu0 0.0
    %2473 = vmatpush1.msra.mxu0 0.0
    %2474 = vmatprep.subr.mxu0 0.0
    %2475 = vmatpush1.msra.mxu0 0.0
    %2476 = vmatprep.subr.mxu0 0.0
    %2477 = vmatpush1.msra.mxu0 0.0
    %2478 = vmatprep.subr.mxu0 0.0
    %2479 = vmatpush1.msra.mxu0 0.0
    %2480 = vmatprep.subr.mxu0 0.0
    %2481 = vmatpush1.msra.mxu0 0.0
    %2482 = vmatprep.subr.mxu0 0.0
    %2483 = vmatpush1.msra.mxu0 0.0
    %2484 = vmatprep.subr.mxu0 0.0
    %2485 = vmatpush1.msra.mxu0 0.0
    %2486 = vmatprep.subr.mxu0 0.0
    %2487 = vmatpush1.msra.mxu0 0.0
    %2488 = vmatprep.subr.mxu0 0.0
    %2489 = vmatpush1.msra.mxu0 0.0
    %2490 = vmatprep.subr.mxu0 0.0
    %2491 = vmatpush1.msra.mxu0 0.0
    %2492 = vmatprep.mubr.f32.mxu0 0.0
    %2493 = vmatmul.mubr.f32.gmra.mrb[0].mxu0 %v2426
    %v2494 = vpop.f32.mrb[0].mxu0
    %v2495 = vadd.f32 0.0, %v2494
    %v2496 = vpop.f32.mrb[0].mxu0
    %2497 = vdwg.mxu0
    %v2499 = vsel %vm103, %v2414, 0
    %2501 = vmatprep.subr.mxu0 0.0
    %2502 = vmatpush1.msra.mxu0 %v2415
    %2503 = vmatprep.subr.mxu0 0.0
    %2504 = vmatpush1.msra.mxu0 %v2416
    %2505 = vmatprep.subr.mxu0 0.0
    %2506 = vmatpush1.msra.mxu0 %v2417
    %2507 = vmatprep.subr.mxu0 0.0
    %2508 = vmatpush1.msra.mxu0 %v2418
    %2509 = vmatprep.subr.mxu0 0.0
    %2510 = vmatpush1.msra.mxu0 0.0
    %2511 = vmatprep.subr.mxu0 0.0
    %2512 = vmatpush1.msra.mxu0 0.0
    %2513 = vmatprep.subr.mxu0 0.0
    %2514 = vmatpush1.msra.mxu0 0.0
    %2515 = vmatprep.subr.mxu0 0.0
    %2516 = vmatpush1.msra.mxu0 0.0
    %2517 = vmatprep.subr.mxu0 0.0
    %2518 = vmatpush1.msra.mxu0 0.0
    %2519 = vmatprep.subr.mxu0 0.0
    %2520 = vmatpush1.msra.mxu0 0.0
    %2521 = vmatprep.subr.mxu0 0.0
    %2522 = vmatpush1.msra.mxu0 0.0
    %2523 = vmatprep.subr.mxu0 0.0
    %2524 = vmatpush1.msra.mxu0 0.0
    %2525 = vmatprep.subr.mxu0 0.0
    %2526 = vmatpush1.msra.mxu0 0.0
    %2527 = vmatprep.subr.mxu0 0.0
    %2528 = vmatpush1.msra.mxu0 0.0
    %2529 = vmatprep.subr.mxu0 0.0
    %2530 = vmatpush1.msra.mxu0 0.0
    %2531 = vmatprep.subr.mxu0 0.0
    %2532 = vmatpush1.msra.mxu0 0.0
    %2533 = vmatprep.subr.mxu0 0.0
    %2534 = vmatpush1.msra.mxu0 0.0
    %2535 = vmatprep.subr.mxu0 0.0
    %2536 = vmatpush1.msra.mxu0 0.0
    %2537 = vmatprep.subr.mxu0 0.0
    %2538 = vmatpush1.msra.mxu0 0.0
    %2539 = vmatprep.subr.mxu0 0.0
    %2540 = vmatpush1.msra.mxu0 0.0
    %2541 = vmatprep.subr.mxu0 0.0
    %2542 = vmatpush1.msra.mxu0 0.0
    %2543 = vmatprep.subr.mxu0 0.0
    %2544 = vmatpush1.msra.mxu0 0.0
    %2545 = vmatprep.subr.mxu0 0.0
    %2546 = vmatpush1.msra.mxu0 0.0
    %2547 = vmatprep.subr.mxu0 0.0
    %2548 = vmatpush1.msra.mxu0 0.0
    %2549 = vmatprep.subr.mxu0 0.0
    %2550 = vmatpush1.msra.mxu0 0.0
    %2551 = vmatprep.subr.mxu0 0.0
    %2552 = vmatpush1.msra.mxu0 0.0
    %2553 = vmatprep.subr.mxu0 0.0
    %2554 = vmatpush1.msra.mxu0 0.0
    %2555 = vmatprep.subr.mxu0 0.0
    %2556 = vmatpush1.msra.mxu0 0.0
    %2557 = vmatprep.subr.mxu0 0.0
    %2558 = vmatpush1.msra.mxu0 0.0
    %2559 = vmatprep.subr.mxu0 0.0
    %2560 = vmatpush1.msra.mxu0 0.0
    %2561 = vmatprep.subr.mxu0 0.0
    %2562 = vmatpush1.msra.mxu0 0.0
    %2563 = vmatprep.subr.mxu0 0.0
    %2564 = vmatpush1.msra.mxu0 0.0
    %2565 = vmatprep.mubr.f32.mxu0 0.0
    %2566 = vmatmul.mubr.f32.gmra.mrb[0].mxu0 %v2499
    %v2567 = vpop.f32.mrb[0].mxu0
    %v2568 = vadd.f32 %v2495, %v2567
    %v2569 = vpop.f32.mrb[0].mxu0
    %2570 = vdwg.mxu0
    %v2571 = vadd.f32 %v2568, %v84
    %v2572 = vtanh.pop %v2571
    %v2573 = vmul.f32 %v2571, 0.5
    %v2574 = vtanh.pop %v2573
    %v2575 = vmul.f32 %v2574, 0.5
    %v2576 = vadd.f32 %v2575, 0.5
    %v2577 = vmul.f32 %v2576, %v2229
    %2579 = vrot.lane.b32.xlu0 %v2572, 64
    %v2580 = vpop.permute.xlu0 %2579
    %v2582 = vmul.f32 %v2576, %v2580
    %2584 = vrot.lane.b32.xlu0 %v2582, 32
    %v2585 = vpop.permute.xlu0 %2584
    %v2587 = vadd.f32 %v2577, %v2585
    %v2588 = vtanh.pop %v2587
    %2590 = vrot.lane.b32.xlu0 %v2588, 64
    %v2591 = vpop.permute.xlu0 %2590
    %v2593 = vmul.f32 %v2576, %v2591
    %v2594 = vld [vmem:[%s445] sm:$0xff]
    %v2595 = vld [vmem:[%s445 + $0x8] sm:$0xff]
    %v2596 = vld [vmem:[%s445 + $0x10] sm:$0xff]
    %v2597 = vld [vmem:[%s445 + $0x18] sm:$0xff]
    %v2598 = vld [vmem:[%s450] sm:$0xff]
    %v2599 = vld [vmem:[%s450 + $0x8] sm:$0xff]
    %v2600 = vld [vmem:[%s450 + $0x10] sm:$0xff]
    %v2601 = vld [vmem:[%s450 + $0x18] sm:$0xff]
    %v2602 = vsel %vm103, %v2411, 0
    %2604 = vmatprep.subr.mxu0 0.0
    %2605 = vmatpush1.msra.mxu0 %v2598
    %2606 = vmatprep.subr.mxu0 0.0
    %2607 = vmatpush1.msra.mxu0 %v2599
    %2608 = vmatprep.subr.mxu0 0.0
    %2609 = vmatpush1.msra.mxu0 %v2600
    %2610 = vmatprep.subr.mxu0 0.0
    %2611 = vmatpush1.msra.mxu0 %v2601
    %2612 = vmatprep.subr.mxu0 0.0
    %2613 = vmatpush1.msra.mxu0 0.0
    %2614 = vmatprep.subr.mxu0 0.0
    %2615 = vmatpush1.msra.mxu0 0.0
    %2616 = vmatprep.subr.mxu0 0.0
    %2617 = vmatpush1.msra.mxu0 0.0
    %2618 = vmatprep.subr.mxu0 0.0
    %2619 = vmatpush1.msra.mxu0 0.0
    %2620 = vmatprep.subr.mxu0 0.0
    %2621 = vmatpush1.msra.mxu0 0.0
    %2622 = vmatprep.subr.mxu0 0.0
    %2623 = vmatpush1.msra.mxu0 0.0
    %2624 = vmatprep.subr.mxu0 0.0
    %2625 = vmatpush1.msra.mxu0 0.0
    %2626 = vmatprep.subr.mxu0 0.0
    %2627 = vmatpush1.msra.mxu0 0.0
    %2628 = vmatprep.subr.mxu0 0.0
    %2629 = vmatpush1.msra.mxu0 0.0
    %2630 = vmatprep.subr.mxu0 0.0
    %2631 = vmatpush1.msra.mxu0 0.0
    %2632 = vmatprep.subr.mxu0 0.0
    %2633 = vmatpush1.msra.mxu0 0.0
    %2634 = vmatprep.subr.mxu0 0.0
    %2635 = vmatpush1.msra.mxu0 0.0
    %2636 = vmatprep.subr.mxu0 0.0
    %2637 = vmatpush1.msra.mxu0 0.0
    %2638 = vmatprep.subr.mxu0 0.0
    %2639 = vmatpush1.msra.mxu0 0.0
    %2640 = vmatprep.subr.mxu0 0.0
    %2641 = vmatpush1.msra.mxu0 0.0
    %2642 = vmatprep.subr.mxu0 0.0
    %2643 = vmatpush1.msra.mxu0 0.0
    %2644 = vmatprep.subr.mxu0 0.0
    %2645 = vmatpush1.msra.mxu0 0.0
    %2646 = vmatprep.subr.mxu0 0.0
    %2647 = vmatpush1.msra.mxu0 0.0
    %2648 = vmatprep.subr.mxu0 0.0
    %2649 = vmatpush1.msra.mxu0 0.0
    %2650 = vmatprep.subr.mxu0 0.0
    %2651 = vmatpush1.msra.mxu0 0.0
    %2652 = vmatprep.subr.mxu0 0.0
    %2653 = vmatpush1.msra.mxu0 0.0
    %2654 = vmatprep.subr.mxu0 0.0
    %2655 = vmatpush1.msra.mxu0 0.0
    %2656 = vmatprep.subr.mxu0 0.0
    %2657 = vmatpush1.msra.mxu0 0.0
    %2658 = vmatprep.subr.mxu0 0.0
    %2659 = vmatpush1.msra.mxu0 0.0
    %2660 = vmatprep.subr.mxu0 0.0
    %2661 = vmatpush1.msra.mxu0 0.0
    %2662 = vmatprep.subr.mxu0 0.0
    %2663 = vmatpush1.msra.mxu0 0.0
    %2664 = vmatprep.subr.mxu0 0.0
    %2665 = vmatpush1.msra.mxu0 0.0
    %2666 = vmatprep.subr.mxu0 0.0
    %2667 = vmatpush1.msra.mxu0 0.0
    %2668 = vmatprep.mubr.f32.mxu0 0.0
    %2669 = vmatmul.mubr.f32.gmra.mrb[0].mxu0 %v2602
    %v2670 = vpop.f32.mrb[0].mxu0
    %v2671 = vadd.f32 0.0, %v2670
    %v2672 = vpop.f32.mrb[0].mxu0
    %2673 = vdwg.mxu0
    %2674 = vmatprep.subr.mxu0 0.0
    %2675 = vmatpush1.msra.mxu0 %v2594
    %2676 = vmatprep.subr.mxu0 0.0
    %2677 = vmatpush1.msra.mxu0 %v2595
    %2678 = vmatprep.subr.mxu0 0.0
    %2679 = vmatpush1.msra.mxu0 %v2596
    %2680 = vmatprep.subr.mxu0 0.0
    %2681 = vmatpush1.msra.mxu0 %v2597
    %2682 = vmatprep.subr.mxu0 0.0
    %2683 = vmatpush1.msra.mxu0 0.0
    %2684 = vmatprep.subr.mxu0 0.0
    %2685 = vmatpush1.msra.mxu0 0.0
    %2686 = vmatprep.subr.mxu0 0.0
    %2687 = vmatpush1.msra.mxu0 0.0
    %2688 = vmatprep.subr.mxu0 0.0
    %2689 = vmatpush1.msra.mxu0 0.0
    %2690 = vmatprep.subr.mxu0 0.0
    %2691 = vmatpush1.msra.mxu0 0.0
    %2692 = vmatprep.subr.mxu0 0.0
    %2693 = vmatpush1.msra.mxu0 0.0
    %2694 = vmatprep.subr.mxu0 0.0
    %2695 = vmatpush1.msra.mxu0 0.0
    %2696 = vmatprep.subr.mxu0 0.0
    %2697 = vmatpush1.msra.mxu0 0.0
    %2698 = vmatprep.subr.mxu0 0.0
    %2699 = vmatpush1.msra.mxu0 0.0
    %2700 = vmatprep.subr.mxu0 0.0
    %2701 = vmatpush1.msra.mxu0 0.0
    %2702 = vmatprep.subr.mxu0 0.0
    %2703 = vmatpush1.msra.mxu0 0.0
    %2704 = vmatprep.subr.mxu0 0.0
    %2705 = vmatpush1.msra.mxu0 0.0
    %2706 = vmatprep.subr.mxu0 0.0
    %2707 = vmatpush1.msra.mxu0 0.0
    %2708 = vmatprep.subr.mxu0 0.0
    %2709 = vmatpush1.msra.mxu0 0.0
    %2710 = vmatprep.subr.mxu0 0.0
    %2711 = vmatpush1.msra.mxu0 0.0
    %2712 = vmatprep.subr.mxu0 0.0
    %2713 = vmatpush1.msra.mxu0 0.0
    %2714 = vmatprep.subr.mxu0 0.0
    %2715 = vmatpush1.msra.mxu0 0.0
    %2716 = vmatprep.subr.mxu0 0.0
    %2717 = vmatpush1.msra.mxu0 0.0
    %2718 = vmatprep.subr.mxu0 0.0
    %2719 = vmatpush1.msra.mxu0 0.0
    %2720 = vmatprep.subr.mxu0 0.0
    %2721 = vmatpush1.msra.mxu0 0.0
    %2722 = vmatprep.subr.mxu0 0.0
    %2723 = vmatpush1.msra.mxu0 0.0
    %2724 = vmatprep.subr.mxu0 0.0
    %2725 = vmatpush1.msra.mxu0 0.0
    %2726 = vmatprep.subr.mxu0 0.0
    %2727 = vmatpush1.msra.mxu0 0.0
    %2728 = vmatprep.subr.mxu0 0.0
    %2729 = vmatpush1.msra.mxu0 0.0
    %2730 = vmatprep.subr.mxu0 0.0
    %2731 = vmatpush1.msra.mxu0 0.0
    %2732 = vmatprep.subr.mxu0 0.0
    %2733 = vmatpush1.msra.mxu0 0.0
    %2734 = vmatprep.subr.mxu0 0.0
    %2735 = vmatpush1.msra.mxu0 0.0
    %2736 = vmatprep.subr.mxu0 0.0
    %2737 = vmatpush1.msra.mxu0 0.0
    %2738 = vmatprep.mubr.f32.mxu0 0.0
    %2739 = vmatmul.mubr.f32.gmra.mrb[0].mxu0 %v2426
    %v2740 = vpop.f32.mrb[0].mxu0
    %v2741 = vadd.f32 %v2671, %v2740
    %v2742 = vpop.f32.mrb[0].mxu0
    %2743 = vdwg.mxu0
    %v2744 = vadd.f32 %v2741, %v92
    %v2745 = vtanh.pop %v2744
    %v2746 = vmul.f32 %v2744, 0.5
    %v2747 = vtanh.pop %v2746
    %v2748 = vmul.f32 %v2747, 0.5
    %v2749 = vadd.f32 %v2748, 0.5
    %v2750 = vmul.f32 %v2749, %v2402
    %2752 = vrot.lane.b32.xlu0 %v2745, 64
    %v2753 = vpop.permute.xlu0 %2752
    %v2755 = vmul.f32 %v2749, %v2753
    %2757 = vrot.lane.b32.xlu0 %v2755, 32
    %v2758 = vpop.permute.xlu0 %2757
    %v2760 = vadd.f32 %v2750, %v2758
    %v2761 = vtanh.pop %v2760
    %2763 = vrot.lane.b32.xlu0 %v2761, 64
    %v2764 = vpop.permute.xlu0 %2763
    %v2766 = vmul.f32 %v2749, %v2764
    %2768 = vrot.lane.b32.xlu0 %v2766, 32
    %v2769 = vpop.permute.xlu0 %2768
    %2771 = vst.msk [vmem:[#allocation2 + $0xc] sm:$0x3] %vm622, %v2769
    %v2772 = vld [vmem:[%s445] sm:$0xff]
    %v2773 = vld [vmem:[%s445 + $0x8] sm:$0xff]
    %v2774 = vld [vmem:[%s445 + $0x10] sm:$0xff]
    %v2775 = vld [vmem:[%s445 + $0x18] sm:$0xff]
    %v2776 = vld [vmem:[%s450] sm:$0xff]
    %v2777 = vld [vmem:[%s450 + $0x8] sm:$0xff]
    %v2778 = vld [vmem:[%s450 + $0x10] sm:$0xff]
    %v2779 = vld [vmem:[%s450 + $0x18] sm:$0xff]
    %v2780 = vsel %vm103, %v2769, 0
    %2782 = vmatprep.subr.mxu0 0.0
    %2783 = vmatpush1.msra.mxu0 %v2776
    %2784 = vmatprep.subr.mxu0 0.0
    %2785 = vmatpush1.msra.mxu0 %v2777
    %2786 = vmatprep.subr.mxu0 0.0
    %2787 = vmatpush1.msra.mxu0 %v2778
    %2788 = vmatprep.subr.mxu0 0.0
    %2789 = vmatpush1.msra.mxu0 %v2779
    %2790 = vmatprep.subr.mxu0 0.0
    %2791 = vmatpush1.msra.mxu0 0.0
    %2792 = vmatprep.subr.mxu0 0.0
    %2793 = vmatpush1.msra.mxu0 0.0
    %2794 = vmatprep.subr.mxu0 0.0
    %2795 = vmatpush1.msra.mxu0 0.0
    %2796 = vmatprep.subr.mxu0 0.0
    %2797 = vmatpush1.msra.mxu0 0.0
    %2798 = vmatprep.subr.mxu0 0.0
    %2799 = vmatpush1.msra.mxu0 0.0
    %2800 = vmatprep.subr.mxu0 0.0
    %2801 = vmatpush1.msra.mxu0 0.0
    %2802 = vmatprep.subr.mxu0 0.0
    %2803 = vmatpush1.msra.mxu0 0.0
    %2804 = vmatprep.subr.mxu0 0.0
    %2805 = vmatpush1.msra.mxu0 0.0
    %2806 = vmatprep.subr.mxu0 0.0
    %2807 = vmatpush1.msra.mxu0 0.0
    %2808 = vmatprep.subr.mxu0 0.0
    %2809 = vmatpush1.msra.mxu0 0.0
    %2810 = vmatprep.subr.mxu0 0.0
    %2811 = vmatpush1.msra.mxu0 0.0
    %2812 = vmatprep.subr.mxu0 0.0
    %2813 = vmatpush1.msra.mxu0 0.0
    %2814 = vmatprep.subr.mxu0 0.0
    %2815 = vmatpush1.msra.mxu0 0.0
    %2816 = vmatprep.subr.mxu0 0.0
    %2817 = vmatpush1.msra.mxu0 0.0
    %2818 = vmatprep.subr.mxu0 0.0
    %2819 = vmatpush1.msra.mxu0 0.0
    %2820 = vmatprep.subr.mxu0 0.0
    %2821 = vmatpush1.msra.mxu0 0.0
    %2822 = vmatprep.subr.mxu0 0.0
    %2823 = vmatpush1.msra.mxu0 0.0
    %2824 = vmatprep.subr.mxu0 0.0
    %2825 = vmatpush1.msra.mxu0 0.0
    %2826 = vmatprep.subr.mxu0 0.0
    %2827 = vmatpush1.msra.mxu0 0.0
    %2828 = vmatprep.subr.mxu0 0.0
    %2829 = vmatpush1.msra.mxu0 0.0
    %2830 = vmatprep.subr.mxu0 0.0
    %2831 = vmatpush1.msra.mxu0 0.0
    %2832 = vmatprep.subr.mxu0 0.0
    %2833 = vmatpush1.msra.mxu0 0.0
    %2834 = vmatprep.subr.mxu0 0.0
    %2835 = vmatpush1.msra.mxu0 0.0
    %2836 = vmatprep.subr.mxu0 0.0
    %2837 = vmatpush1.msra.mxu0 0.0
    %2838 = vmatprep.subr.mxu0 0.0
    %2839 = vmatpush1.msra.mxu0 0.0
    %2840 = vmatprep.subr.mxu0 0.0
    %2841 = vmatpush1.msra.mxu0 0.0
    %2842 = vmatprep.subr.mxu0 0.0
    %2843 = vmatpush1.msra.mxu0 0.0
    %2844 = vmatprep.subr.mxu0 0.0
    %2845 = vmatpush1.msra.mxu0 0.0
    %2846 = vmatprep.mubr.f32.mxu0 0.0
    %2847 = vmatmul.mubr.f32.gmra.mrb[0].mxu0 %v2780
    %v2848 = vpop.f32.mrb[0].mxu0
    %v2849 = vadd.f32 0.0, %v2848
    %v2850 = vpop.f32.mrb[0].mxu0
    %2851 = vdwg.mxu0
    %2853 = vrot.lane.b32.xlu0 %v2593, 32
    %v2854 = vpop.permute.xlu0 %2853
    %v2855 = vsel %vm103, %v2854, 0
    %2857 = vmatprep.subr.mxu0 0.0
    %2858 = vmatpush1.msra.mxu0 %v2772
    %2859 = vmatprep.subr.mxu0 0.0
    %2860 = vmatpush1.msra.mxu0 %v2773
    %2861 = vmatprep.subr.mxu0 0.0
    %2862 = vmatpush1.msra.mxu0 %v2774
    %2863 = vmatprep.subr.mxu0 0.0
    %2864 = vmatpush1.msra.mxu0 %v2775
    %2865 = vmatprep.subr.mxu0 0.0
    %2866 = vmatpush1.msra.mxu0 0.0
    %2867 = vmatprep.subr.mxu0 0.0
    %2868 = vmatpush1.msra.mxu0 0.0
    %2869 = vmatprep.subr.mxu0 0.0
    %2870 = vmatpush1.msra.mxu0 0.0
    %2871 = vmatprep.subr.mxu0 0.0
    %2872 = vmatpush1.msra.mxu0 0.0
    %2873 = vmatprep.subr.mxu0 0.0
    %2874 = vmatpush1.msra.mxu0 0.0
    %2875 = vmatprep.subr.mxu0 0.0
    %2876 = vmatpush1.msra.mxu0 0.0
    %2877 = vmatprep.subr.mxu0 0.0
    %2878 = vmatpush1.msra.mxu0 0.0
    %2879 = vmatprep.subr.mxu0 0.0
    %2880 = vmatpush1.msra.mxu0 0.0
    %2881 = vmatprep.subr.mxu0 0.0
    %2882 = vmatpush1.msra.mxu0 0.0
    %2883 = vmatprep.subr.mxu0 0.0
    %2884 = vmatpush1.msra.mxu0 0.0
    %2885 = vmatprep.subr.mxu0 0.0
    %2886 = vmatpush1.msra.mxu0 0.0
    %2887 = vmatprep.subr.mxu0 0.0
    %2888 = vmatpush1.msra.mxu0 0.0
    %2889 = vmatprep.subr.mxu0 0.0
    %2890 = vmatpush1.msra.mxu0 0.0
    %2891 = vmatprep.subr.mxu0 0.0
    %2892 = vmatpush1.msra.mxu0 0.0
    %2893 = vmatprep.subr.mxu0 0.0
    %2894 = vmatpush1.msra.mxu0 0.0
    %2895 = vmatprep.subr.mxu0 0.0
    %2896 = vmatpush1.msra.mxu0 0.0
    %2897 = vmatprep.subr.mxu0 0.0
    %2898 = vmatpush1.msra.mxu0 0.0
    %2899 = vmatprep.subr.mxu0 0.0
    %2900 = vmatpush1.msra.mxu0 0.0
    %2901 = vmatprep.subr.mxu0 0.0
    %2902 = vmatpush1.msra.mxu0 0.0
    %2903 = vmatprep.subr.mxu0 0.0
    %2904 = vmatpush1.msra.mxu0 0.0
    %2905 = vmatprep.subr.mxu0 0.0
    %2906 = vmatpush1.msra.mxu0 0.0
    %2907 = vmatprep.subr.mxu0 0.0
    %2908 = vmatpush1.msra.mxu0 0.0
    %2909 = vmatprep.subr.mxu0 0.0
    %2910 = vmatpush1.msra.mxu0 0.0
    %2911 = vmatprep.subr.mxu0 0.0
    %2912 = vmatpush1.msra.mxu0 0.0
    %2913 = vmatprep.subr.mxu0 0.0
    %2914 = vmatpush1.msra.mxu0 0.0
    %2915 = vmatprep.subr.mxu0 0.0
    %2916 = vmatpush1.msra.mxu0 0.0
    %2917 = vmatprep.subr.mxu0 0.0
    %2918 = vmatpush1.msra.mxu0 0.0
    %2919 = vmatprep.subr.mxu0 0.0
    %2920 = vmatpush1.msra.mxu0 0.0
    %2921 = vmatprep.mubr.f32.mxu0 0.0
    %2922 = vmatmul.mubr.f32.gmra.mrb[0].mxu0 %v2855
    %v2923 = vpop.f32.mrb[0].mxu0
    %v2924 = vadd.f32 %v2849, %v2923
    %v2925 = vpop.f32.mrb[0].mxu0
    %2926 = vdwg.mxu0
    %v2927 = vadd.f32 %v2924, %v92
    %v2928 = vtanh.pop %v2927
    %v2929 = vmul.f32 %v2927, 0.5
    %v2930 = vtanh.pop %v2929
    %v2931 = vmul.f32 %v2930, 0.5
    %v2932 = vadd.f32 %v2931, 0.5
    %v2933 = vmul.f32 %v2932, %v2760
    %2935 = vrot.lane.b32.xlu0 %v2928, 64
    %v2936 = vpop.permute.xlu0 %2935
    %v2938 = vmul.f32 %v2932, %v2936
    %2940 = vrot.lane.b32.xlu0 %v2938, 32
    %v2941 = vpop.permute.xlu0 %2940
    %v2943 = vadd.f32 %v2933, %v2941
    %v2944 = vtanh.pop %v2943
    %2946 = vrot.lane.b32.xlu0 %v2944, 64
    %v2947 = vpop.permute.xlu0 %2946
    %v2949 = vmul.f32 %v2932, %v2947
    %2951 = vrot.lane.b32.xlu0 %v2949, 32
    %v2952 = vpop.permute.xlu0 %2951
    %2954 = vst.msk [vmem:[#allocation2 + $0xe] sm:$0x3] %vm622, %v2952
    %v2955 = vld [vmem:[#allocation2] sm:$0xff]
    %v2956 = vld [vmem:[#allocation2 + $0x8] sm:$0xff]
    %v2957 = vld [vmem:[#allocation9] sm:$0xff]
    %v2958 = vld [vmem:[#allocation9 + $0x8] sm:$0xff]
    %v2959 = vld [vmem:[#allocation9 + $0x10] sm:$0xff]
    %v2960 = vld [vmem:[#allocation9 + $0x18] sm:$0xff]
    %v2961 = vld [vmem:[%s5] sm:$0x1]
    %v2963 = vlaneseq
    %v2964 = vshrl.u32 %v2963, 7
    %v2965 = vsub.s32 0, %v2964
    %v2966 = vrot.slane %v2961, %v2965
    %v2969 = vsel %vm103, %v2955, 0
    %v2972 = vsel %vm103, %v2956, 0
    %2974 = vmatprep.subr.mxu0 0.0
    %2975 = vmatpush1.msra.mxu0 %v2957
    %2976 = vmatprep.subr.mxu0 0.0
    %2977 = vmatpush1.msra.mxu0 %v2958
    %2978 = vmatprep.subr.mxu0 0.0
    %2979 = vmatpush1.msra.mxu0 %v2959
    %2980 = vmatprep.subr.mxu0 0.0
    %2981 = vmatpush1.msra.mxu0 %v2960
    %2982 = vmatprep.subr.mxu0 0.0
    %2983 = vmatpush1.msra.mxu0 0.0
    %2984 = vmatprep.subr.mxu0 0.0
    %2985 = vmatpush1.msra.mxu0 0.0
    %2986 = vmatprep.subr.mxu0 0.0
    %2987 = vmatpush1.msra.mxu0 0.0
    %2988 = vmatprep.subr.mxu0 0.0
    %2989 = vmatpush1.msra.mxu0 0.0
    %2990 = vmatprep.subr.mxu0 0.0
    %2991 = vmatpush1.msra.mxu0 0.0
    %2992 = vmatprep.subr.mxu0 0.0
    %2993 = vmatpush1.msra.mxu0 0.0
    %2994 = vmatprep.subr.mxu0 0.0
    %2995 = vmatpush1.msra.mxu0 0.0
    %2996 = vmatprep.subr.mxu0 0.0
    %2997 = vmatpush1.msra.mxu0 0.0
    %2998 = vmatprep.subr.mxu0 0.0
    %2999 = vmatpush1.msra.mxu0 0.0
    %3000 = vmatprep.subr.mxu0 0.0
    %3001 = vmatpush1.msra.mxu0 0.0
    %3002 = vmatprep.subr.mxu0 0.0
    %3003 = vmatpush1.msra.mxu0 0.0
    %3004 = vmatprep.subr.mxu0 0.0
    %3005 = vmatpush1.msra.mxu0 0.0
    %3006 = vmatprep.subr.mxu0 0.0
    %3007 = vmatpush1.msra.mxu0 0.0
    %3008 = vmatprep.subr.mxu0 0.0
    %3009 = vmatpush1.msra.mxu0 0.0
    %3010 = vmatprep.subr.mxu0 0.0
    %3011 = vmatpush1.msra.mxu0 0.0
    %3012 = vmatprep.subr.mxu0 0.0
    %3013 = vmatpush1.msra.mxu0 0.0
    %3014 = vmatprep.subr.mxu0 0.0
    %3015 = vmatpush1.msra.mxu0 0.0
    %3016 = vmatprep.subr.mxu0 0.0
    %3017 = vmatpush1.msra.mxu0 0.0
    %3018 = vmatprep.subr.mxu0 0.0
    %3019 = vmatpush1.msra.mxu0 0.0
    %3020 = vmatprep.subr.mxu0 0.0
    %3021 = vmatpush1.msra.mxu0 0.0
    %3022 = vmatprep.subr.mxu0 0.0
    %3023 = vmatpush1.msra.mxu0 0.0
    %3024 = vmatprep.subr.mxu0 0.0
    %3025 = vmatpush1.msra.mxu0 0.0
    %3026 = vmatprep.subr.mxu0 0.0
    %3027 = vmatpush1.msra.mxu0 0.0
    %3028 = vmatprep.subr.mxu0 0.0
    %3029 = vmatpush1.msra.mxu0 0.0
    %3030 = vmatprep.subr.mxu0 0.0
    %3031 = vmatpush1.msra.mxu0 0.0
    %3032 = vmatprep.subr.mxu0 0.0
    %3033 = vmatpush1.msra.mxu0 0.0
    %3034 = vmatprep.subr.mxu0 0.0
    %3035 = vmatpush1.msra.mxu0 0.0
    %3036 = vmatprep.subr.mxu0 0.0
    %3037 = vmatpush1.msra.mxu0 0.0
    %3038 = vmatprep.mubr.f32.mxu0 0.0
    %3039 = vmatmul.mubr.f32.gmra.mrb[0].mxu0 %v2969
    %v3040 = vpop.f32.mrb[0].mxu0
    %v3041 = vadd.f32 %v2966, %v3040
    %v3042 = vpop.f32.mrb[0].mxu0
    %3043 = vmatprep.mubr.f32.mxu0 0.0
    %3044 = vmatmul.mubr.f32.gmra.mrb[0].mxu0 %v2972
    %v3045 = vpop.f32.mrb[0].mxu0
    %v3046 = vadd.f32 %v2966, %v3045
    %v3047 = vpop.f32.mrb[0].mxu0
    %3048 = vdwg.mxu0
    %3049 = vst [vmem:[#allocation11] sm:$0xff] %v3041
    %3050 = vst [vmem:[#allocation11 + $0x8] sm:$0xff] %v3046
    // Predicated region
    $region42: #{tpu_custom_call.1} parent=1 // pred_check
      _
    $region43: #{tpu_custom_call.1} parent=1 // pred_check_branch
      %3052 = sbr.rel (0) target = $region45
    $region44: #{tpu_custom_call.1} parent=1 // pred_region
      %s3054 = ssub.s32 256, 256
      %3055 = vsyncadd [#allocation5], %s3054
      %s3056 = sshll.u32 [#allocation11], 4
      %s3057 = int_to_ptr.vmem [resolvable:$true] %s3056
      %3062 = dma.vmem_to_hbm [thread:$0]  %s3057, 256, %s6, [#allocation5], 128, 128, 8
    $region45: #{tpu_custom_call.1} parent=1 // pred_fallthru
      _
    // Predicated region
    $region46: #{tpu_custom_call.1} parent=1 // pred_check
      _
    $region47: #{tpu_custom_call.1} parent=1 // pred_check_branch
      %3064 = sbr.rel (0) target = $region49
    $region48: #{tpu_custom_call.1} parent=1 // pred_region
      %3065 = dma.done [#allocation5], 256
    $region49: #{tpu_custom_call.1} parent=1 // pred_fallthru
      _
    %3066 = vsyncpa [#allocation4], 1
    %3067 = vsyncpa [#allocation7], 1
    %3068 = vsyncpa [#allocation10], 1
    %3069 = vsyncpa [#allocation5], 1

</llo_original>
